<compile_context>
chip_gen: v6e
topology: v6e:2x2x1
jax: 0.10.0
libtpu: 0.0.40
codegen_flags: <defaults>
</compile_context>

<pallas_src>
import jax
import jax.numpy as jnp
from jax.experimental import pallas as pl
from jax.experimental.pallas import tpu as pltpu


def _round_up(n, m):
    return (n + m - 1) // m * m


# ---------------------------------------------------------------------------
# Pallas kernel builder: one full (multi-layer) LSTM stack over the sequence.
# Gate order inside the kernel is (i, f, o, g) — prepared in prepare_params().
# Everything stays in VMEM / vregs; no grid, no scratch.
# ---------------------------------------------------------------------------
def _make_stack_kernel(n_layers, *, has_init_state, fuse_fc, write_states, hidden):
    H = hidden

    def kernel(*refs):
        idx = 0
        x_ref = refs[idx]; idx += 1                    # (T, B, Din0) time-major
        w_refs = refs[idx:idx + 3 * n_layers]          # per layer: wih_t, whh_t, bias
        idx += 3 * n_layers
        if has_init_state:
            h0_ref = refs[idx]; idx += 1               # (nl, B, H)
            c0_ref = refs[idx]; idx += 1               # (nl, B, H)
        if fuse_fc:
            fcw_ref = refs[idx]; idx += 1              # (H, Opad)
            fcb_ref = refs[idx]; idx += 1              # (1, Opad)
        # ---- outputs ----
        if fuse_fc:
            logits_ref = refs[idx]; idx += 1           # (T, B, Opad)
        if write_states:
            hN_ref = refs[idx]; idx += 1               # (nl, B, H)
            cN_ref = refs[idx]; idx += 1               # (nl, B, H)

        T, B, _ = x_ref.shape
        x = x_ref[...].astype(jnp.float32)             # (T, B, Din)

        for l in range(n_layers):
            wih = w_refs[3 * l][...]                   # (Din, 4H)
            whh = w_refs[3 * l + 1][...]               # (H, 4H)
            bias = w_refs[3 * l + 2][...]              # (1, 4H) = b_ih + b_hh
            Din = x.shape[-1]

            # Hoisted input projection for all timesteps: one MXU call per layer,
            # result kept time-major so each step reads a contiguous (B, 4H) tile.
            xp = (jnp.dot(x.reshape(T * B, Din), wih,
                          preferred_element_type=jnp.float32)
                  + bias).reshape(T, B, 4 * H)

            if has_init_state:
                h = h0_ref[l].astype(jnp.float32)      # (B, H)
                c = c0_ref[l].astype(jnp.float32)      # (B, H)
            else:
                h = jnp.zeros((B, H), jnp.float32)
                c = jnp.zeros((B, H), jnp.float32)

            is_last = (l == n_layers - 1)
            collect = (not is_last) or fuse_fc         # encoder last layer: y unused
            ys = []

            # T is small & static: fully unrolled (LLO sees the whole recurrence).
            for t in range(T):
                gates = xp[t] + jnp.dot(h, whh,
                                        preferred_element_type=jnp.float32)
                # Gate order (i, f, o, g): one sigmoid over the contiguous 3H
                # region, one tanh over the last H region (2 EUP pushes / step).
                sig = jax.nn.sigmoid(gates[:, :3 * H])
                g_g = jnp.tanh(gates[:, 3 * H:])
                i_g = sig[:, 0 * H:1 * H]
                f_g = sig[:, 1 * H:2 * H]
                o_g = sig[:, 2 * H:3 * H]
                c = f_g * c + i_g * g_g
                h = o_g * jnp.tanh(c)
                if collect:
                    ys.append(h)

            if write_states:
                hN_ref[l] = h                          # written once per layer
                cN_ref[l] = c
            if collect:
                x = jnp.stack(ys, axis=0)              # (T, B, H) next-layer input

        if fuse_fc:
            # Fused fc_out on the stacked decoder activations (no HBM round-trip).
            y_flat = x.reshape(T * B, H)
            logits = (jnp.dot(y_flat, fcw_ref[...],
                              preferred_element_type=jnp.float32)
                      + fcb_ref[...])
            logits_ref[...] = logits.reshape(T, B, -1).astype(logits_ref.dtype)

    return kernel


# ---------------------------------------------------------------------------
# Wrappers
# ---------------------------------------------------------------------------
def encoder_stack(x_tbe, layers):
    """x_tbe: (T, B, E) time-major. Returns hN, cN: (nl, B, H). y is never built."""
    T, B, _ = x_tbe.shape
    nl = len(layers)
    H = layers[0]["whh_t"].shape[0]
    flat_w = []
    for lp in layers:
        flat_w += [lp["wih_t"], lp["whh_t"], lp["bias"]]

    hN, cN = pl.pallas_call(
        _make_stack_kernel(nl, has_init_state=False, fuse_fc=False,
                           write_states=True, hidden=H),
        out_shape=(
            jax.ShapeDtypeStruct((nl, B, H), jnp.float32),
            jax.ShapeDtypeStruct((nl, B, H), jnp.float32),
        ),
    )(x_tbe, *flat_w)
    return hN, cN


def decoder_stack_with_fc(x_tbe, layers, h0, c0, fc_w_pad, fc_b_pad):
    """x_tbe: (T, B, E); h0, c0: (nl, B, H). Returns logits (T, B, Opad)."""
    T, B, _ = x_tbe.shape
    nl = len(layers)
    H = layers[0]["whh_t"].shape[0]
    Opad = fc_w_pad.shape[-1]
    flat_w = []
    for lp in layers:
        flat_w += [lp["wih_t"], lp["whh_t"], lp["bias"]]

    logits = pl.pallas_call(
        _make_stack_kernel(nl, has_init_state=True, fuse_fc=True,
                           write_states=False, hidden=H),
        out_shape=jax.ShapeDtypeStruct((T, B, Opad), jnp.float32),
    )(x_tbe, *flat_w, h0, c0, fc_w_pad, fc_b_pad)
    return logits


# ---------------------------------------------------------------------------
# Parameter init (PyTorch layout) + one-time prep into kernel layout
# ---------------------------------------------------------------------------
def init_params(key, input_dim, output_dim, E, H, n_layers):
    keys = iter(jax.random.split(key, 64))
    bound = 1.0 / jnp.sqrt(H)

    def uni(shape):
        return jax.random.uniform(next(keys), shape, jnp.float32, -bound, bound)

    def lstm_stack_params(in_dim):
        layers = []
        for l in range(n_layers):
            d_in = in_dim if l == 0 else H
            layers.append(dict(
                w_ih=uni((4 * H, d_in)),       # PyTorch gate order (i, f, g, o)
                w_hh=uni((4 * H, H)),
                b_ih=uni((4 * H,)),
                b_hh=uni((4 * H,)),
            ))
        return layers

    return dict(
        enc_emb=jax.random.normal(next(keys), (input_dim, E), jnp.float32),
        dec_emb=jax.random.normal(next(keys), (output_dim, E), jnp.float32),
        enc_lstm=lstm_stack_params(E),
        dec_lstm=lstm_stack_params(E),
        fc_w=uni((H, output_dim)),
        fc_b=uni((output_dim,)),
    )


def prepare_params(params):
    """One-time layout prep: reorder gates (i,f,g,o)->(i,f,o,g), transpose LSTM
    weights, fold biases, pad fc_out weights to a 128-lane multiple."""
    H = params["enc_lstm"][0]["w_hh"].shape[-1]
    perm = jnp.concatenate([jnp.arange(0, 2 * H),          # i, f
                            jnp.arange(3 * H, 4 * H),       # o
                            jnp.arange(2 * H, 3 * H)])      # g

    def prep_stack(stack):
        out = []
        for lp in stack:
            out.append(dict(
                wih_t=jnp.transpose(lp["w_ih"][perm]),            # (Din, 4H)
                whh_t=jnp.transpose(lp["w_hh"][perm]),            # (H, 4H)
                bias=(lp["b_ih"] + lp["b_hh"])[perm].reshape(1, -1),
            ))
        return out

    Hfc, O = params["fc_w"].shape
    Opad = _round_up(O, 128)
    fc_w_pad = jnp.zeros((Hfc, Opad), jnp.float32).at[:, :O].set(params["fc_w"])
    fc_b_pad = jnp.zeros((1, Opad), jnp.float32).at[:, :O].set(params["fc_b"])
    return dict(
        enc_emb=params["enc_emb"],
        dec_emb=params["dec_emb"],
        enc_lstm=prep_stack(params["enc_lstm"]),
        dec_lstm=prep_stack(params["dec_lstm"]),
        fc_w_pad=fc_w_pad,
        fc_b_pad=fc_b_pad,
    )


# ---------------------------------------------------------------------------
# Forward pass (glue: embedding gathers + two kernel calls)
# ---------------------------------------------------------------------------
def seq2seq_forward(params, src, trg, out_dim):
    # Embedding gathers, done time-major (transposing the tiny int index array
    # is free and the kernels consume (T, B, E) directly).
    src_emb = jnp.take(params["enc_emb"], src.T, axis=0)   # (Ts, B, E)
    trg_emb = jnp.take(params["dec_emb"], trg.T, axis=0)   # (Tt, B, E)

    hidden, cell = encoder_stack(src_emb, params["enc_lstm"])
    logits_tbo = decoder_stack_with_fc(trg_emb, params["dec_lstm"], hidden, cell,
                                       params["fc_w_pad"], params["fc_b_pad"])
    # (Tt, B, Opad) -> (B, Tt, O)
    return jnp.transpose(logits_tbo[:, :, :out_dim], (1, 0, 2))


# ---------------------------------------------------------------------------
# Pure-JAX reference (PyTorch-layout params, gate order i,f,g,o)
# ---------------------------------------------------------------------------
def _ref_lstm_layer(x_bte, lp, h0, c0):
    H = h0.shape[-1]
    T = x_bte.shape[1]
    h, c = h0, c0
    ys = []
    for t in range(T):
        g = (x_bte[:, t] @ lp["w_ih"].T + lp["b_ih"]
             + h @ lp["w_hh"].T + lp["b_hh"])
        i = jax.nn.sigmoid(g[:, 0 * H:1 * H])
        f = jax.nn.sigmoid(g[:, 1 * H:2 * H])
        gg = jnp.tanh(g[:, 2 * H:3 * H])
        o = jax.nn.sigmoid(g[:, 3 * H:4 * H])
        c = f * c + i * gg
        h = o * jnp.tanh(c)
        ys.append(h)
    return jnp.stack(ys, axis=1), h, c


def reference_forward(params, src, trg):
    src_emb = jnp.take(params["enc_emb"], src, axis=0)
    trg_emb = jnp.take(params["dec_emb"], trg, axis=0)
    B = src.shape[0]
    H = params["enc_lstm"][0]["w_hh"].shape[-1]

    def run(x, stack, h0s, c0s):
        hs, cs = [], []
        inp = x
        for l, lp in enumerate(stack):
            inp, hN, cN = _ref_lstm_layer(inp, lp, h0s[l], c0s[l])
            hs.append(hN)
            cs.append(cN)
        return inp, jnp.stack(hs), jnp.stack(cs)

    zeros = jnp.zeros((len(params["enc_lstm"]), B, H), jnp.float32)
    _, hidden, cell = run(src_emb, params["enc_lstm"], zeros, zeros)
    dec_out, _, _ = run(trg_emb, params["dec_lstm"], hidden, cell)
    return dec_out @ params["fc_w"] + params["fc_b"]


# ---------------------------------------------------------------------------
if __name__ == "__main__":
    input_dim, output_dim = 20, 24      # src / trg vocab sizes
    E, H, n_layers = 32, 32, 2          # small test shapes (module: 256/512/2)
    B, Ts, Tt = 2, 8, 8                 # batch, src seq len, trg seq len

    raw_params = init_params(jax.random.PRNGKey(0), input_dim, output_dim,
                             E, H, n_layers)
    params = prepare_params(raw_params)

    k1, k2 = jax.random.split(jax.random.PRNGKey(1))
    src = jax.random.randint(k1, (B, Ts), 0, input_dim, dtype=jnp.int32)
    trg = jax.random.randint(k2, (B, Tt), 0, output_dim, dtype=jnp.int32)

    fwd = jax.jit(lambda p, s, t: seq2seq_forward(p, s, t, output_dim))
    out = jax.block_until_ready(fwd(params, src, trg))

    assert out.shape == (B, Tt, output_dim)
    ref = reference_forward(raw_params, src, trg)
    assert jnp.allclose(out, ref, rtol=1e-4, atol=1e-4), "Pallas output mismatch vs reference"

    print("KERNEL_OK")
</pallas_src>

<mosaic_0001>
module attributes {stable_mosaic.version = 11 : i64} {
  func.func @kernel(%arg0: memref<8x2x32xf32, #tpu.memory_space<vmem>>, %arg1: memref<32x128xf32, #tpu.memory_space<vmem>>, %arg2: memref<32x128xf32, #tpu.memory_space<vmem>>, %arg3: memref<1x128xf32, #tpu.memory_space<vmem>>, %arg4: memref<32x128xf32, #tpu.memory_space<vmem>>, %arg5: memref<32x128xf32, #tpu.memory_space<vmem>>, %arg6: memref<1x128xf32, #tpu.memory_space<vmem>>, %arg7: memref<2x2x32xf32, #tpu.memory_space<vmem>>, %arg8: memref<2x2x32xf32, #tpu.memory_space<vmem>>, %arg9: memref<32x128xf32, #tpu.memory_space<vmem>>, %arg10: memref<1x128xf32, #tpu.memory_space<vmem>>, %arg11: memref<8x2x128xf32, #tpu.memory_space<vmem>>) attributes {dimension_semantics = [], scalar_prefetch = 0 : i64, scratch_operands = 0 : i64, tpu.core_type = #tpu.core_type<tc>} {
    %c0 = arith.constant 0 : index
    %c0_0 = arith.constant 0 : index
    %c0_1 = arith.constant 0 : index
    %0 = vector.load %arg0[%c0, %c0_0, %c0_1] : memref<8x2x32xf32, #tpu.memory_space<vmem>>, vector<8x2x32xf32>
    %c0_2 = arith.constant 0 : index
    %c0_3 = arith.constant 0 : index
    %1 = vector.load %arg1[%c0_2, %c0_3] : memref<32x128xf32, #tpu.memory_space<vmem>>, vector<32x128xf32>
    %c0_4 = arith.constant 0 : index
    %c0_5 = arith.constant 0 : index
    %2 = vector.load %arg2[%c0_4, %c0_5] : memref<32x128xf32, #tpu.memory_space<vmem>>, vector<32x128xf32>
    %c0_6 = arith.constant 0 : index
    %c0_7 = arith.constant 0 : index
    %3 = vector.load %arg3[%c0_6, %c0_7] : memref<1x128xf32, #tpu.memory_space<vmem>>, vector<1x128xf32>
    %4 = vector.shape_cast %0 : vector<8x2x32xf32> to vector<16x32xf32>
    %cst = arith.constant dense<0.000000e+00> : vector<16x128xf32>
    %5 = tpu.matmul %4, %1, %cst {dimension_numbers = #tpu.dot_dimension_numbers<[1], [0], [0], [1], [0, 0, 1, 1], [], []>} : vector<16x32xf32>, vector<32x128xf32>, vector<16x128xf32> -> vector<16x128xf32>
    %6 = vector.broadcast %3 : vector<1x128xf32> to vector<16x128xf32>
    %7 = arith.addf %5, %6 : vector<16x128xf32>
    %8 = vector.shape_cast %7 : vector<16x128xf32> to vector<8x2x128xf32>
    %c0_8 = arith.constant 0 : index
    %c0_9 = arith.constant 0 : index
    %c0_10 = arith.constant 0 : index
    %9 = vector.load %arg7[%c0_8, %c0_9, %c0_10] : memref<2x2x32xf32, #tpu.memory_space<vmem>>, vector<1x2x32xf32>
    %10 = vector.shape_cast %9 : vector<1x2x32xf32> to vector<2x32xf32>
    %c0_11 = arith.constant 0 : index
    %c0_12 = arith.constant 0 : index
    %c0_13 = arith.constant 0 : index
    %11 = vector.load %arg8[%c0_11, %c0_12, %c0_13] : memref<2x2x32xf32, #tpu.memory_space<vmem>>, vector<1x2x32xf32>
    %12 = vector.shape_cast %11 : vector<1x2x32xf32> to vector<2x32xf32>
    %13 = vector.extract_strided_slice %8 {offsets = [0, 0, 0], sizes = [1, 2, 128], strides = [1, 1, 1]} : vector<8x2x128xf32> to vector<1x2x128xf32>
    %14 = vector.shape_cast %13 : vector<1x2x128xf32> to vector<2x128xf32>
    %cst_14 = arith.constant dense<0.000000e+00> : vector<2x128xf32>
    %15 = tpu.matmul %10, %2, %cst_14 {dimension_numbers = #tpu.dot_dimension_numbers<[1], [0], [0], [1], [0, 0, 1, 1], [], []>} : vector<2x32xf32>, vector<32x128xf32>, vector<2x128xf32> -> vector<2x128xf32>
    %16 = arith.addf %14, %15 : vector<2x128xf32>
    %17 = vector.extract_strided_slice %16 {offsets = [0, 0], sizes = [2, 96], strides = [1, 1]} : vector<2x128xf32> to vector<2x96xf32>
    %18 = arith.negf %17 : vector<2x96xf32>
    %19 = math.exp %18 : vector<2x96xf32>
    %cst_15 = arith.constant 1.000000e+00 : f32
    %20 = vector.broadcast %cst_15 : f32 to vector<2x96xf32>
    %21 = arith.addf %20, %19 : vector<2x96xf32>
    %22 = arith.divf %20, %21 : vector<2x96xf32>
    %23 = vector.extract_strided_slice %16 {offsets = [0, 96], sizes = [2, 32], strides = [1, 1]} : vector<2x128xf32> to vector<2x32xf32>
    %24 = math.tanh %23 : vector<2x32xf32>
    %25 = vector.extract_strided_slice %22 {offsets = [0, 0], sizes = [2, 32], strides = [1, 1]} : vector<2x96xf32> to vector<2x32xf32>
    %26 = vector.extract_strided_slice %22 {offsets = [0, 32], sizes = [2, 32], strides = [1, 1]} : vector<2x96xf32> to vector<2x32xf32>
    %27 = vector.extract_strided_slice %22 {offsets = [0, 64], sizes = [2, 32], strides = [1, 1]} : vector<2x96xf32> to vector<2x32xf32>
    %28 = arith.mulf %26, %12 : vector<2x32xf32>
    %29 = arith.mulf %25, %24 : vector<2x32xf32>
    %30 = arith.addf %28, %29 : vector<2x32xf32>
    %31 = math.tanh %30 : vector<2x32xf32>
    %32 = arith.mulf %27, %31 : vector<2x32xf32>
    %33 = vector.extract_strided_slice %8 {offsets = [1, 0, 0], sizes = [1, 2, 128], strides = [1, 1, 1]} : vector<8x2x128xf32> to vector<1x2x128xf32>
    %34 = vector.shape_cast %33 : vector<1x2x128xf32> to vector<2x128xf32>
    %cst_16 = arith.constant dense<0.000000e+00> : vector<2x128xf32>
    %35 = tpu.matmul %32, %2, %cst_16 {dimension_numbers = #tpu.dot_dimension_numbers<[1], [0], [0], [1], [0, 0, 1, 1], [], []>} : vector<2x32xf32>, vector<32x128xf32>, vector<2x128xf32> -> vector<2x128xf32>
    %36 = arith.addf %34, %35 : vector<2x128xf32>
    %37 = vector.extract_strided_slice %36 {offsets = [0, 0], sizes = [2, 96], strides = [1, 1]} : vector<2x128xf32> to vector<2x96xf32>
    %38 = arith.negf %37 : vector<2x96xf32>
    %39 = math.exp %38 : vector<2x96xf32>
    %cst_17 = arith.constant 1.000000e+00 : f32
    %40 = vector.broadcast %cst_17 : f32 to vector<2x96xf32>
    %41 = arith.addf %40, %39 : vector<2x96xf32>
    %42 = arith.divf %40, %41 : vector<2x96xf32>
    %43 = vector.extract_strided_slice %36 {offsets = [0, 96], sizes = [2, 32], strides = [1, 1]} : vector<2x128xf32> to vector<2x32xf32>
    %44 = math.tanh %43 : vector<2x32xf32>
    %45 = vector.extract_strided_slice %42 {offsets = [0, 0], sizes = [2, 32], strides = [1, 1]} : vector<2x96xf32> to vector<2x32xf32>
    %46 = vector.extract_strided_slice %42 {offsets = [0, 32], sizes = [2, 32], strides = [1, 1]} : vector<2x96xf32> to vector<2x32xf32>
    %47 = vector.extract_strided_slice %42 {offsets = [0, 64], sizes = [2, 32], strides = [1, 1]} : vector<2x96xf32> to vector<2x32xf32>
    %48 = arith.mulf %46, %30 : vector<2x32xf32>
    %49 = arith.mulf %45, %44 : vector<2x32xf32>
    %50 = arith.addf %48, %49 : vector<2x32xf32>
    %51 = math.tanh %50 : vector<2x32xf32>
    %52 = arith.mulf %47, %51 : vector<2x32xf32>
    %53 = vector.extract_strided_slice %8 {offsets = [2, 0, 0], sizes = [1, 2, 128], strides = [1, 1, 1]} : vector<8x2x128xf32> to vector<1x2x128xf32>
    %54 = vector.shape_cast %53 : vector<1x2x128xf32> to vector<2x128xf32>
    %cst_18 = arith.constant dense<0.000000e+00> : vector<2x128xf32>
    %55 = tpu.matmul %52, %2, %cst_18 {dimension_numbers = #tpu.dot_dimension_numbers<[1], [0], [0], [1], [0, 0, 1, 1], [], []>} : vector<2x32xf32>, vector<32x128xf32>, vector<2x128xf32> -> vector<2x128xf32>
    %56 = arith.addf %54, %55 : vector<2x128xf32>
    %57 = vector.extract_strided_slice %56 {offsets = [0, 0], sizes = [2, 96], strides = [1, 1]} : vector<2x128xf32> to vector<2x96xf32>
    %58 = arith.negf %57 : vector<2x96xf32>
    %59 = math.exp %58 : vector<2x96xf32>
    %cst_19 = arith.constant 1.000000e+00 : f32
    %60 = vector.broadcast %cst_19 : f32 to vector<2x96xf32>
    %61 = arith.addf %60, %59 : vector<2x96xf32>
    %62 = arith.divf %60, %61 : vector<2x96xf32>
    %63 = vector.extract_strided_slice %56 {offsets = [0, 96], sizes = [2, 32], strides = [1, 1]} : vector<2x128xf32> to vector<2x32xf32>
    %64 = math.tanh %63 : vector<2x32xf32>
    %65 = vector.extract_strided_slice %62 {offsets = [0, 0], sizes = [2, 32], strides = [1, 1]} : vector<2x96xf32> to vector<2x32xf32>
    %66 = vector.extract_strided_slice %62 {offsets = [0, 32], sizes = [2, 32], strides = [1, 1]} : vector<2x96xf32> to vector<2x32xf32>
    %67 = vector.extract_strided_slice %62 {offsets = [0, 64], sizes = [2, 32], strides = [1, 1]} : vector<2x96xf32> to vector<2x32xf32>
    %68 = arith.mulf %66, %50 : vector<2x32xf32>
    %69 = arith.mulf %65, %64 : vector<2x32xf32>
    %70 = arith.addf %68, %69 : vector<2x32xf32>
    %71 = math.tanh %70 : vector<2x32xf32>
    %72 = arith.mulf %67, %71 : vector<2x32xf32>
    %73 = vector.extract_strided_slice %8 {offsets = [3, 0, 0], sizes = [1, 2, 128], strides = [1, 1, 1]} : vector<8x2x128xf32> to vector<1x2x128xf32>
    %74 = vector.shape_cast %73 : vector<1x2x128xf32> to vector<2x128xf32>
    %cst_20 = arith.constant dense<0.000000e+00> : vector<2x128xf32>
    %75 = tpu.matmul %72, %2, %cst_20 {dimension_numbers = #tpu.dot_dimension_numbers<[1], [0], [0], [1], [0, 0, 1, 1], [], []>} : vector<2x32xf32>, vector<32x128xf32>, vector<2x128xf32> -> vector<2x128xf32>
    %76 = arith.addf %74, %75 : vector<2x128xf32>
    %77 = vector.extract_strided_slice %76 {offsets = [0, 0], sizes = [2, 96], strides = [1, 1]} : vector<2x128xf32> to vector<2x96xf32>
    %78 = arith.negf %77 : vector<2x96xf32>
    %79 = math.exp %78 : vector<2x96xf32>
    %cst_21 = arith.constant 1.000000e+00 : f32
    %80 = vector.broadcast %cst_21 : f32 to vector<2x96xf32>
    %81 = arith.addf %80, %79 : vector<2x96xf32>
    %82 = arith.divf %80, %81 : vector<2x96xf32>
    %83 = vector.extract_strided_slice %76 {offsets = [0, 96], sizes = [2, 32], strides = [1, 1]} : vector<2x128xf32> to vector<2x32xf32>
    %84 = math.tanh %83 : vector<2x32xf32>
    %85 = vector.extract_strided_slice %82 {offsets = [0, 0], sizes = [2, 32], strides = [1, 1]} : vector<2x96xf32> to vector<2x32xf32>
    %86 = vector.extract_strided_slice %82 {offsets = [0, 32], sizes = [2, 32], strides = [1, 1]} : vector<2x96xf32> to vector<2x32xf32>
    %87 = vector.extract_strided_slice %82 {offsets = [0, 64], sizes = [2, 32], strides = [1, 1]} : vector<2x96xf32> to vector<2x32xf32>
    %88 = arith.mulf %86, %70 : vector<2x32xf32>
    %89 = arith.mulf %85, %84 : vector<2x32xf32>
    %90 = arith.addf %88, %89 : vector<2x32xf32>
    %91 = math.tanh %90 : vector<2x32xf32>
    %92 = arith.mulf %87, %91 : vector<2x32xf32>
    %93 = vector.extract_strided_slice %8 {offsets = [4, 0, 0], sizes = [1, 2, 128], strides = [1, 1, 1]} : vector<8x2x128xf32> to vector<1x2x128xf32>
    %94 = vector.shape_cast %93 : vector<1x2x128xf32> to vector<2x128xf32>
    %cst_22 = arith.constant dense<0.000000e+00> : vector<2x128xf32>
    %95 = tpu.matmul %92, %2, %cst_22 {dimension_numbers = #tpu.dot_dimension_numbers<[1], [0], [0], [1], [0, 0, 1, 1], [], []>} : vector<2x32xf32>, vector<32x128xf32>, vector<2x128xf32> -> vector<2x128xf32>
    %96 = arith.addf %94, %95 : vector<2x128xf32>
    %97 = vector.extract_strided_slice %96 {offsets = [0, 0], sizes = [2, 96], strides = [1, 1]} : vector<2x128xf32> to vector<2x96xf32>
    %98 = arith.negf %97 : vector<2x96xf32>
    %99 = math.exp %98 : vector<2x96xf32>
    %cst_23 = arith.constant 1.000000e+00 : f32
    %100 = vector.broadcast %cst_23 : f32 to vector<2x96xf32>
    %101 = arith.addf %100, %99 : vector<2x96xf32>
    %102 = arith.divf %100, %101 : vector<2x96xf32>
    %103 = vector.extract_strided_slice %96 {offsets = [0, 96], sizes = [2, 32], strides = [1, 1]} : vector<2x128xf32> to vector<2x32xf32>
    %104 = math.tanh %103 : vector<2x32xf32>
    %105 = vector.extract_strided_slice %102 {offsets = [0, 0], sizes = [2, 32], strides = [1, 1]} : vector<2x96xf32> to vector<2x32xf32>
    %106 = vector.extract_strided_slice %102 {offsets = [0, 32], sizes = [2, 32], strides = [1, 1]} : vector<2x96xf32> to vector<2x32xf32>
    %107 = vector.extract_strided_slice %102 {offsets = [0, 64], sizes = [2, 32], strides = [1, 1]} : vector<2x96xf32> to vector<2x32xf32>
    %108 = arith.mulf %106, %90 : vector<2x32xf32>
    %109 = arith.mulf %105, %104 : vector<2x32xf32>
    %110 = arith.addf %108, %109 : vector<2x32xf32>
    %111 = math.tanh %110 : vector<2x32xf32>
    %112 = arith.mulf %107, %111 : vector<2x32xf32>
    %113 = vector.extract_strided_slice %8 {offsets = [5, 0, 0], sizes = [1, 2, 128], strides = [1, 1, 1]} : vector<8x2x128xf32> to vector<1x2x128xf32>
    %114 = vector.shape_cast %113 : vector<1x2x128xf32> to vector<2x128xf32>
    %cst_24 = arith.constant dense<0.000000e+00> : vector<2x128xf32>
    %115 = tpu.matmul %112, %2, %cst_24 {dimension_numbers = #tpu.dot_dimension_numbers<[1], [0], [0], [1], [0, 0, 1, 1], [], []>} : vector<2x32xf32>, vector<32x128xf32>, vector<2x128xf32> -> vector<2x128xf32>
    %116 = arith.addf %114, %115 : vector<2x128xf32>
    %117 = vector.extract_strided_slice %116 {offsets = [0, 0], sizes = [2, 96], strides = [1, 1]} : vector<2x128xf32> to vector<2x96xf32>
    %118 = arith.negf %117 : vector<2x96xf32>
    %119 = math.exp %118 : vector<2x96xf32>
    %cst_25 = arith.constant 1.000000e+00 : f32
    %120 = vector.broadcast %cst_25 : f32 to vector<2x96xf32>
    %121 = arith.addf %120, %119 : vector<2x96xf32>
    %122 = arith.divf %120, %121 : vector<2x96xf32>
    %123 = vector.extract_strided_slice %116 {offsets = [0, 96], sizes = [2, 32], strides = [1, 1]} : vector<2x128xf32> to vector<2x32xf32>
    %124 = math.tanh %123 : vector<2x32xf32>
    %125 = vector.extract_strided_slice %122 {offsets = [0, 0], sizes = [2, 32], strides = [1, 1]} : vector<2x96xf32> to vector<2x32xf32>
    %126 = vector.extract_strided_slice %122 {offsets = [0, 32], sizes = [2, 32], strides = [1, 1]} : vector<2x96xf32> to vector<2x32xf32>
    %127 = vector.extract_strided_slice %122 {offsets = [0, 64], sizes = [2, 32], strides = [1, 1]} : vector<2x96xf32> to vector<2x32xf32>
    %128 = arith.mulf %126, %110 : vector<2x32xf32>
    %129 = arith.mulf %125, %124 : vector<2x32xf32>
    %130 = arith.addf %128, %129 : vector<2x32xf32>
    %131 = math.tanh %130 : vector<2x32xf32>
    %132 = arith.mulf %127, %131 : vector<2x32xf32>
    %133 = vector.extract_strided_slice %8 {offsets = [6, 0, 0], sizes = [1, 2, 128], strides = [1, 1, 1]} : vector<8x2x128xf32> to vector<1x2x128xf32>
    %134 = vector.shape_cast %133 : vector<1x2x128xf32> to vector<2x128xf32>
    %cst_26 = arith.constant dense<0.000000e+00> : vector<2x128xf32>
    %135 = tpu.matmul %132, %2, %cst_26 {dimension_numbers = #tpu.dot_dimension_numbers<[1], [0], [0], [1], [0, 0, 1, 1], [], []>} : vector<2x32xf32>, vector<32x128xf32>, vector<2x128xf32> -> vector<2x128xf32>
    %136 = arith.addf %134, %135 : vector<2x128xf32>
    %137 = vector.extract_strided_slice %136 {offsets = [0, 0], sizes = [2, 96], strides = [1, 1]} : vector<2x128xf32> to vector<2x96xf32>
    %138 = arith.negf %137 : vector<2x96xf32>
    %139 = math.exp %138 : vector<2x96xf32>
    %cst_27 = arith.constant 1.000000e+00 : f32
    %140 = vector.broadcast %cst_27 : f32 to vector<2x96xf32>
    %141 = arith.addf %140, %139 : vector<2x96xf32>
    %142 = arith.divf %140, %141 : vector<2x96xf32>
    %143 = vector.extract_strided_slice %136 {offsets = [0, 96], sizes = [2, 32], strides = [1, 1]} : vector<2x128xf32> to vector<2x32xf32>
    %144 = math.tanh %143 : vector<2x32xf32>
    %145 = vector.extract_strided_slice %142 {offsets = [0, 0], sizes = [2, 32], strides = [1, 1]} : vector<2x96xf32> to vector<2x32xf32>
    %146 = vector.extract_strided_slice %142 {offsets = [0, 32], sizes = [2, 32], strides = [1, 1]} : vector<2x96xf32> to vector<2x32xf32>
    %147 = vector.extract_strided_slice %142 {offsets = [0, 64], sizes = [2, 32], strides = [1, 1]} : vector<2x96xf32> to vector<2x32xf32>
    %148 = arith.mulf %146, %130 : vector<2x32xf32>
    %149 = arith.mulf %145, %144 : vector<2x32xf32>
    %150 = arith.addf %148, %149 : vector<2x32xf32>
    %151 = math.tanh %150 : vector<2x32xf32>
    %152 = arith.mulf %147, %151 : vector<2x32xf32>
    %153 = vector.extract_strided_slice %8 {offsets = [7, 0, 0], sizes = [1, 2, 128], strides = [1, 1, 1]} : vector<8x2x128xf32> to vector<1x2x128xf32>
    %154 = vector.shape_cast %153 : vector<1x2x128xf32> to vector<2x128xf32>
    %cst_28 = arith.constant dense<0.000000e+00> : vector<2x128xf32>
    %155 = tpu.matmul %152, %2, %cst_28 {dimension_numbers = #tpu.dot_dimension_numbers<[1], [0], [0], [1], [0, 0, 1, 1], [], []>} : vector<2x32xf32>, vector<32x128xf32>, vector<2x128xf32> -> vector<2x128xf32>
    %156 = arith.addf %154, %155 : vector<2x128xf32>
    %157 = vector.extract_strided_slice %156 {offsets = [0, 0], sizes = [2, 96], strides = [1, 1]} : vector<2x128xf32> to vector<2x96xf32>
    %158 = arith.negf %157 : vector<2x96xf32>
    %159 = math.exp %158 : vector<2x96xf32>
    %cst_29 = arith.constant 1.000000e+00 : f32
    %160 = vector.broadcast %cst_29 : f32 to vector<2x96xf32>
    %161 = arith.addf %160, %159 : vector<2x96xf32>
    %162 = arith.divf %160, %161 : vector<2x96xf32>
    %163 = vector.extract_strided_slice %156 {offsets = [0, 96], sizes = [2, 32], strides = [1, 1]} : vector<2x128xf32> to vector<2x32xf32>
    %164 = math.tanh %163 : vector<2x32xf32>
    %165 = vector.extract_strided_slice %162 {offsets = [0, 0], sizes = [2, 32], strides = [1, 1]} : vector<2x96xf32> to vector<2x32xf32>
    %166 = vector.extract_strided_slice %162 {offsets = [0, 32], sizes = [2, 32], strides = [1, 1]} : vector<2x96xf32> to vector<2x32xf32>
    %167 = vector.extract_strided_slice %162 {offsets = [0, 64], sizes = [2, 32], strides = [1, 1]} : vector<2x96xf32> to vector<2x32xf32>
    %168 = arith.mulf %166, %150 : vector<2x32xf32>
    %169 = arith.mulf %165, %164 : vector<2x32xf32>
    %170 = arith.addf %168, %169 : vector<2x32xf32>
    %171 = math.tanh %170 : vector<2x32xf32>
    %172 = arith.mulf %167, %171 : vector<2x32xf32>
    %173 = vector.shape_cast %32 : vector<2x32xf32> to vector<1x2x32xf32>
    %174 = vector.shape_cast %52 : vector<2x32xf32> to vector<1x2x32xf32>
    %175 = vector.shape_cast %72 : vector<2x32xf32> to vector<1x2x32xf32>
    %176 = vector.shape_cast %92 : vector<2x32xf32> to vector<1x2x32xf32>
    %177 = vector.shape_cast %112 : vector<2x32xf32> to vector<1x2x32xf32>
    %178 = vector.shape_cast %132 : vector<2x32xf32> to vector<1x2x32xf32>
    %179 = vector.shape_cast %152 : vector<2x32xf32> to vector<1x2x32xf32>
    %180 = vector.shape_cast %172 : vector<2x32xf32> to vector<1x2x32xf32>
    %181 = tpu.concatenate %173, %174, %175, %176, %177, %178, %179, %180 in 0 : vector<1x2x32xf32>, vector<1x2x32xf32>, vector<1x2x32xf32>, vector<1x2x32xf32>, vector<1x2x32xf32>, vector<1x2x32xf32>, vector<1x2x32xf32>, vector<1x2x32xf32> -> vector<8x2x32xf32>
    %c0_30 = arith.constant 0 : index
    %c0_31 = arith.constant 0 : index
    %182 = vector.load %arg4[%c0_30, %c0_31] : memref<32x128xf32, #tpu.memory_space<vmem>>, vector<32x128xf32>
    %c0_32 = arith.constant 0 : index
    %c0_33 = arith.constant 0 : index
    %183 = vector.load %arg5[%c0_32, %c0_33] : memref<32x128xf32, #tpu.memory_space<vmem>>, vector<32x128xf32>
    %c0_34 = arith.constant 0 : index
    %c0_35 = arith.constant 0 : index
    %184 = vector.load %arg6[%c0_34, %c0_35] : memref<1x128xf32, #tpu.memory_space<vmem>>, vector<1x128xf32>
    %185 = vector.shape_cast %181 : vector<8x2x32xf32> to vector<16x32xf32>
    %cst_36 = arith.constant dense<0.000000e+00> : vector<16x128xf32>
    %186 = tpu.matmul %185, %182, %cst_36 {dimension_numbers = #tpu.dot_dimension_numbers<[1], [0], [0], [1], [0, 0, 1, 1], [], []>} : vector<16x32xf32>, vector<32x128xf32>, vector<16x128xf32> -> vector<16x128xf32>
    %187 = vector.broadcast %184 : vector<1x128xf32> to vector<16x128xf32>
    %188 = arith.addf %186, %187 : vector<16x128xf32>
    %189 = vector.shape_cast %188 : vector<16x128xf32> to vector<8x2x128xf32>
    %c1 = arith.constant 1 : index
    %c0_37 = arith.constant 0 : index
    %c0_38 = arith.constant 0 : index
    %190 = vector.load %arg7[%c1, %c0_37, %c0_38] : memref<2x2x32xf32, #tpu.memory_space<vmem>>, vector<1x2x32xf32>
    %191 = vector.shape_cast %190 : vector<1x2x32xf32> to vector<2x32xf32>
    %c1_39 = arith.constant 1 : index
    %c0_40 = arith.constant 0 : index
    %c0_41 = arith.constant 0 : index
    %192 = vector.load %arg8[%c1_39, %c0_40, %c0_41] : memref<2x2x32xf32, #tpu.memory_space<vmem>>, vector<1x2x32xf32>
    %193 = vector.shape_cast %192 : vector<1x2x32xf32> to vector<2x32xf32>
    %194 = vector.extract_strided_slice %189 {offsets = [0, 0, 0], sizes = [1, 2, 128], strides = [1, 1, 1]} : vector<8x2x128xf32> to vector<1x2x128xf32>
    %195 = vector.shape_cast %194 : vector<1x2x128xf32> to vector<2x128xf32>
    %cst_42 = arith.constant dense<0.000000e+00> : vector<2x128xf32>
    %196 = tpu.matmul %191, %183, %cst_42 {dimension_numbers = #tpu.dot_dimension_numbers<[1], [0], [0], [1], [0, 0, 1, 1], [], []>} : vector<2x32xf32>, vector<32x128xf32>, vector<2x128xf32> -> vector<2x128xf32>
    %197 = arith.addf %195, %196 : vector<2x128xf32>
    %198 = vector.extract_strided_slice %197 {offsets = [0, 0], sizes = [2, 96], strides = [1, 1]} : vector<2x128xf32> to vector<2x96xf32>
    %199 = arith.negf %198 : vector<2x96xf32>
    %200 = math.exp %199 : vector<2x96xf32>
    %cst_43 = arith.constant 1.000000e+00 : f32
    %201 = vector.broadcast %cst_43 : f32 to vector<2x96xf32>
    %202 = arith.addf %201, %200 : vector<2x96xf32>
    %203 = arith.divf %201, %202 : vector<2x96xf32>
    %204 = vector.extract_strided_slice %197 {offsets = [0, 96], sizes = [2, 32], strides = [1, 1]} : vector<2x128xf32> to vector<2x32xf32>
    %205 = math.tanh %204 : vector<2x32xf32>
    %206 = vector.extract_strided_slice %203 {offsets = [0, 0], sizes = [2, 32], strides = [1, 1]} : vector<2x96xf32> to vector<2x32xf32>
    %207 = vector.extract_strided_slice %203 {offsets = [0, 32], sizes = [2, 32], strides = [1, 1]} : vector<2x96xf32> to vector<2x32xf32>
    %208 = vector.extract_strided_slice %203 {offsets = [0, 64], sizes = [2, 32], strides = [1, 1]} : vector<2x96xf32> to vector<2x32xf32>
    %209 = arith.mulf %207, %193 : vector<2x32xf32>
    %210 = arith.mulf %206, %205 : vector<2x32xf32>
    %211 = arith.addf %209, %210 : vector<2x32xf32>
    %212 = math.tanh %211 : vector<2x32xf32>
    %213 = arith.mulf %208, %212 : vector<2x32xf32>
    %214 = vector.extract_strided_slice %189 {offsets = [1, 0, 0], sizes = [1, 2, 128], strides = [1, 1, 1]} : vector<8x2x128xf32> to vector<1x2x128xf32>
    %215 = vector.shape_cast %214 : vector<1x2x128xf32> to vector<2x128xf32>
    %cst_44 = arith.constant dense<0.000000e+00> : vector<2x128xf32>
    %216 = tpu.matmul %213, %183, %cst_44 {dimension_numbers = #tpu.dot_dimension_numbers<[1], [0], [0], [1], [0, 0, 1, 1], [], []>} : vector<2x32xf32>, vector<32x128xf32>, vector<2x128xf32> -> vector<2x128xf32>
    %217 = arith.addf %215, %216 : vector<2x128xf32>
    %218 = vector.extract_strided_slice %217 {offsets = [0, 0], sizes = [2, 96], strides = [1, 1]} : vector<2x128xf32> to vector<2x96xf32>
    %219 = arith.negf %218 : vector<2x96xf32>
    %220 = math.exp %219 : vector<2x96xf32>
    %cst_45 = arith.constant 1.000000e+00 : f32
    %221 = vector.broadcast %cst_45 : f32 to vector<2x96xf32>
    %222 = arith.addf %221, %220 : vector<2x96xf32>
    %223 = arith.divf %221, %222 : vector<2x96xf32>
    %224 = vector.extract_strided_slice %217 {offsets = [0, 96], sizes = [2, 32], strides = [1, 1]} : vector<2x128xf32> to vector<2x32xf32>
    %225 = math.tanh %224 : vector<2x32xf32>
    %226 = vector.extract_strided_slice %223 {offsets = [0, 0], sizes = [2, 32], strides = [1, 1]} : vector<2x96xf32> to vector<2x32xf32>
    %227 = vector.extract_strided_slice %223 {offsets = [0, 32], sizes = [2, 32], strides = [1, 1]} : vector<2x96xf32> to vector<2x32xf32>
    %228 = vector.extract_strided_slice %223 {offsets = [0, 64], sizes = [2, 32], strides = [1, 1]} : vector<2x96xf32> to vector<2x32xf32>
    %229 = arith.mulf %227, %211 : vector<2x32xf32>
    %230 = arith.mulf %226, %225 : vector<2x32xf32>
    %231 = arith.addf %229, %230 : vector<2x32xf32>
    %232 = math.tanh %231 : vector<2x32xf32>
    %233 = arith.mulf %228, %232 : vector<2x32xf32>
    %234 = vector.extract_strided_slice %189 {offsets = [2, 0, 0], sizes = [1, 2, 128], strides = [1, 1, 1]} : vector<8x2x128xf32> to vector<1x2x128xf32>
    %235 = vector.shape_cast %234 : vector<1x2x128xf32> to vector<2x128xf32>
    %cst_46 = arith.constant dense<0.000000e+00> : vector<2x128xf32>
    %236 = tpu.matmul %233, %183, %cst_46 {dimension_numbers = #tpu.dot_dimension_numbers<[1], [0], [0], [1], [0, 0, 1, 1], [], []>} : vector<2x32xf32>, vector<32x128xf32>, vector<2x128xf32> -> vector<2x128xf32>
    %237 = arith.addf %235, %236 : vector<2x128xf32>
    %238 = vector.extract_strided_slice %237 {offsets = [0, 0], sizes = [2, 96], strides = [1, 1]} : vector<2x128xf32> to vector<2x96xf32>
    %239 = arith.negf %238 : vector<2x96xf32>
    %240 = math.exp %239 : vector<2x96xf32>
    %cst_47 = arith.constant 1.000000e+00 : f32
    %241 = vector.broadcast %cst_47 : f32 to vector<2x96xf32>
    %242 = arith.addf %241, %240 : vector<2x96xf32>
    %243 = arith.divf %241, %242 : vector<2x96xf32>
    %244 = vector.extract_strided_slice %237 {offsets = [0, 96], sizes = [2, 32], strides = [1, 1]} : vector<2x128xf32> to vector<2x32xf32>
    %245 = math.tanh %244 : vector<2x32xf32>
    %246 = vector.extract_strided_slice %243 {offsets = [0, 0], sizes = [2, 32], strides = [1, 1]} : vector<2x96xf32> to vector<2x32xf32>
    %247 = vector.extract_strided_slice %243 {offsets = [0, 32], sizes = [2, 32], strides = [1, 1]} : vector<2x96xf32> to vector<2x32xf32>
    %248 = vector.extract_strided_slice %243 {offsets = [0, 64], sizes = [2, 32], strides = [1, 1]} : vector<2x96xf32> to vector<2x32xf32>
    %249 = arith.mulf %247, %231 : vector<2x32xf32>
    %250 = arith.mulf %246, %245 : vector<2x32xf32>
    %251 = arith.addf %249, %250 : vector<2x32xf32>
    %252 = math.tanh %251 : vector<2x32xf32>
    %253 = arith.mulf %248, %252 : vector<2x32xf32>
    %254 = vector.extract_strided_slice %189 {offsets = [3, 0, 0], sizes = [1, 2, 128], strides = [1, 1, 1]} : vector<8x2x128xf32> to vector<1x2x128xf32>
    %255 = vector.shape_cast %254 : vector<1x2x128xf32> to vector<2x128xf32>
    %cst_48 = arith.constant dense<0.000000e+00> : vector<2x128xf32>
    %256 = tpu.matmul %253, %183, %cst_48 {dimension_numbers = #tpu.dot_dimension_numbers<[1], [0], [0], [1], [0, 0, 1, 1], [], []>} : vector<2x32xf32>, vector<32x128xf32>, vector<2x128xf32> -> vector<2x128xf32>
    %257 = arith.addf %255, %256 : vector<2x128xf32>
    %258 = vector.extract_strided_slice %257 {offsets = [0, 0], sizes = [2, 96], strides = [1, 1]} : vector<2x128xf32> to vector<2x96xf32>
    %259 = arith.negf %258 : vector<2x96xf32>
    %260 = math.exp %259 : vector<2x96xf32>
    %cst_49 = arith.constant 1.000000e+00 : f32
    %261 = vector.broadcast %cst_49 : f32 to vector<2x96xf32>
    %262 = arith.addf %261, %260 : vector<2x96xf32>
    %263 = arith.divf %261, %262 : vector<2x96xf32>
    %264 = vector.extract_strided_slice %257 {offsets = [0, 96], sizes = [2, 32], strides = [1, 1]} : vector<2x128xf32> to vector<2x32xf32>
    %265 = math.tanh %264 : vector<2x32xf32>
    %266 = vector.extract_strided_slice %263 {offsets = [0, 0], sizes = [2, 32], strides = [1, 1]} : vector<2x96xf32> to vector<2x32xf32>
    %267 = vector.extract_strided_slice %263 {offsets = [0, 32], sizes = [2, 32], strides = [1, 1]} : vector<2x96xf32> to vector<2x32xf32>
    %268 = vector.extract_strided_slice %263 {offsets = [0, 64], sizes = [2, 32], strides = [1, 1]} : vector<2x96xf32> to vector<2x32xf32>
    %269 = arith.mulf %267, %251 : vector<2x32xf32>
    %270 = arith.mulf %266, %265 : vector<2x32xf32>
    %271 = arith.addf %269, %270 : vector<2x32xf32>
    %272 = math.tanh %271 : vector<2x32xf32>
    %273 = arith.mulf %268, %272 : vector<2x32xf32>
    %274 = vector.extract_strided_slice %189 {offsets = [4, 0, 0], sizes = [1, 2, 128], strides = [1, 1, 1]} : vector<8x2x128xf32> to vector<1x2x128xf32>
    %275 = vector.shape_cast %274 : vector<1x2x128xf32> to vector<2x128xf32>
    %cst_50 = arith.constant dense<0.000000e+00> : vector<2x128xf32>
    %276 = tpu.matmul %273, %183, %cst_50 {dimension_numbers = #tpu.dot_dimension_numbers<[1], [0], [0], [1], [0, 0, 1, 1], [], []>} : vector<2x32xf32>, vector<32x128xf32>, vector<2x128xf32> -> vector<2x128xf32>
    %277 = arith.addf %275, %276 : vector<2x128xf32>
    %278 = vector.extract_strided_slice %277 {offsets = [0, 0], sizes = [2, 96], strides = [1, 1]} : vector<2x128xf32> to vector<2x96xf32>
    %279 = arith.negf %278 : vector<2x96xf32>
    %280 = math.exp %279 : vector<2x96xf32>
    %cst_51 = arith.constant 1.000000e+00 : f32
    %281 = vector.broadcast %cst_51 : f32 to vector<2x96xf32>
    %282 = arith.addf %281, %280 : vector<2x96xf32>
    %283 = arith.divf %281, %282 : vector<2x96xf32>
    %284 = vector.extract_strided_slice %277 {offsets = [0, 96], sizes = [2, 32], strides = [1, 1]} : vector<2x128xf32> to vector<2x32xf32>
    %285 = math.tanh %284 : vector<2x32xf32>
    %286 = vector.extract_strided_slice %283 {offsets = [0, 0], sizes = [2, 32], strides = [1, 1]} : vector<2x96xf32> to vector<2x32xf32>
    %287 = vector.extract_strided_slice %283 {offsets = [0, 32], sizes = [2, 32], strides = [1, 1]} : vector<2x96xf32> to vector<2x32xf32>
    %288 = vector.extract_strided_slice %283 {offsets = [0, 64], sizes = [2, 32], strides = [1, 1]} : vector<2x96xf32> to vector<2x32xf32>
    %289 = arith.mulf %287, %271 : vector<2x32xf32>
    %290 = arith.mulf %286, %285 : vector<2x32xf32>
    %291 = arith.addf %289, %290 : vector<2x32xf32>
    %292 = math.tanh %291 : vector<2x32xf32>
    %293 = arith.mulf %288, %292 : vector<2x32xf32>
    %294 = vector.extract_strided_slice %189 {offsets = [5, 0, 0], sizes = [1, 2, 128], strides = [1, 1, 1]} : vector<8x2x128xf32> to vector<1x2x128xf32>
    %295 = vector.shape_cast %294 : vector<1x2x128xf32> to vector<2x128xf32>
    %cst_52 = arith.constant dense<0.000000e+00> : vector<2x128xf32>
    %296 = tpu.matmul %293, %183, %cst_52 {dimension_numbers = #tpu.dot_dimension_numbers<[1], [0], [0], [1], [0, 0, 1, 1], [], []>} : vector<2x32xf32>, vector<32x128xf32>, vector<2x128xf32> -> vector<2x128xf32>
    %297 = arith.addf %295, %296 : vector<2x128xf32>
    %298 = vector.extract_strided_slice %297 {offsets = [0, 0], sizes = [2, 96], strides = [1, 1]} : vector<2x128xf32> to vector<2x96xf32>
    %299 = arith.negf %298 : vector<2x96xf32>
    %300 = math.exp %299 : vector<2x96xf32>
    %cst_53 = arith.constant 1.000000e+00 : f32
    %301 = vector.broadcast %cst_53 : f32 to vector<2x96xf32>
    %302 = arith.addf %301, %300 : vector<2x96xf32>
    %303 = arith.divf %301, %302 : vector<2x96xf32>
    %304 = vector.extract_strided_slice %297 {offsets = [0, 96], sizes = [2, 32], strides = [1, 1]} : vector<2x128xf32> to vector<2x32xf32>
    %305 = math.tanh %304 : vector<2x32xf32>
    %306 = vector.extract_strided_slice %303 {offsets = [0, 0], sizes = [2, 32], strides = [1, 1]} : vector<2x96xf32> to vector<2x32xf32>
    %307 = vector.extract_strided_slice %303 {offsets = [0, 32], sizes = [2, 32], strides = [1, 1]} : vector<2x96xf32> to vector<2x32xf32>
    %308 = vector.extract_strided_slice %303 {offsets = [0, 64], sizes = [2, 32], strides = [1, 1]} : vector<2x96xf32> to vector<2x32xf32>
    %309 = arith.mulf %307, %291 : vector<2x32xf32>
    %310 = arith.mulf %306, %305 : vector<2x32xf32>
    %311 = arith.addf %309, %310 : vector<2x32xf32>
    %312 = math.tanh %311 : vector<2x32xf32>
    %313 = arith.mulf %308, %312 : vector<2x32xf32>
    %314 = vector.extract_strided_slice %189 {offsets = [6, 0, 0], sizes = [1, 2, 128], strides = [1, 1, 1]} : vector<8x2x128xf32> to vector<1x2x128xf32>
    %315 = vector.shape_cast %314 : vector<1x2x128xf32> to vector<2x128xf32>
    %cst_54 = arith.constant dense<0.000000e+00> : vector<2x128xf32>
    %316 = tpu.matmul %313, %183, %cst_54 {dimension_numbers = #tpu.dot_dimension_numbers<[1], [0], [0], [1], [0, 0, 1, 1], [], []>} : vector<2x32xf32>, vector<32x128xf32>, vector<2x128xf32> -> vector<2x128xf32>
    %317 = arith.addf %315, %316 : vector<2x128xf32>
    %318 = vector.extract_strided_slice %317 {offsets = [0, 0], sizes = [2, 96], strides = [1, 1]} : vector<2x128xf32> to vector<2x96xf32>
    %319 = arith.negf %318 : vector<2x96xf32>
    %320 = math.exp %319 : vector<2x96xf32>
    %cst_55 = arith.constant 1.000000e+00 : f32
    %321 = vector.broadcast %cst_55 : f32 to vector<2x96xf32>
    %322 = arith.addf %321, %320 : vector<2x96xf32>
    %323 = arith.divf %321, %322 : vector<2x96xf32>
    %324 = vector.extract_strided_slice %317 {offsets = [0, 96], sizes = [2, 32], strides = [1, 1]} : vector<2x128xf32> to vector<2x32xf32>
    %325 = math.tanh %324 : vector<2x32xf32>
    %326 = vector.extract_strided_slice %323 {offsets = [0, 0], sizes = [2, 32], strides = [1, 1]} : vector<2x96xf32> to vector<2x32xf32>
    %327 = vector.extract_strided_slice %323 {offsets = [0, 32], sizes = [2, 32], strides = [1, 1]} : vector<2x96xf32> to vector<2x32xf32>
    %328 = vector.extract_strided_slice %323 {offsets = [0, 64], sizes = [2, 32], strides = [1, 1]} : vector<2x96xf32> to vector<2x32xf32>
    %329 = arith.mulf %327, %311 : vector<2x32xf32>
    %330 = arith.mulf %326, %325 : vector<2x32xf32>
    %331 = arith.addf %329, %330 : vector<2x32xf32>
    %332 = math.tanh %331 : vector<2x32xf32>
    %333 = arith.mulf %328, %332 : vector<2x32xf32>
    %334 = vector.extract_strided_slice %189 {offsets = [7, 0, 0], sizes = [1, 2, 128], strides = [1, 1, 1]} : vector<8x2x128xf32> to vector<1x2x128xf32>
    %335 = vector.shape_cast %334 : vector<1x2x128xf32> to vector<2x128xf32>
    %cst_56 = arith.constant dense<0.000000e+00> : vector<2x128xf32>
    %336 = tpu.matmul %333, %183, %cst_56 {dimension_numbers = #tpu.dot_dimension_numbers<[1], [0], [0], [1], [0, 0, 1, 1], [], []>} : vector<2x32xf32>, vector<32x128xf32>, vector<2x128xf32> -> vector<2x128xf32>
    %337 = arith.addf %335, %336 : vector<2x128xf32>
    %338 = vector.extract_strided_slice %337 {offsets = [0, 0], sizes = [2, 96], strides = [1, 1]} : vector<2x128xf32> to vector<2x96xf32>
    %339 = arith.negf %338 : vector<2x96xf32>
    %340 = math.exp %339 : vector<2x96xf32>
    %cst_57 = arith.constant 1.000000e+00 : f32
    %341 = vector.broadcast %cst_57 : f32 to vector<2x96xf32>
    %342 = arith.addf %341, %340 : vector<2x96xf32>
    %343 = arith.divf %341, %342 : vector<2x96xf32>
    %344 = vector.extract_strided_slice %337 {offsets = [0, 96], sizes = [2, 32], strides = [1, 1]} : vector<2x128xf32> to vector<2x32xf32>
    %345 = math.tanh %344 : vector<2x32xf32>
    %346 = vector.extract_strided_slice %343 {offsets = [0, 0], sizes = [2, 32], strides = [1, 1]} : vector<2x96xf32> to vector<2x32xf32>
    %347 = vector.extract_strided_slice %343 {offsets = [0, 32], sizes = [2, 32], strides = [1, 1]} : vector<2x96xf32> to vector<2x32xf32>
    %348 = vector.extract_strided_slice %343 {offsets = [0, 64], sizes = [2, 32], strides = [1, 1]} : vector<2x96xf32> to vector<2x32xf32>
    %349 = arith.mulf %347, %331 : vector<2x32xf32>
    %350 = arith.mulf %346, %345 : vector<2x32xf32>
    %351 = arith.addf %349, %350 : vector<2x32xf32>
    %352 = math.tanh %351 : vector<2x32xf32>
    %353 = arith.mulf %348, %352 : vector<2x32xf32>
    %354 = vector.shape_cast %213 : vector<2x32xf32> to vector<1x2x32xf32>
    %355 = vector.shape_cast %233 : vector<2x32xf32> to vector<1x2x32xf32>
    %356 = vector.shape_cast %253 : vector<2x32xf32> to vector<1x2x32xf32>
    %357 = vector.shape_cast %273 : vector<2x32xf32> to vector<1x2x32xf32>
    %358 = vector.shape_cast %293 : vector<2x32xf32> to vector<1x2x32xf32>
    %359 = vector.shape_cast %313 : vector<2x32xf32> to vector<1x2x32xf32>
    %360 = vector.shape_cast %333 : vector<2x32xf32> to vector<1x2x32xf32>
    %361 = vector.shape_cast %353 : vector<2x32xf32> to vector<1x2x32xf32>
    %362 = tpu.concatenate %354, %355, %356, %357, %358, %359, %360, %361 in 0 : vector<1x2x32xf32>, vector<1x2x32xf32>, vector<1x2x32xf32>, vector<1x2x32xf32>, vector<1x2x32xf32>, vector<1x2x32xf32>, vector<1x2x32xf32>, vector<1x2x32xf32> -> vector<8x2x32xf32>
    %363 = vector.shape_cast %362 : vector<8x2x32xf32> to vector<16x32xf32>
    %c0_58 = arith.constant 0 : index
    %c0_59 = arith.constant 0 : index
    %364 = vector.load %arg9[%c0_58, %c0_59] : memref<32x128xf32, #tpu.memory_space<vmem>>, vector<32x128xf32>
    %cst_60 = arith.constant dense<0.000000e+00> : vector<16x128xf32>
    %365 = tpu.matmul %363, %364, %cst_60 {dimension_numbers = #tpu.dot_dimension_numbers<[1], [0], [0], [1], [0, 0, 1, 1], [], []>} : vector<16x32xf32>, vector<32x128xf32>, vector<16x128xf32> -> vector<16x128xf32>
    %c0_61 = arith.constant 0 : index
    %c0_62 = arith.constant 0 : index
    %366 = vector.load %arg10[%c0_61, %c0_62] : memref<1x128xf32, #tpu.memory_space<vmem>>, vector<1x128xf32>
    %367 = vector.broadcast %366 : vector<1x128xf32> to vector<16x128xf32>
    %368 = arith.addf %365, %367 : vector<16x128xf32>
    %369 = vector.shape_cast %368 : vector<16x128xf32> to vector<8x2x128xf32>
    %c0_63 = arith.constant 0 : index
    %c0_64 = arith.constant 0 : index
    %c0_65 = arith.constant 0 : index
    %370 = vector.load %arg11[%c0_63, %c0_64, %c0_65] : memref<8x2x128xf32, #tpu.memory_space<vmem>>, vector<8x2x128xf32>
    tpu.vector_store %arg11[%c0_63, %c0_64, %c0_65], %369 {strides = array<i32>} : memref<8x2x128xf32, #tpu.memory_space<vmem>>, vector<8x2x128xf32>,
    return
  }
}

module attributes {stable_mosaic.version = 11 : i64} {
  func.func @kernel(%arg0: memref<8x2x32xf32, #tpu.memory_space<vmem>>, %arg1: memref<32x128xf32, #tpu.memory_space<vmem>>, %arg2: memref<32x128xf32, #tpu.memory_space<vmem>>, %arg3: memref<1x128xf32, #tpu.memory_space<vmem>>, %arg4: memref<32x128xf32, #tpu.memory_space<vmem>>, %arg5: memref<32x128xf32, #tpu.memory_space<vmem>>, %arg6: memref<1x128xf32, #tpu.memory_space<vmem>>, %arg7: memref<2x2x32xf32, #tpu.memory_space<vmem>>, %arg8: memref<2x2x32xf32, #tpu.memory_space<vmem>>) attributes {dimension_semantics = [], scalar_prefetch = 0 : i64, scratch_operands = 0 : i64, tpu.core_type = #tpu.core_type<tc>} {
    %c0 = arith.constant 0 : index
    %c0_0 = arith.constant 0 : index
    %c0_1 = arith.constant 0 : index
    %0 = vector.load %arg0[%c0, %c0_0, %c0_1] : memref<8x2x32xf32, #tpu.memory_space<vmem>>, vector<8x2x32xf32>
    %c0_2 = arith.constant 0 : index
    %c0_3 = arith.constant 0 : index
    %1 = vector.load %arg1[%c0_2, %c0_3] : memref<32x128xf32, #tpu.memory_space<vmem>>, vector<32x128xf32>
    %c0_4 = arith.constant 0 : index
    %c0_5 = arith.constant 0 : index
    %2 = vector.load %arg2[%c0_4, %c0_5] : memref<32x128xf32, #tpu.memory_space<vmem>>, vector<32x128xf32>
    %c0_6 = arith.constant 0 : index
    %c0_7 = arith.constant 0 : index
    %3 = vector.load %arg3[%c0_6, %c0_7] : memref<1x128xf32, #tpu.memory_space<vmem>>, vector<1x128xf32>
    %4 = vector.shape_cast %0 : vector<8x2x32xf32> to vector<16x32xf32>
    %cst = arith.constant dense<0.000000e+00> : vector<16x128xf32>
    %5 = tpu.matmul %4, %1, %cst {dimension_numbers = #tpu.dot_dimension_numbers<[1], [0], [0], [1], [0, 0, 1, 1], [], []>} : vector<16x32xf32>, vector<32x128xf32>, vector<16x128xf32> -> vector<16x128xf32>
    %6 = vector.broadcast %3 : vector<1x128xf32> to vector<16x128xf32>
    %7 = arith.addf %5, %6 : vector<16x128xf32>
    %8 = vector.shape_cast %7 : vector<16x128xf32> to vector<8x2x128xf32>
    %cst_8 = arith.constant 0.000000e+00 : f32
    %9 = vector.broadcast %cst_8 : f32 to vector<2x32xf32>
    %cst_9 = arith.constant 0.000000e+00 : f32
    %10 = vector.broadcast %cst_9 : f32 to vector<2x32xf32>
    %11 = vector.extract_strided_slice %8 {offsets = [0, 0, 0], sizes = [1, 2, 128], strides = [1, 1, 1]} : vector<8x2x128xf32> to vector<1x2x128xf32>
    %12 = vector.shape_cast %11 : vector<1x2x128xf32> to vector<2x128xf32>
    %cst_10 = arith.constant dense<0.000000e+00> : vector<2x128xf32>
    %13 = tpu.matmul %9, %2, %cst_10 {dimension_numbers = #tpu.dot_dimension_numbers<[1], [0], [0], [1], [0, 0, 1, 1], [], []>} : vector<2x32xf32>, vector<32x128xf32>, vector<2x128xf32> -> vector<2x128xf32>
    %14 = arith.addf %12, %13 : vector<2x128xf32>
    %15 = vector.extract_strided_slice %14 {offsets = [0, 0], sizes = [2, 96], strides = [1, 1]} : vector<2x128xf32> to vector<2x96xf32>
    %16 = arith.negf %15 : vector<2x96xf32>
    %17 = math.exp %16 : vector<2x96xf32>
    %cst_11 = arith.constant 1.000000e+00 : f32
    %18 = vector.broadcast %cst_11 : f32 to vector<2x96xf32>
    %19 = arith.addf %18, %17 : vector<2x96xf32>
    %20 = arith.divf %18, %19 : vector<2x96xf32>
    %21 = vector.extract_strided_slice %14 {offsets = [0, 96], sizes = [2, 32], strides = [1, 1]} : vector<2x128xf32> to vector<2x32xf32>
    %22 = math.tanh %21 : vector<2x32xf32>
    %23 = vector.extract_strided_slice %20 {offsets = [0, 0], sizes = [2, 32], strides = [1, 1]} : vector<2x96xf32> to vector<2x32xf32>
    %24 = vector.extract_strided_slice %20 {offsets = [0, 32], sizes = [2, 32], strides = [1, 1]} : vector<2x96xf32> to vector<2x32xf32>
    %25 = vector.extract_strided_slice %20 {offsets = [0, 64], sizes = [2, 32], strides = [1, 1]} : vector<2x96xf32> to vector<2x32xf32>
    %26 = arith.mulf %24, %10 : vector<2x32xf32>
    %27 = arith.mulf %23, %22 : vector<2x32xf32>
    %28 = arith.addf %26, %27 : vector<2x32xf32>
    %29 = math.tanh %28 : vector<2x32xf32>
    %30 = arith.mulf %25, %29 : vector<2x32xf32>
    %31 = vector.extract_strided_slice %8 {offsets = [1, 0, 0], sizes = [1, 2, 128], strides = [1, 1, 1]} : vector<8x2x128xf32> to vector<1x2x128xf32>
    %32 = vector.shape_cast %31 : vector<1x2x128xf32> to vector<2x128xf32>
    %cst_12 = arith.constant dense<0.000000e+00> : vector<2x128xf32>
    %33 = tpu.matmul %30, %2, %cst_12 {dimension_numbers = #tpu.dot_dimension_numbers<[1], [0], [0], [1], [0, 0, 1, 1], [], []>} : vector<2x32xf32>, vector<32x128xf32>, vector<2x128xf32> -> vector<2x128xf32>
    %34 = arith.addf %32, %33 : vector<2x128xf32>
    %35 = vector.extract_strided_slice %34 {offsets = [0, 0], sizes = [2, 96], strides = [1, 1]} : vector<2x128xf32> to vector<2x96xf32>
    %36 = arith.negf %35 : vector<2x96xf32>
    %37 = math.exp %36 : vector<2x96xf32>
    %cst_13 = arith.constant 1.000000e+00 : f32
    %38 = vector.broadcast %cst_13 : f32 to vector<2x96xf32>
    %39 = arith.addf %38, %37 : vector<2x96xf32>
    %40 = arith.divf %38, %39 : vector<2x96xf32>
    %41 = vector.extract_strided_slice %34 {offsets = [0, 96], sizes = [2, 32], strides = [1, 1]} : vector<2x128xf32> to vector<2x32xf32>
    %42 = math.tanh %41 : vector<2x32xf32>
    %43 = vector.extract_strided_slice %40 {offsets = [0, 0], sizes = [2, 32], strides = [1, 1]} : vector<2x96xf32> to vector<2x32xf32>
    %44 = vector.extract_strided_slice %40 {offsets = [0, 32], sizes = [2, 32], strides = [1, 1]} : vector<2x96xf32> to vector<2x32xf32>
    %45 = vector.extract_strided_slice %40 {offsets = [0, 64], sizes = [2, 32], strides = [1, 1]} : vector<2x96xf32> to vector<2x32xf32>
    %46 = arith.mulf %44, %28 : vector<2x32xf32>
    %47 = arith.mulf %43, %42 : vector<2x32xf32>
    %48 = arith.addf %46, %47 : vector<2x32xf32>
    %49 = math.tanh %48 : vector<2x32xf32>
    %50 = arith.mulf %45, %49 : vector<2x32xf32>
    %51 = vector.extract_strided_slice %8 {offsets = [2, 0, 0], sizes = [1, 2, 128], strides = [1, 1, 1]} : vector<8x2x128xf32> to vector<1x2x128xf32>
    %52 = vector.shape_cast %51 : vector<1x2x128xf32> to vector<2x128xf32>
    %cst_14 = arith.constant dense<0.000000e+00> : vector<2x128xf32>
    %53 = tpu.matmul %50, %2, %cst_14 {dimension_numbers = #tpu.dot_dimension_numbers<[1], [0], [0], [1], [0, 0, 1, 1], [], []>} : vector<2x32xf32>, vector<32x128xf32>, vector<2x128xf32> -> vector<2x128xf32>
    %54 = arith.addf %52, %53 : vector<2x128xf32>
    %55 = vector.extract_strided_slice %54 {offsets = [0, 0], sizes = [2, 96], strides = [1, 1]} : vector<2x128xf32> to vector<2x96xf32>
    %56 = arith.negf %55 : vector<2x96xf32>
    %57 = math.exp %56 : vector<2x96xf32>
    %cst_15 = arith.constant 1.000000e+00 : f32
    %58 = vector.broadcast %cst_15 : f32 to vector<2x96xf32>
    %59 = arith.addf %58, %57 : vector<2x96xf32>
    %60 = arith.divf %58, %59 : vector<2x96xf32>
    %61 = vector.extract_strided_slice %54 {offsets = [0, 96], sizes = [2, 32], strides = [1, 1]} : vector<2x128xf32> to vector<2x32xf32>
    %62 = math.tanh %61 : vector<2x32xf32>
    %63 = vector.extract_strided_slice %60 {offsets = [0, 0], sizes = [2, 32], strides = [1, 1]} : vector<2x96xf32> to vector<2x32xf32>
    %64 = vector.extract_strided_slice %60 {offsets = [0, 32], sizes = [2, 32], strides = [1, 1]} : vector<2x96xf32> to vector<2x32xf32>
    %65 = vector.extract_strided_slice %60 {offsets = [0, 64], sizes = [2, 32], strides = [1, 1]} : vector<2x96xf32> to vector<2x32xf32>
    %66 = arith.mulf %64, %48 : vector<2x32xf32>
    %67 = arith.mulf %63, %62 : vector<2x32xf32>
    %68 = arith.addf %66, %67 : vector<2x32xf32>
    %69 = math.tanh %68 : vector<2x32xf32>
    %70 = arith.mulf %65, %69 : vector<2x32xf32>
    %71 = vector.extract_strided_slice %8 {offsets = [3, 0, 0], sizes = [1, 2, 128], strides = [1, 1, 1]} : vector<8x2x128xf32> to vector<1x2x128xf32>
    %72 = vector.shape_cast %71 : vector<1x2x128xf32> to vector<2x128xf32>
    %cst_16 = arith.constant dense<0.000000e+00> : vector<2x128xf32>
    %73 = tpu.matmul %70, %2, %cst_16 {dimension_numbers = #tpu.dot_dimension_numbers<[1], [0], [0], [1], [0, 0, 1, 1], [], []>} : vector<2x32xf32>, vector<32x128xf32>, vector<2x128xf32> -> vector<2x128xf32>
    %74 = arith.addf %72, %73 : vector<2x128xf32>
    %75 = vector.extract_strided_slice %74 {offsets = [0, 0], sizes = [2, 96], strides = [1, 1]} : vector<2x128xf32> to vector<2x96xf32>
    %76 = arith.negf %75 : vector<2x96xf32>
    %77 = math.exp %76 : vector<2x96xf32>
    %cst_17 = arith.constant 1.000000e+00 : f32
    %78 = vector.broadcast %cst_17 : f32 to vector<2x96xf32>
    %79 = arith.addf %78, %77 : vector<2x96xf32>
    %80 = arith.divf %78, %79 : vector<2x96xf32>
    %81 = vector.extract_strided_slice %74 {offsets = [0, 96], sizes = [2, 32], strides = [1, 1]} : vector<2x128xf32> to vector<2x32xf32>
    %82 = math.tanh %81 : vector<2x32xf32>
    %83 = vector.extract_strided_slice %80 {offsets = [0, 0], sizes = [2, 32], strides = [1, 1]} : vector<2x96xf32> to vector<2x32xf32>
    %84 = vector.extract_strided_slice %80 {offsets = [0, 32], sizes = [2, 32], strides = [1, 1]} : vector<2x96xf32> to vector<2x32xf32>
    %85 = vector.extract_strided_slice %80 {offsets = [0, 64], sizes = [2, 32], strides = [1, 1]} : vector<2x96xf32> to vector<2x32xf32>
    %86 = arith.mulf %84, %68 : vector<2x32xf32>
    %87 = arith.mulf %83, %82 : vector<2x32xf32>
    %88 = arith.addf %86, %87 : vector<2x32xf32>
    %89 = math.tanh %88 : vector<2x32xf32>
    %90 = arith.mulf %85, %89 : vector<2x32xf32>
    %91 = vector.extract_strided_slice %8 {offsets = [4, 0, 0], sizes = [1, 2, 128], strides = [1, 1, 1]} : vector<8x2x128xf32> to vector<1x2x128xf32>
    %92 = vector.shape_cast %91 : vector<1x2x128xf32> to vector<2x128xf32>
    %cst_18 = arith.constant dense<0.000000e+00> : vector<2x128xf32>
    %93 = tpu.matmul %90, %2, %cst_18 {dimension_numbers = #tpu.dot_dimension_numbers<[1], [0], [0], [1], [0, 0, 1, 1], [], []>} : vector<2x32xf32>, vector<32x128xf32>, vector<2x128xf32> -> vector<2x128xf32>
    %94 = arith.addf %92, %93 : vector<2x128xf32>
    %95 = vector.extract_strided_slice %94 {offsets = [0, 0], sizes = [2, 96], strides = [1, 1]} : vector<2x128xf32> to vector<2x96xf32>
    %96 = arith.negf %95 : vector<2x96xf32>
    %97 = math.exp %96 : vector<2x96xf32>
    %cst_19 = arith.constant 1.000000e+00 : f32
    %98 = vector.broadcast %cst_19 : f32 to vector<2x96xf32>
    %99 = arith.addf %98, %97 : vector<2x96xf32>
    %100 = arith.divf %98, %99 : vector<2x96xf32>
    %101 = vector.extract_strided_slice %94 {offsets = [0, 96], sizes = [2, 32], strides = [1, 1]} : vector<2x128xf32> to vector<2x32xf32>
    %102 = math.tanh %101 : vector<2x32xf32>
    %103 = vector.extract_strided_slice %100 {offsets = [0, 0], sizes = [2, 32], strides = [1, 1]} : vector<2x96xf32> to vector<2x32xf32>
    %104 = vector.extract_strided_slice %100 {offsets = [0, 32], sizes = [2, 32], strides = [1, 1]} : vector<2x96xf32> to vector<2x32xf32>
    %105 = vector.extract_strided_slice %100 {offsets = [0, 64], sizes = [2, 32], strides = [1, 1]} : vector<2x96xf32> to vector<2x32xf32>
    %106 = arith.mulf %104, %88 : vector<2x32xf32>
    %107 = arith.mulf %103, %102 : vector<2x32xf32>
    %108 = arith.addf %106, %107 : vector<2x32xf32>
    %109 = math.tanh %108 : vector<2x32xf32>
    %110 = arith.mulf %105, %109 : vector<2x32xf32>
    %111 = vector.extract_strided_slice %8 {offsets = [5, 0, 0], sizes = [1, 2, 128], strides = [1, 1, 1]} : vector<8x2x128xf32> to vector<1x2x128xf32>
    %112 = vector.shape_cast %111 : vector<1x2x128xf32> to vector<2x128xf32>
    %cst_20 = arith.constant dense<0.000000e+00> : vector<2x128xf32>
    %113 = tpu.matmul %110, %2, %cst_20 {dimension_numbers = #tpu.dot_dimension_numbers<[1], [0], [0], [1], [0, 0, 1, 1], [], []>} : vector<2x32xf32>, vector<32x128xf32>, vector<2x128xf32> -> vector<2x128xf32>
    %114 = arith.addf %112, %113 : vector<2x128xf32>
    %115 = vector.extract_strided_slice %114 {offsets = [0, 0], sizes = [2, 96], strides = [1, 1]} : vector<2x128xf32> to vector<2x96xf32>
    %116 = arith.negf %115 : vector<2x96xf32>
    %117 = math.exp %116 : vector<2x96xf32>
    %cst_21 = arith.constant 1.000000e+00 : f32
    %118 = vector.broadcast %cst_21 : f32 to vector<2x96xf32>
    %119 = arith.addf %118, %117 : vector<2x96xf32>
    %120 = arith.divf %118, %119 : vector<2x96xf32>
    %121 = vector.extract_strided_slice %114 {offsets = [0, 96], sizes = [2, 32], strides = [1, 1]} : vector<2x128xf32> to vector<2x32xf32>
    %122 = math.tanh %121 : vector<2x32xf32>
    %123 = vector.extract_strided_slice %120 {offsets = [0, 0], sizes = [2, 32], strides = [1, 1]} : vector<2x96xf32> to vector<2x32xf32>
    %124 = vector.extract_strided_slice %120 {offsets = [0, 32], sizes = [2, 32], strides = [1, 1]} : vector<2x96xf32> to vector<2x32xf32>
    %125 = vector.extract_strided_slice %120 {offsets = [0, 64], sizes = [2, 32], strides = [1, 1]} : vector<2x96xf32> to vector<2x32xf32>
    %126 = arith.mulf %124, %108 : vector<2x32xf32>
    %127 = arith.mulf %123, %122 : vector<2x32xf32>
    %128 = arith.addf %126, %127 : vector<2x32xf32>
    %129 = math.tanh %128 : vector<2x32xf32>
    %130 = arith.mulf %125, %129 : vector<2x32xf32>
    %131 = vector.extract_strided_slice %8 {offsets = [6, 0, 0], sizes = [1, 2, 128], strides = [1, 1, 1]} : vector<8x2x128xf32> to vector<1x2x128xf32>
    %132 = vector.shape_cast %131 : vector<1x2x128xf32> to vector<2x128xf32>
    %cst_22 = arith.constant dense<0.000000e+00> : vector<2x128xf32>
    %133 = tpu.matmul %130, %2, %cst_22 {dimension_numbers = #tpu.dot_dimension_numbers<[1], [0], [0], [1], [0, 0, 1, 1], [], []>} : vector<2x32xf32>, vector<32x128xf32>, vector<2x128xf32> -> vector<2x128xf32>
    %134 = arith.addf %132, %133 : vector<2x128xf32>
    %135 = vector.extract_strided_slice %134 {offsets = [0, 0], sizes = [2, 96], strides = [1, 1]} : vector<2x128xf32> to vector<2x96xf32>
    %136 = arith.negf %135 : vector<2x96xf32>
    %137 = math.exp %136 : vector<2x96xf32>
    %cst_23 = arith.constant 1.000000e+00 : f32
    %138 = vector.broadcast %cst_23 : f32 to vector<2x96xf32>
    %139 = arith.addf %138, %137 : vector<2x96xf32>
    %140 = arith.divf %138, %139 : vector<2x96xf32>
    %141 = vector.extract_strided_slice %134 {offsets = [0, 96], sizes = [2, 32], strides = [1, 1]} : vector<2x128xf32> to vector<2x32xf32>
    %142 = math.tanh %141 : vector<2x32xf32>
    %143 = vector.extract_strided_slice %140 {offsets = [0, 0], sizes = [2, 32], strides = [1, 1]} : vector<2x96xf32> to vector<2x32xf32>
    %144 = vector.extract_strided_slice %140 {offsets = [0, 32], sizes = [2, 32], strides = [1, 1]} : vector<2x96xf32> to vector<2x32xf32>
    %145 = vector.extract_strided_slice %140 {offsets = [0, 64], sizes = [2, 32], strides = [1, 1]} : vector<2x96xf32> to vector<2x32xf32>
    %146 = arith.mulf %144, %128 : vector<2x32xf32>
    %147 = arith.mulf %143, %142 : vector<2x32xf32>
    %148 = arith.addf %146, %147 : vector<2x32xf32>
    %149 = math.tanh %148 : vector<2x32xf32>
    %150 = arith.mulf %145, %149 : vector<2x32xf32>
    %151 = vector.extract_strided_slice %8 {offsets = [7, 0, 0], sizes = [1, 2, 128], strides = [1, 1, 1]} : vector<8x2x128xf32> to vector<1x2x128xf32>
    %152 = vector.shape_cast %151 : vector<1x2x128xf32> to vector<2x128xf32>
    %cst_24 = arith.constant dense<0.000000e+00> : vector<2x128xf32>
    %153 = tpu.matmul %150, %2, %cst_24 {dimension_numbers = #tpu.dot_dimension_numbers<[1], [0], [0], [1], [0, 0, 1, 1], [], []>} : vector<2x32xf32>, vector<32x128xf32>, vector<2x128xf32> -> vector<2x128xf32>
    %154 = arith.addf %152, %153 : vector<2x128xf32>
    %155 = vector.extract_strided_slice %154 {offsets = [0, 0], sizes = [2, 96], strides = [1, 1]} : vector<2x128xf32> to vector<2x96xf32>
    %156 = arith.negf %155 : vector<2x96xf32>
    %157 = math.exp %156 : vector<2x96xf32>
    %cst_25 = arith.constant 1.000000e+00 : f32
    %158 = vector.broadcast %cst_25 : f32 to vector<2x96xf32>
    %159 = arith.addf %158, %157 : vector<2x96xf32>
    %160 = arith.divf %158, %159 : vector<2x96xf32>
    %161 = vector.extract_strided_slice %154 {offsets = [0, 96], sizes = [2, 32], strides = [1, 1]} : vector<2x128xf32> to vector<2x32xf32>
    %162 = math.tanh %161 : vector<2x32xf32>
    %163 = vector.extract_strided_slice %160 {offsets = [0, 0], sizes = [2, 32], strides = [1, 1]} : vector<2x96xf32> to vector<2x32xf32>
    %164 = vector.extract_strided_slice %160 {offsets = [0, 32], sizes = [2, 32], strides = [1, 1]} : vector<2x96xf32> to vector<2x32xf32>
    %165 = vector.extract_strided_slice %160 {offsets = [0, 64], sizes = [2, 32], strides = [1, 1]} : vector<2x96xf32> to vector<2x32xf32>
    %166 = arith.mulf %164, %148 : vector<2x32xf32>
    %167 = arith.mulf %163, %162 : vector<2x32xf32>
    %168 = arith.addf %166, %167 : vector<2x32xf32>
    %169 = math.tanh %168 : vector<2x32xf32>
    %170 = arith.mulf %165, %169 : vector<2x32xf32>
    %c0_26 = arith.constant 0 : index
    %c0_27 = arith.constant 0 : index
    %c0_28 = arith.constant 0 : index
    %171 = vector.load %arg7[%c0_26, %c0_27, %c0_28] : memref<2x2x32xf32, #tpu.memory_space<vmem>>, vector<1x2x32xf32>
    %172 = vector.shape_cast %171 : vector<1x2x32xf32> to vector<2x32xf32>
    %173 = vector.shape_cast %170 : vector<2x32xf32> to vector<1x2x32xf32>
    tpu.vector_store %arg7[%c0_26, %c0_27, %c0_28], %173 {strides = array<i32>} : memref<2x2x32xf32, #tpu.memory_space<vmem>>, vector<1x2x32xf32>,
    %c0_29 = arith.constant 0 : index
    %c0_30 = arith.constant 0 : index
    %c0_31 = arith.constant 0 : index
    %174 = vector.load %arg8[%c0_29, %c0_30, %c0_31] : memref<2x2x32xf32, #tpu.memory_space<vmem>>, vector<1x2x32xf32>
    %175 = vector.shape_cast %174 : vector<1x2x32xf32> to vector<2x32xf32>
    %176 = vector.shape_cast %168 : vector<2x32xf32> to vector<1x2x32xf32>
    tpu.vector_store %arg8[%c0_29, %c0_30, %c0_31], %176 {strides = array<i32>} : memref<2x2x32xf32, #tpu.memory_space<vmem>>, vector<1x2x32xf32>,
    %177 = vector.shape_cast %30 : vector<2x32xf32> to vector<1x2x32xf32>
    %178 = vector.shape_cast %50 : vector<2x32xf32> to vector<1x2x32xf32>
    %179 = vector.shape_cast %70 : vector<2x32xf32> to vector<1x2x32xf32>
    %180 = vector.shape_cast %90 : vector<2x32xf32> to vector<1x2x32xf32>
    %181 = vector.shape_cast %110 : vector<2x32xf32> to vector<1x2x32xf32>
    %182 = vector.shape_cast %130 : vector<2x32xf32> to vector<1x2x32xf32>
    %183 = vector.shape_cast %150 : vector<2x32xf32> to vector<1x2x32xf32>
    %184 = vector.shape_cast %170 : vector<2x32xf32> to vector<1x2x32xf32>
    %185 = tpu.concatenate %177, %178, %179, %180, %181, %182, %183, %184 in 0 : vector<1x2x32xf32>, vector<1x2x32xf32>, vector<1x2x32xf32>, vector<1x2x32xf32>, vector<1x2x32xf32>, vector<1x2x32xf32>, vector<1x2x32xf32>, vector<1x2x32xf32> -> vector<8x2x32xf32>
    %c0_32 = arith.constant 0 : index
    %c0_33 = arith.constant 0 : index
    %186 = vector.load %arg4[%c0_32, %c0_33] : memref<32x128xf32, #tpu.memory_space<vmem>>, vector<32x128xf32>
    %c0_34 = arith.constant 0 : index
    %c0_35 = arith.constant 0 : index
    %187 = vector.load %arg5[%c0_34, %c0_35] : memref<32x128xf32, #tpu.memory_space<vmem>>, vector<32x128xf32>
    %c0_36 = arith.constant 0 : index
    %c0_37 = arith.constant 0 : index
    %188 = vector.load %arg6[%c0_36, %c0_37] : memref<1x128xf32, #tpu.memory_space<vmem>>, vector<1x128xf32>
    %189 = vector.shape_cast %185 : vector<8x2x32xf32> to vector<16x32xf32>
    %cst_38 = arith.constant dense<0.000000e+00> : vector<16x128xf32>
    %190 = tpu.matmul %189, %186, %cst_38 {dimension_numbers = #tpu.dot_dimension_numbers<[1], [0], [0], [1], [0, 0, 1, 1], [], []>} : vector<16x32xf32>, vector<32x128xf32>, vector<16x128xf32> -> vector<16x128xf32>
    %191 = vector.broadcast %188 : vector<1x128xf32> to vector<16x128xf32>
    %192 = arith.addf %190, %191 : vector<16x128xf32>
    %193 = vector.shape_cast %192 : vector<16x128xf32> to vector<8x2x128xf32>
    %cst_39 = arith.constant 0.000000e+00 : f32
    %194 = vector.broadcast %cst_39 : f32 to vector<2x32xf32>
    %cst_40 = arith.constant 0.000000e+00 : f32
    %195 = vector.broadcast %cst_40 : f32 to vector<2x32xf32>
    %196 = vector.extract_strided_slice %193 {offsets = [0, 0, 0], sizes = [1, 2, 128], strides = [1, 1, 1]} : vector<8x2x128xf32> to vector<1x2x128xf32>
    %197 = vector.shape_cast %196 : vector<1x2x128xf32> to vector<2x128xf32>
    %cst_41 = arith.constant dense<0.000000e+00> : vector<2x128xf32>
    %198 = tpu.matmul %194, %187, %cst_41 {dimension_numbers = #tpu.dot_dimension_numbers<[1], [0], [0], [1], [0, 0, 1, 1], [], []>} : vector<2x32xf32>, vector<32x128xf32>, vector<2x128xf32> -> vector<2x128xf32>
    %199 = arith.addf %197, %198 : vector<2x128xf32>
    %200 = vector.extract_strided_slice %199 {offsets = [0, 0], sizes = [2, 96], strides = [1, 1]} : vector<2x128xf32> to vector<2x96xf32>
    %201 = arith.negf %200 : vector<2x96xf32>
    %202 = math.exp %201 : vector<2x96xf32>
    %cst_42 = arith.constant 1.000000e+00 : f32
    %203 = vector.broadcast %cst_42 : f32 to vector<2x96xf32>
    %204 = arith.addf %203, %202 : vector<2x96xf32>
    %205 = arith.divf %203, %204 : vector<2x96xf32>
    %206 = vector.extract_strided_slice %199 {offsets = [0, 96], sizes = [2, 32], strides = [1, 1]} : vector<2x128xf32> to vector<2x32xf32>
    %207 = math.tanh %206 : vector<2x32xf32>
    %208 = vector.extract_strided_slice %205 {offsets = [0, 0], sizes = [2, 32], strides = [1, 1]} : vector<2x96xf32> to vector<2x32xf32>
    %209 = vector.extract_strided_slice %205 {offsets = [0, 32], sizes = [2, 32], strides = [1, 1]} : vector<2x96xf32> to vector<2x32xf32>
    %210 = vector.extract_strided_slice %205 {offsets = [0, 64], sizes = [2, 32], strides = [1, 1]} : vector<2x96xf32> to vector<2x32xf32>
    %211 = arith.mulf %209, %195 : vector<2x32xf32>
    %212 = arith.mulf %208, %207 : vector<2x32xf32>
    %213 = arith.addf %211, %212 : vector<2x32xf32>
    %214 = math.tanh %213 : vector<2x32xf32>
    %215 = arith.mulf %210, %214 : vector<2x32xf32>
    %216 = vector.extract_strided_slice %193 {offsets = [1, 0, 0], sizes = [1, 2, 128], strides = [1, 1, 1]} : vector<8x2x128xf32> to vector<1x2x128xf32>
    %217 = vector.shape_cast %216 : vector<1x2x128xf32> to vector<2x128xf32>
    %cst_43 = arith.constant dense<0.000000e+00> : vector<2x128xf32>
    %218 = tpu.matmul %215, %187, %cst_43 {dimension_numbers = #tpu.dot_dimension_numbers<[1], [0], [0], [1], [0, 0, 1, 1], [], []>} : vector<2x32xf32>, vector<32x128xf32>, vector<2x128xf32> -> vector<2x128xf32>
    %219 = arith.addf %217, %218 : vector<2x128xf32>
    %220 = vector.extract_strided_slice %219 {offsets = [0, 0], sizes = [2, 96], strides = [1, 1]} : vector<2x128xf32> to vector<2x96xf32>
    %221 = arith.negf %220 : vector<2x96xf32>
    %222 = math.exp %221 : vector<2x96xf32>
    %cst_44 = arith.constant 1.000000e+00 : f32
    %223 = vector.broadcast %cst_44 : f32 to vector<2x96xf32>
    %224 = arith.addf %223, %222 : vector<2x96xf32>
    %225 = arith.divf %223, %224 : vector<2x96xf32>
    %226 = vector.extract_strided_slice %219 {offsets = [0, 96], sizes = [2, 32], strides = [1, 1]} : vector<2x128xf32> to vector<2x32xf32>
    %227 = math.tanh %226 : vector<2x32xf32>
    %228 = vector.extract_strided_slice %225 {offsets = [0, 0], sizes = [2, 32], strides = [1, 1]} : vector<2x96xf32> to vector<2x32xf32>
    %229 = vector.extract_strided_slice %225 {offsets = [0, 32], sizes = [2, 32], strides = [1, 1]} : vector<2x96xf32> to vector<2x32xf32>
    %230 = vector.extract_strided_slice %225 {offsets = [0, 64], sizes = [2, 32], strides = [1, 1]} : vector<2x96xf32> to vector<2x32xf32>
    %231 = arith.mulf %229, %213 : vector<2x32xf32>
    %232 = arith.mulf %228, %227 : vector<2x32xf32>
    %233 = arith.addf %231, %232 : vector<2x32xf32>
    %234 = math.tanh %233 : vector<2x32xf32>
    %235 = arith.mulf %230, %234 : vector<2x32xf32>
    %236 = vector.extract_strided_slice %193 {offsets = [2, 0, 0], sizes = [1, 2, 128], strides = [1, 1, 1]} : vector<8x2x128xf32> to vector<1x2x128xf32>
    %237 = vector.shape_cast %236 : vector<1x2x128xf32> to vector<2x128xf32>
    %cst_45 = arith.constant dense<0.000000e+00> : vector<2x128xf32>
    %238 = tpu.matmul %235, %187, %cst_45 {dimension_numbers = #tpu.dot_dimension_numbers<[1], [0], [0], [1], [0, 0, 1, 1], [], []>} : vector<2x32xf32>, vector<32x128xf32>, vector<2x128xf32> -> vector<2x128xf32>
    %239 = arith.addf %237, %238 : vector<2x128xf32>
    %240 = vector.extract_strided_slice %239 {offsets = [0, 0], sizes = [2, 96], strides = [1, 1]} : vector<2x128xf32> to vector<2x96xf32>
    %241 = arith.negf %240 : vector<2x96xf32>
    %242 = math.exp %241 : vector<2x96xf32>
    %cst_46 = arith.constant 1.000000e+00 : f32
    %243 = vector.broadcast %cst_46 : f32 to vector<2x96xf32>
    %244 = arith.addf %243, %242 : vector<2x96xf32>
    %245 = arith.divf %243, %244 : vector<2x96xf32>
    %246 = vector.extract_strided_slice %239 {offsets = [0, 96], sizes = [2, 32], strides = [1, 1]} : vector<2x128xf32> to vector<2x32xf32>
    %247 = math.tanh %246 : vector<2x32xf32>
    %248 = vector.extract_strided_slice %245 {offsets = [0, 0], sizes = [2, 32], strides = [1, 1]} : vector<2x96xf32> to vector<2x32xf32>
    %249 = vector.extract_strided_slice %245 {offsets = [0, 32], sizes = [2, 32], strides = [1, 1]} : vector<2x96xf32> to vector<2x32xf32>
    %250 = vector.extract_strided_slice %245 {offsets = [0, 64], sizes = [2, 32], strides = [1, 1]} : vector<2x96xf32> to vector<2x32xf32>
    %251 = arith.mulf %249, %233 : vector<2x32xf32>
    %252 = arith.mulf %248, %247 : vector<2x32xf32>
    %253 = arith.addf %251, %252 : vector<2x32xf32>
    %254 = math.tanh %253 : vector<2x32xf32>
    %255 = arith.mulf %250, %254 : vector<2x32xf32>
    %256 = vector.extract_strided_slice %193 {offsets = [3, 0, 0], sizes = [1, 2, 128], strides = [1, 1, 1]} : vector<8x2x128xf32> to vector<1x2x128xf32>
    %257 = vector.shape_cast %256 : vector<1x2x128xf32> to vector<2x128xf32>
    %cst_47 = arith.constant dense<0.000000e+00> : vector<2x128xf32>
    %258 = tpu.matmul %255, %187, %cst_47 {dimension_numbers = #tpu.dot_dimension_numbers<[1], [0], [0], [1], [0, 0, 1, 1], [], []>} : vector<2x32xf32>, vector<32x128xf32>, vector<2x128xf32> -> vector<2x128xf32>
    %259 = arith.addf %257, %258 : vector<2x128xf32>
    %260 = vector.extract_strided_slice %259 {offsets = [0, 0], sizes = [2, 96], strides = [1, 1]} : vector<2x128xf32> to vector<2x96xf32>
    %261 = arith.negf %260 : vector<2x96xf32>
    %262 = math.exp %261 : vector<2x96xf32>
    %cst_48 = arith.constant 1.000000e+00 : f32
    %263 = vector.broadcast %cst_48 : f32 to vector<2x96xf32>
    %264 = arith.addf %263, %262 : vector<2x96xf32>
    %265 = arith.divf %263, %264 : vector<2x96xf32>
    %266 = vector.extract_strided_slice %259 {offsets = [0, 96], sizes = [2, 32], strides = [1, 1]} : vector<2x128xf32> to vector<2x32xf32>
    %267 = math.tanh %266 : vector<2x32xf32>
    %268 = vector.extract_strided_slice %265 {offsets = [0, 0], sizes = [2, 32], strides = [1, 1]} : vector<2x96xf32> to vector<2x32xf32>
    %269 = vector.extract_strided_slice %265 {offsets = [0, 32], sizes = [2, 32], strides = [1, 1]} : vector<2x96xf32> to vector<2x32xf32>
    %270 = vector.extract_strided_slice %265 {offsets = [0, 64], sizes = [2, 32], strides = [1, 1]} : vector<2x96xf32> to vector<2x32xf32>
    %271 = arith.mulf %269, %253 : vector<2x32xf32>
    %272 = arith.mulf %268, %267 : vector<2x32xf32>
    %273 = arith.addf %271, %272 : vector<2x32xf32>
    %274 = math.tanh %273 : vector<2x32xf32>
    %275 = arith.mulf %270, %274 : vector<2x32xf32>
    %276 = vector.extract_strided_slice %193 {offsets = [4, 0, 0], sizes = [1, 2, 128], strides = [1, 1, 1]} : vector<8x2x128xf32> to vector<1x2x128xf32>
    %277 = vector.shape_cast %276 : vector<1x2x128xf32> to vector<2x128xf32>
    %cst_49 = arith.constant dense<0.000000e+00> : vector<2x128xf32>
    %278 = tpu.matmul %275, %187, %cst_49 {dimension_numbers = #tpu.dot_dimension_numbers<[1], [0], [0], [1], [0, 0, 1, 1], [], []>} : vector<2x32xf32>, vector<32x128xf32>, vector<2x128xf32> -> vector<2x128xf32>
    %279 = arith.addf %277, %278 : vector<2x128xf32>
    %280 = vector.extract_strided_slice %279 {offsets = [0, 0], sizes = [2, 96], strides = [1, 1]} : vector<2x128xf32> to vector<2x96xf32>
    %281 = arith.negf %280 : vector<2x96xf32>
    %282 = math.exp %281 : vector<2x96xf32>
    %cst_50 = arith.constant 1.000000e+00 : f32
    %283 = vector.broadcast %cst_50 : f32 to vector<2x96xf32>
    %284 = arith.addf %283, %282 : vector<2x96xf32>
    %285 = arith.divf %283, %284 : vector<2x96xf32>
    %286 = vector.extract_strided_slice %279 {offsets = [0, 96], sizes = [2, 32], strides = [1, 1]} : vector<2x128xf32> to vector<2x32xf32>
    %287 = math.tanh %286 : vector<2x32xf32>
    %288 = vector.extract_strided_slice %285 {offsets = [0, 0], sizes = [2, 32], strides = [1, 1]} : vector<2x96xf32> to vector<2x32xf32>
    %289 = vector.extract_strided_slice %285 {offsets = [0, 32], sizes = [2, 32], strides = [1, 1]} : vector<2x96xf32> to vector<2x32xf32>
    %290 = vector.extract_strided_slice %285 {offsets = [0, 64], sizes = [2, 32], strides = [1, 1]} : vector<2x96xf32> to vector<2x32xf32>
    %291 = arith.mulf %289, %273 : vector<2x32xf32>
    %292 = arith.mulf %288, %287 : vector<2x32xf32>
    %293 = arith.addf %291, %292 : vector<2x32xf32>
    %294 = math.tanh %293 : vector<2x32xf32>
    %295 = arith.mulf %290, %294 : vector<2x32xf32>
    %296 = vector.extract_strided_slice %193 {offsets = [5, 0, 0], sizes = [1, 2, 128], strides = [1, 1, 1]} : vector<8x2x128xf32> to vector<1x2x128xf32>
    %297 = vector.shape_cast %296 : vector<1x2x128xf32> to vector<2x128xf32>
    %cst_51 = arith.constant dense<0.000000e+00> : vector<2x128xf32>
    %298 = tpu.matmul %295, %187, %cst_51 {dimension_numbers = #tpu.dot_dimension_numbers<[1], [0], [0], [1], [0, 0, 1, 1], [], []>} : vector<2x32xf32>, vector<32x128xf32>, vector<2x128xf32> -> vector<2x128xf32>
    %299 = arith.addf %297, %298 : vector<2x128xf32>
    %300 = vector.extract_strided_slice %299 {offsets = [0, 0], sizes = [2, 96], strides = [1, 1]} : vector<2x128xf32> to vector<2x96xf32>
    %301 = arith.negf %300 : vector<2x96xf32>
    %302 = math.exp %301 : vector<2x96xf32>
    %cst_52 = arith.constant 1.000000e+00 : f32
    %303 = vector.broadcast %cst_52 : f32 to vector<2x96xf32>
    %304 = arith.addf %303, %302 : vector<2x96xf32>
    %305 = arith.divf %303, %304 : vector<2x96xf32>
    %306 = vector.extract_strided_slice %299 {offsets = [0, 96], sizes = [2, 32], strides = [1, 1]} : vector<2x128xf32> to vector<2x32xf32>
    %307 = math.tanh %306 : vector<2x32xf32>
    %308 = vector.extract_strided_slice %305 {offsets = [0, 0], sizes = [2, 32], strides = [1, 1]} : vector<2x96xf32> to vector<2x32xf32>
    %309 = vector.extract_strided_slice %305 {offsets = [0, 32], sizes = [2, 32], strides = [1, 1]} : vector<2x96xf32> to vector<2x32xf32>
    %310 = vector.extract_strided_slice %305 {offsets = [0, 64], sizes = [2, 32], strides = [1, 1]} : vector<2x96xf32> to vector<2x32xf32>
    %311 = arith.mulf %309, %293 : vector<2x32xf32>
    %312 = arith.mulf %308, %307 : vector<2x32xf32>
    %313 = arith.addf %311, %312 : vector<2x32xf32>
    %314 = math.tanh %313 : vector<2x32xf32>
    %315 = arith.mulf %310, %314 : vector<2x32xf32>
    %316 = vector.extract_strided_slice %193 {offsets = [6, 0, 0], sizes = [1, 2, 128], strides = [1, 1, 1]} : vector<8x2x128xf32> to vector<1x2x128xf32>
    %317 = vector.shape_cast %316 : vector<1x2x128xf32> to vector<2x128xf32>
    %cst_53 = arith.constant dense<0.000000e+00> : vector<2x128xf32>
    %318 = tpu.matmul %315, %187, %cst_53 {dimension_numbers = #tpu.dot_dimension_numbers<[1], [0], [0], [1], [0, 0, 1, 1], [], []>} : vector<2x32xf32>, vector<32x128xf32>, vector<2x128xf32> -> vector<2x128xf32>
    %319 = arith.addf %317, %318 : vector<2x128xf32>
    %320 = vector.extract_strided_slice %319 {offsets = [0, 0], sizes = [2, 96], strides = [1, 1]} : vector<2x128xf32> to vector<2x96xf32>
    %321 = arith.negf %320 : vector<2x96xf32>
    %322 = math.exp %321 : vector<2x96xf32>
    %cst_54 = arith.constant 1.000000e+00 : f32
    %323 = vector.broadcast %cst_54 : f32 to vector<2x96xf32>
    %324 = arith.addf %323, %322 : vector<2x96xf32>
    %325 = arith.divf %323, %324 : vector<2x96xf32>
    %326 = vector.extract_strided_slice %319 {offsets = [0, 96], sizes = [2, 32], strides = [1, 1]} : vector<2x128xf32> to vector<2x32xf32>
    %327 = math.tanh %326 : vector<2x32xf32>
    %328 = vector.extract_strided_slice %325 {offsets = [0, 0], sizes = [2, 32], strides = [1, 1]} : vector<2x96xf32> to vector<2x32xf32>
    %329 = vector.extract_strided_slice %325 {offsets = [0, 32], sizes = [2, 32], strides = [1, 1]} : vector<2x96xf32> to vector<2x32xf32>
    %330 = vector.extract_strided_slice %325 {offsets = [0, 64], sizes = [2, 32], strides = [1, 1]} : vector<2x96xf32> to vector<2x32xf32>
    %331 = arith.mulf %329, %313 : vector<2x32xf32>
    %332 = arith.mulf %328, %327 : vector<2x32xf32>
    %333 = arith.addf %331, %332 : vector<2x32xf32>
    %334 = math.tanh %333 : vector<2x32xf32>
    %335 = arith.mulf %330, %334 : vector<2x32xf32>
    %336 = vector.extract_strided_slice %193 {offsets = [7, 0, 0], sizes = [1, 2, 128], strides = [1, 1, 1]} : vector<8x2x128xf32> to vector<1x2x128xf32>
    %337 = vector.shape_cast %336 : vector<1x2x128xf32> to vector<2x128xf32>
    %cst_55 = arith.constant dense<0.000000e+00> : vector<2x128xf32>
    %338 = tpu.matmul %335, %187, %cst_55 {dimension_numbers = #tpu.dot_dimension_numbers<[1], [0], [0], [1], [0, 0, 1, 1], [], []>} : vector<2x32xf32>, vector<32x128xf32>, vector<2x128xf32> -> vector<2x128xf32>
    %339 = arith.addf %337, %338 : vector<2x128xf32>
    %340 = vector.extract_strided_slice %339 {offsets = [0, 0], sizes = [2, 96], strides = [1, 1]} : vector<2x128xf32> to vector<2x96xf32>
    %341 = arith.negf %340 : vector<2x96xf32>
    %342 = math.exp %341 : vector<2x96xf32>
    %cst_56 = arith.constant 1.000000e+00 : f32
    %343 = vector.broadcast %cst_56 : f32 to vector<2x96xf32>
    %344 = arith.addf %343, %342 : vector<2x96xf32>
    %345 = arith.divf %343, %344 : vector<2x96xf32>
    %346 = vector.extract_strided_slice %339 {offsets = [0, 96], sizes = [2, 32], strides = [1, 1]} : vector<2x128xf32> to vector<2x32xf32>
    %347 = math.tanh %346 : vector<2x32xf32>
    %348 = vector.extract_strided_slice %345 {offsets = [0, 0], sizes = [2, 32], strides = [1, 1]} : vector<2x96xf32> to vector<2x32xf32>
    %349 = vector.extract_strided_slice %345 {offsets = [0, 32], sizes = [2, 32], strides = [1, 1]} : vector<2x96xf32> to vector<2x32xf32>
    %350 = vector.extract_strided_slice %345 {offsets = [0, 64], sizes = [2, 32], strides = [1, 1]} : vector<2x96xf32> to vector<2x32xf32>
    %351 = arith.mulf %349, %333 : vector<2x32xf32>
    %352 = arith.mulf %348, %347 : vector<2x32xf32>
    %353 = arith.addf %351, %352 : vector<2x32xf32>
    %354 = math.tanh %353 : vector<2x32xf32>
    %355 = arith.mulf %350, %354 : vector<2x32xf32>
    %c1 = arith.constant 1 : index
    %c0_57 = arith.constant 0 : index
    %c0_58 = arith.constant 0 : index
    %356 = vector.load %arg7[%c1, %c0_57, %c0_58] : memref<2x2x32xf32, #tpu.memory_space<vmem>>, vector<1x2x32xf32>
    %357 = vector.shape_cast %356 : vector<1x2x32xf32> to vector<2x32xf32>
    %358 = vector.shape_cast %355 : vector<2x32xf32> to vector<1x2x32xf32>
    tpu.vector_store %arg7[%c1, %c0_57, %c0_58], %358 {strides = array<i32>} : memref<2x2x32xf32, #tpu.memory_space<vmem>>, vector<1x2x32xf32>,
    %c1_59 = arith.constant 1 : index
    %c0_60 = arith.constant 0 : index
    %c0_61 = arith.constant 0 : index
    %359 = vector.load %arg8[%c1_59, %c0_60, %c0_61] : memref<2x2x32xf32, #tpu.memory_space<vmem>>, vector<1x2x32xf32>
    %360 = vector.shape_cast %359 : vector<1x2x32xf32> to vector<2x32xf32>
    %361 = vector.shape_cast %353 : vector<2x32xf32> to vector<1x2x32xf32>
    tpu.vector_store %arg8[%c1_59, %c0_60, %c0_61], %361 {strides = array<i32>} : memref<2x2x32xf32, #tpu.memory_space<vmem>>, vector<1x2x32xf32>,
    return
  }
}

</mosaic_0001>

<llo_original>
// kernel: _lambda_.3
$region0: #{_lambda_.3}
  #allocation0 [shape = 'u32[]', space=smem, size = 0x4, offset = 0x4, fixed_abs, tag = 'smem constant byte address 0x4 - core index']
  #allocation1 [shape = 'u32[144,128]{1,0:T(1,128)}', space=vmem, size = 0x12000, scoped, tag = 'internal scratch']
  %s0 = inlined_call_operand.vmem [shape: f32[8,2,32], index: 0, kind: input, shape index: {}]
  %s1 = inlined_call_operand.vmem [shape: f32[32,128], index: 1, kind: input, shape index: {}]
  %s2 = inlined_call_operand.vmem [shape: f32[32,128], index: 2, kind: input, shape index: {}]
  %s3 = inlined_call_operand.vmem [shape: f32[1,128], index: 3, kind: input, shape index: {}]
  %s4 = inlined_call_operand.vmem [shape: f32[32,128], index: 4, kind: input, shape index: {}]
  %s5 = inlined_call_operand.vmem [shape: f32[32,128], index: 5, kind: input, shape index: {}]
  %s6 = inlined_call_operand.vmem [shape: f32[1,128], index: 6, kind: input, shape index: {}]
  %s7 = inlined_call_operand.vmem [shape: f32[2,2,32], index: 7, kind: input, shape index: {}]
  %s8 = inlined_call_operand.vmem [shape: f32[2,2,32], index: 8, kind: input, shape index: {}]
  %s9 = inlined_call_operand.vmem [shape: f32[32,128], index: 9, kind: input, shape index: {}]
  %s10 = inlined_call_operand.vmem [shape: f32[1,128], index: 10, kind: input, shape index: {}]
  %s11 = inlined_call_operand.vmem [shape: f32[8,2,128], index: 11, kind: output, shape index: {}]
  %s12 = sld [smem:[#allocation0]]
  $region54: #{_lambda_.3} parent=0
    _
  %s14 = ssub.s32 1, %s12
  %s15 = scalar_select 0, %s14, %s12
  // Predicated region
  $region2: #{_lambda_.3} parent=0 // pred_check
    _
  $region3: #{_lambda_.3} parent=0 // pred_check_branch
    %17 = sbr.rel (0) target = $region5
  $region4: #{_lambda_.3} parent=0 // pred_region
    _
  $region5: #{_lambda_.3} parent=0 // pred_fallthru
    _
  // Predicated region
  $region6: #{_lambda_.3} parent=0 // pred_check
    _
  $region7: #{_lambda_.3} parent=0 // pred_check_branch
    %19 = sbr.rel (0) target = $region9
  $region8: #{_lambda_.3} parent=0 // pred_region
    _
  $region9: #{_lambda_.3} parent=0 // pred_fallthru
    _
  // Predicated region
  $region10: #{_lambda_.3} parent=0 // pred_check
    _
  $region11: #{_lambda_.3} parent=0 // pred_check_branch
    %21 = sbr.rel (0) target = $region13
  $region12: #{_lambda_.3} parent=0 // pred_region
    _
  $region13: #{_lambda_.3} parent=0 // pred_fallthru
    _
  // Predicated region
  $region14: #{_lambda_.3} parent=0 // pred_check
    _
  $region15: #{_lambda_.3} parent=0 // pred_check_branch
    %23 = sbr.rel (0) target = $region17
  $region16: #{_lambda_.3} parent=0 // pred_region
    _
  $region17: #{_lambda_.3} parent=0 // pred_fallthru
    _
  // Predicated region
  $region18: #{_lambda_.3} parent=0 // pred_check
    _
  $region19: #{_lambda_.3} parent=0 // pred_check_branch
    %25 = sbr.rel (0) target = $region21
  $region20: #{_lambda_.3} parent=0 // pred_region
    _
  $region21: #{_lambda_.3} parent=0 // pred_fallthru
    _
  // Predicated region
  $region22: #{_lambda_.3} parent=0 // pred_check
    _
  $region23: #{_lambda_.3} parent=0 // pred_check_branch
    %27 = sbr.rel (0) target = $region25
  $region24: #{_lambda_.3} parent=0 // pred_region
    _
  $region25: #{_lambda_.3} parent=0 // pred_fallthru
    _
  // Predicated region
  $region26: #{_lambda_.3} parent=0 // pred_check
    _
  $region27: #{_lambda_.3} parent=0 // pred_check_branch
    %29 = sbr.rel (0) target = $region29
  $region28: #{_lambda_.3} parent=0 // pred_region
    _
  $region29: #{_lambda_.3} parent=0 // pred_fallthru
    _
  // Predicated region
  $region30: #{_lambda_.3} parent=0 // pred_check
    _
  $region31: #{_lambda_.3} parent=0 // pred_check_branch
    %31 = sbr.rel (0) target = $region33
  $region32: #{_lambda_.3} parent=0 // pred_region
    _
  $region33: #{_lambda_.3} parent=0 // pred_fallthru
    _
  // Predicated region
  $region34: #{_lambda_.3} parent=0 // pred_check
    _
  $region35: #{_lambda_.3} parent=0 // pred_check_branch
    %33 = sbr.rel (0) target = $region37
  $region36: #{_lambda_.3} parent=0 // pred_region
    _
  $region37: #{_lambda_.3} parent=0 // pred_fallthru
    _
  // Predicated region
  $region38: #{_lambda_.3} parent=0 // pred_check
    _
  $region39: #{_lambda_.3} parent=0 // pred_check_branch
    %35 = sbr.rel (0) target = $region41
  $region40: #{_lambda_.3} parent=0 // pred_region
    _
  $region41: #{_lambda_.3} parent=0 // pred_fallthru
    _
  // Predicated region
  $region42: #{_lambda_.3} parent=0 // pred_check
    _
  $region43: #{_lambda_.3} parent=0 // pred_check_branch
    %37 = sbr.rel (0) target = $region45
  $region44: #{_lambda_.3} parent=0 // pred_region
    _
  $region45: #{_lambda_.3} parent=0 // pred_fallthru
    _
  %v38 = vld [vmem:[%s0] sm:$0x3]
  %v39 = vld [vmem:[%s0 + $0x2] sm:$0x3]
  %v40 = vld [vmem:[%s0 + $0x4] sm:$0x3]
  %v41 = vld [vmem:[%s0 + $0x6] sm:$0x3]
  %v42 = vld [vmem:[%s0 + $0x8] sm:$0x3]
  %v43 = vld [vmem:[%s0 + $0xa] sm:$0x3]
  %v44 = vld [vmem:[%s0 + $0xc] sm:$0x3]
  %v45 = vld [vmem:[%s0 + $0xe] sm:$0x3]
  %v46 = vld [vmem:[%s1] sm:$0xff]
  %v47 = vld [vmem:[%s1 + $0x8] sm:$0xff]
  %v48 = vld [vmem:[%s1 + $0x10] sm:$0xff]
  %v49 = vld [vmem:[%s1 + $0x18] sm:$0xff]
  %v50 = vld [vmem:[%s2] sm:$0xff]
  %v51 = vld [vmem:[%s2 + $0x8] sm:$0xff]
  %v52 = vld [vmem:[%s2 + $0x10] sm:$0xff]
  %v53 = vld [vmem:[%s2 + $0x18] sm:$0xff]
  %v54 = vld [vmem:[%s3] sm:$0x1]
  %v56 = vlaneseq
  %v57 = vshrl.u32 %v56, 7
  %v58 = vsub.s32 0, %v57
  %v59 = vrot.slane %v54, %v58
  %v69 = vcombine.low %v38, %v39
  %v70 = vcombine.low %v40, %v41
  %v72 = vunpack.c.l.s4 1983009808
  %v73 = vunpack.c.0.s8 %v72
  %v74 = vlaneseq
  %v75 = vshrl.u32 %v74, 7
  %v76 = vsub.s32 %v73, %v75
  %v77 = vrot.slane %v69, %v76
  %v79 = vunpack.c.l.s4 1983009808
  %v80 = vunpack.c.0.s8 %v79
  %v81 = vlaneseq
  %v82 = vshrl.u32 %v81, 7
  %v83 = vsub.s32 %v80, %v82
  %v84 = vrot.slane %v70, %v83
  %v85 = vcombine.low %v77, %v84
  %v86 = vcombine.low %v42, %v43
  %v87 = vcombine.low %v44, %v45
  %v89 = vunpack.c.l.s4 1983009808
  %v90 = vunpack.c.0.s8 %v89
  %v91 = vlaneseq
  %v92 = vshrl.u32 %v91, 7
  %v93 = vsub.s32 %v90, %v92
  %v94 = vrot.slane %v86, %v93
  %v96 = vunpack.c.l.s4 1983009808
  %v97 = vunpack.c.0.s8 %v96
  %v98 = vlaneseq
  %v99 = vshrl.u32 %v98, 7
  %v100 = vsub.s32 %v97, %v99
  %v101 = vrot.slane %v87, %v100
  %v102 = vcombine.low %v94, %v101
  %vm103 = vcmask 261120
  %v104 = vsel %vm103, %v85, 0
  %v106 = vsel %vm103, %v102, 0
  %108 = vmatprep.subr.mxu0 0.0
  %109 = vmatpush1.msra.mxu0 0.0
  %110 = vmatprep.subr.mxu0 0.0
  %111 = vmatpush1.msra.mxu0 0.0
  %112 = vmatprep.subr.mxu0 0.0
  %113 = vmatpush1.msra.mxu0 0.0
  %114 = vmatprep.subr.mxu0 0.0
  %115 = vmatpush1.msra.mxu0 0.0
  %116 = vmatprep.subr.mxu0 0.0
  %117 = vmatpush1.msra.mxu0 0.0
  %118 = vmatprep.subr.mxu0 0.0
  %119 = vmatpush1.msra.mxu0 0.0
  %120 = vmatprep.subr.mxu0 0.0
  %121 = vmatpush1.msra.mxu0 0.0
  %122 = vmatprep.subr.mxu0 0.0
  %123 = vmatpush1.msra.mxu0 0.0
  %124 = vmatprep.subr.mxu0 0.0
  %125 = vmatpush1.msra.mxu0 0.0
  %126 = vmatprep.subr.mxu0 0.0
  %127 = vmatpush1.msra.mxu0 0.0
  %128 = vmatprep.subr.mxu0 0.0
  %129 = vmatpush1.msra.mxu0 0.0
  %130 = vmatprep.subr.mxu0 0.0
  %131 = vmatpush1.msra.mxu0 0.0
  %132 = vmatprep.subr.mxu0 0.0
  %133 = vmatpush1.msra.mxu0 %v49
  %134 = vmatprep.subr.mxu0 0.0
  %135 = vmatpush1.msra.mxu0 %v48
  %136 = vmatprep.subr.mxu0 0.0
  %137 = vmatpush1.msra.mxu0 %v47
  %138 = vmatprep.subr.mxu0 0.0
  %139 = vmatpush1.msra.mxu0 %v46
  %140 = vmatprep.subr.mxu0 0.0
  %141 = vmatpush2.msra.mxu0 0.0
  %142 = vmatprep.subr.mxu0 0.0
  %143 = vmatpush2.msra.mxu0 0.0
  %144 = vmatprep.subr.mxu0 0.0
  %145 = vmatpush2.msra.mxu0 0.0
  %146 = vmatprep.subr.mxu0 0.0
  %147 = vmatpush2.msra.mxu0 0.0
  %148 = vmatprep.subr.mxu0 0.0
  %149 = vmatpush2.msra.mxu0 0.0
  %150 = vmatprep.subr.mxu0 0.0
  %151 = vmatpush2.msra.mxu0 0.0
  %152 = vmatprep.subr.mxu0 0.0
  %153 = vmatpush2.msra.mxu0 0.0
  %154 = vmatprep.subr.mxu0 0.0
  %155 = vmatpush2.msra.mxu0 0.0
  %156 = vmatprep.subr.mxu0 0.0
  %157 = vmatpush2.msra.mxu0 0.0
  %158 = vmatprep.subr.mxu0 0.0
  %159 = vmatpush2.msra.mxu0 0.0
  %160 = vmatprep.subr.mxu0 0.0
  %161 = vmatpush2.msra.mxu0 0.0
  %162 = vmatprep.subr.mxu0 0.0
  %163 = vmatpush2.msra.mxu0 0.0
  %164 = vmatprep.subr.mxu0 0.0
  %165 = vmatpush2.msra.mxu0 0.0
  %166 = vmatprep.subr.mxu0 0.0
  %167 = vmatpush2.msra.mxu0 0.0
  %168 = vmatprep.subr.mxu0 0.0
  %169 = vmatpush2.msra.mxu0 0.0
  %170 = vmatprep.subr.mxu0 0.0
  %171 = vmatpush2.msra.mxu0 0.0
  %172 = vmatprep.mubr.f32.mxu0 0.0
  %173 = vmatmul.mubr.f32.gmra.mxu0 %v104
  %v174 = vpop.f32.mrf.mxu0
  %v175 = vadd.f32 %v59, %v174
  %v176 = vpop.f32.mrf.mxu0
  %177 = vmatprep.mubr.f32.mxu0 0.0
  %178 = vmatmul.mubr.f32.gmra.mxu0 %v106
  %v179 = vpop.f32.mrf.mxu0
  %v180 = vadd.f32 %v59, %v179
  %v181 = vpop.f32.mrf.mxu0
  %182 = vdwg.mxu0
  %v185 = vcombine.high %v175, %v175
  %v187 = vunpack.c.l.s4 1983009808
  %v188 = vunpack.c.0.s8 %v187
  %v189 = vlaneseq
  %v190 = vshrl.u32 %v189, 7
  %v191 = vsub.s32 %v188, %v190
  %v192 = vrot.slane %v175, %v191
  %v194 = vunpack.c.l.s4 1983009808
  %v195 = vunpack.c.0.s8 %v194
  %v196 = vlaneseq
  %v197 = vshrl.u32 %v196, 7
  %v198 = vsub.s32 %v195, %v197
  %v199 = vrot.slane %v185, %v198
  %v200 = vcombine.high %v192, %v192
  %v201 = vcombine.high %v199, %v199
  %v202 = vcombine.high %v180, %v180
  %v204 = vunpack.c.l.s4 1983009808
  %v205 = vunpack.c.0.s8 %v204
  %v206 = vlaneseq
  %v207 = vshrl.u32 %v206, 7
  %v208 = vsub.s32 %v205, %v207
  %v209 = vrot.slane %v180, %v208
  %v211 = vunpack.c.l.s4 1983009808
  %v212 = vunpack.c.0.s8 %v211
  %v213 = vlaneseq
  %v214 = vshrl.u32 %v213, 7
  %v215 = vsub.s32 %v212, %v214
  %v216 = vrot.slane %v202, %v215
  %v217 = vcombine.high %v209, %v209
  %v218 = vcombine.high %v216, %v216
  %v227 = vld [vmem:[%s7] sm:$0x3]
  %v228 = vld [vmem:[%s8] sm:$0x3]
  %v230 = vsel %vm103, %v227, 0
  %232 = vmatprep.subr.mxu0 0.0
  %233 = vmatpush1.msra.mxu0 0.0
  %234 = vmatprep.subr.mxu0 0.0
  %235 = vmatpush1.msra.mxu0 0.0
  %236 = vmatprep.subr.mxu0 0.0
  %237 = vmatpush1.msra.mxu0 0.0
  %238 = vmatprep.subr.mxu0 0.0
  %239 = vmatpush1.msra.mxu0 0.0
  %240 = vmatprep.subr.mxu0 0.0
  %241 = vmatpush1.msra.mxu0 0.0
  %242 = vmatprep.subr.mxu0 0.0
  %243 = vmatpush1.msra.mxu0 0.0
  %244 = vmatprep.subr.mxu0 0.0
  %245 = vmatpush1.msra.mxu0 0.0
  %246 = vmatprep.subr.mxu0 0.0
  %247 = vmatpush1.msra.mxu0 0.0
  %248 = vmatprep.subr.mxu0 0.0
  %249 = vmatpush1.msra.mxu0 0.0
  %250 = vmatprep.subr.mxu0 0.0
  %251 = vmatpush1.msra.mxu0 0.0
  %252 = vmatprep.subr.mxu0 0.0
  %253 = vmatpush1.msra.mxu0 0.0
  %254 = vmatprep.subr.mxu0 0.0
  %255 = vmatpush1.msra.mxu0 0.0
  %256 = vmatprep.subr.mxu0 0.0
  %257 = vmatpush1.msra.mxu0 %v53
  %258 = vmatprep.subr.mxu0 0.0
  %259 = vmatpush1.msra.mxu0 %v52
  %260 = vmatprep.subr.mxu0 0.0
  %261 = vmatpush1.msra.mxu0 %v51
  %262 = vmatprep.subr.mxu0 0.0
  %263 = vmatpush1.msra.mxu0 %v50
  %264 = vmatprep.subr.mxu0 0.0
  %265 = vmatpush2.msra.mxu0 0.0
  %266 = vmatprep.subr.mxu0 0.0
  %267 = vmatpush2.msra.mxu0 0.0
  %268 = vmatprep.subr.mxu0 0.0
  %269 = vmatpush2.msra.mxu0 0.0
  %270 = vmatprep.subr.mxu0 0.0
  %271 = vmatpush2.msra.mxu0 0.0
  %272 = vmatprep.subr.mxu0 0.0
  %273 = vmatpush2.msra.mxu0 0.0
  %274 = vmatprep.subr.mxu0 0.0
  %275 = vmatpush2.msra.mxu0 0.0
  %276 = vmatprep.subr.mxu0 0.0
  %277 = vmatpush2.msra.mxu0 0.0
  %278 = vmatprep.subr.mxu0 0.0
  %279 = vmatpush2.msra.mxu0 0.0
  %280 = vmatprep.subr.mxu0 0.0
  %281 = vmatpush2.msra.mxu0 0.0
  %282 = vmatprep.subr.mxu0 0.0
  %283 = vmatpush2.msra.mxu0 0.0
  %284 = vmatprep.subr.mxu0 0.0
  %285 = vmatpush2.msra.mxu0 0.0
  %286 = vmatprep.subr.mxu0 0.0
  %287 = vmatpush2.msra.mxu0 0.0
  %288 = vmatprep.subr.mxu0 0.0
  %289 = vmatpush2.msra.mxu0 0.0
  %290 = vmatprep.subr.mxu0 0.0
  %291 = vmatpush2.msra.mxu0 0.0
  %292 = vmatprep.subr.mxu0 0.0
  %293 = vmatpush2.msra.mxu0 0.0
  %294 = vmatprep.subr.mxu0 0.0
  %295 = vmatpush2.msra.mxu0 0.0
  %296 = vmatprep.mubr.f32.mxu0 0.0
  %297 = vmatmul.mubr.f32.gmra.mxu0 %v230
  %v298 = vpop.f32.mrf.mxu0
  %v299 = vadd.f32 0.0, %v298
  %v300 = vpop.f32.mrf.mxu0
  %301 = vdwg.mxu0
  %v302 = vadd.f32 %v192, %v299
  %v303 = vxor.u32 %v302, 2147483648
  %v304 = vmul.f32 %v303, 1.442695
  %v305 = vpow.pop %v304
  %v306 = vadd.f32 %v305, 1.0
  %v307 = vrcp.pop %v306
  %v308 = vmul.f32 1.0, %v307
  %v309 = vtanh.pop %v302
  %v312 = vunpack.c.l.s4 1983009808
  %v313 = vunpack.c.0.s8 %v312
  %v314 = vlaneseq
  %v315 = vshrl.u32 %v314, 7
  %v316 = vsub.s32 %v313, %v315
  %v317 = vrot.slane %v228, %v316
  %318 = vrot.lane.b32.xlu0 %v317, 32
  %v319 = vpop.permute.xlu0 %318
  %v321 = vmul.f32 %v308, %v319
  %323 = vrot.lane.b32.xlu0 %v309, 32
  %v324 = vpop.permute.xlu0 %323
  %v326 = vmul.f32 %v308, %v324
  %328 = vrot.lane.b32.xlu0 %v326, 32
  %v329 = vpop.permute.xlu0 %328
  %v331 = vadd.f32 %v321, %v329
  %v332 = vtanh.pop %v331
  %334 = vrot.lane.b32.xlu0 %v332, 32
  %v335 = vpop.permute.xlu0 %334
  %v337 = vmul.f32 %v308, %v335
  %v340 = vunpack.c.l.s4 1983009808
  %v341 = vunpack.c.0.s8 %v340
  %v342 = vlaneseq
  %v343 = vshrl.u32 %v342, 7
  %v344 = vsub.s32 %v341, %v343
  %v345 = vrot.slane %v337, %v344
  %346 = vrot.lane.b32.xlu0 %v345, 64
  %v347 = vpop.permute.xlu0 %346
  %v348 = vsel %vm103, %v347, 0
  %350 = vmatprep.subr.mxu0 0.0
  %351 = vmatpush1.msra.mxu0 0.0
  %352 = vmatprep.subr.mxu0 0.0
  %353 = vmatpush1.msra.mxu0 0.0
  %354 = vmatprep.subr.mxu0 0.0
  %355 = vmatpush1.msra.mxu0 0.0
  %356 = vmatprep.subr.mxu0 0.0
  %357 = vmatpush1.msra.mxu0 0.0
  %358 = vmatprep.subr.mxu0 0.0
  %359 = vmatpush1.msra.mxu0 0.0
  %360 = vmatprep.subr.mxu0 0.0
  %361 = vmatpush1.msra.mxu0 0.0
  %362 = vmatprep.subr.mxu0 0.0
  %363 = vmatpush1.msra.mxu0 0.0
  %364 = vmatprep.subr.mxu0 0.0
  %365 = vmatpush1.msra.mxu0 0.0
  %366 = vmatprep.subr.mxu0 0.0
  %367 = vmatpush1.msra.mxu0 0.0
  %368 = vmatprep.subr.mxu0 0.0
  %369 = vmatpush1.msra.mxu0 0.0
  %370 = vmatprep.subr.mxu0 0.0
  %371 = vmatpush1.msra.mxu0 0.0
  %372 = vmatprep.subr.mxu0 0.0
  %373 = vmatpush1.msra.mxu0 0.0
  %374 = vmatprep.subr.mxu0 0.0
  %375 = vmatpush1.msra.mxu0 %v53
  %376 = vmatprep.subr.mxu0 0.0
  %377 = vmatpush1.msra.mxu0 %v52
  %378 = vmatprep.subr.mxu0 0.0
  %379 = vmatpush1.msra.mxu0 %v51
  %380 = vmatprep.subr.mxu0 0.0
  %381 = vmatpush1.msra.mxu0 %v50
  %382 = vmatprep.subr.mxu0 0.0
  %383 = vmatpush2.msra.mxu0 0.0
  %384 = vmatprep.subr.mxu0 0.0
  %385 = vmatpush2.msra.mxu0 0.0
  %386 = vmatprep.subr.mxu0 0.0
  %387 = vmatpush2.msra.mxu0 0.0
  %388 = vmatprep.subr.mxu0 0.0
  %389 = vmatpush2.msra.mxu0 0.0
  %390 = vmatprep.subr.mxu0 0.0
  %391 = vmatpush2.msra.mxu0 0.0
  %392 = vmatprep.subr.mxu0 0.0
  %393 = vmatpush2.msra.mxu0 0.0
  %394 = vmatprep.subr.mxu0 0.0
  %395 = vmatpush2.msra.mxu0 0.0
  %396 = vmatprep.subr.mxu0 0.0
  %397 = vmatpush2.msra.mxu0 0.0
  %398 = vmatprep.subr.mxu0 0.0
  %399 = vmatpush2.msra.mxu0 0.0
  %400 = vmatprep.subr.mxu0 0.0
  %401 = vmatpush2.msra.mxu0 0.0
  %402 = vmatprep.subr.mxu0 0.0
  %403 = vmatpush2.msra.mxu0 0.0
  %404 = vmatprep.subr.mxu0 0.0
  %405 = vmatpush2.msra.mxu0 0.0
  %406 = vmatprep.subr.mxu0 0.0
  %407 = vmatpush2.msra.mxu0 0.0
  %408 = vmatprep.subr.mxu0 0.0
  %409 = vmatpush2.msra.mxu0 0.0
  %410 = vmatprep.subr.mxu0 0.0
  %411 = vmatpush2.msra.mxu0 0.0
  %412 = vmatprep.subr.mxu0 0.0
  %413 = vmatpush2.msra.mxu0 0.0
  %414 = vmatprep.mubr.f32.mxu0 0.0
  %415 = vmatmul.mubr.f32.gmra.mxu0 %v348
  %v416 = vpop.f32.mrf.mxu0
  %v417 = vadd.f32 0.0, %v416
  %v418 = vpop.f32.mrf.mxu0
  %419 = vdwg.mxu0
  %v420 = vadd.f32 %v200, %v417
  %v421 = vxor.u32 %v420, 2147483648
  %v422 = vmul.f32 %v421, 1.442695
  %v423 = vpow.pop %v422
  %v424 = vadd.f32 %v423, 1.0
  %v425 = vrcp.pop %v424
  %v426 = vmul.f32 1.0, %v425
  %v427 = vtanh.pop %v420
  %v428 = vmul.f32 %v426, %v331
  %430 = vrot.lane.b32.xlu0 %v427, 32
  %v431 = vpop.permute.xlu0 %430
  %v433 = vmul.f32 %v426, %v431
  %435 = vrot.lane.b32.xlu0 %v433, 32
  %v436 = vpop.permute.xlu0 %435
  %v438 = vadd.f32 %v428, %v436
  %v439 = vtanh.pop %v438
  %441 = vrot.lane.b32.xlu0 %v439, 32
  %v442 = vpop.permute.xlu0 %441
  %v444 = vmul.f32 %v426, %v442
  %v447 = vunpack.c.l.s4 1983009808
  %v448 = vunpack.c.0.s8 %v447
  %v449 = vlaneseq
  %v450 = vshrl.u32 %v449, 7
  %v451 = vsub.s32 %v448, %v450
  %v452 = vrot.slane %v444, %v451
  %453 = vrot.lane.b32.xlu0 %v452, 64
  %v454 = vpop.permute.xlu0 %453
  %v455 = vsel %vm103, %v454, 0
  %457 = vmatprep.subr.mxu0 0.0
  %458 = vmatpush1.msra.mxu0 0.0
  %459 = vmatprep.subr.mxu0 0.0
  %460 = vmatpush1.msra.mxu0 0.0
  %461 = vmatprep.subr.mxu0 0.0
  %462 = vmatpush1.msra.mxu0 0.0
  %463 = vmatprep.subr.mxu0 0.0
  %464 = vmatpush1.msra.mxu0 0.0
  %465 = vmatprep.subr.mxu0 0.0
  %466 = vmatpush1.msra.mxu0 0.0
  %467 = vmatprep.subr.mxu0 0.0
  %468 = vmatpush1.msra.mxu0 0.0
  %469 = vmatprep.subr.mxu0 0.0
  %470 = vmatpush1.msra.mxu0 0.0
  %471 = vmatprep.subr.mxu0 0.0
  %472 = vmatpush1.msra.mxu0 0.0
  %473 = vmatprep.subr.mxu0 0.0
  %474 = vmatpush1.msra.mxu0 0.0
  %475 = vmatprep.subr.mxu0 0.0
  %476 = vmatpush1.msra.mxu0 0.0
  %477 = vmatprep.subr.mxu0 0.0
  %478 = vmatpush1.msra.mxu0 0.0
  %479 = vmatprep.subr.mxu0 0.0
  %480 = vmatpush1.msra.mxu0 0.0
  %481 = vmatprep.subr.mxu0 0.0
  %482 = vmatpush1.msra.mxu0 %v53
  %483 = vmatprep.subr.mxu0 0.0
  %484 = vmatpush1.msra.mxu0 %v52
  %485 = vmatprep.subr.mxu0 0.0
  %486 = vmatpush1.msra.mxu0 %v51
  %487 = vmatprep.subr.mxu0 0.0
  %488 = vmatpush1.msra.mxu0 %v50
  %489 = vmatprep.subr.mxu0 0.0
  %490 = vmatpush2.msra.mxu0 0.0
  %491 = vmatprep.subr.mxu0 0.0
  %492 = vmatpush2.msra.mxu0 0.0
  %493 = vmatprep.subr.mxu0 0.0
  %494 = vmatpush2.msra.mxu0 0.0
  %495 = vmatprep.subr.mxu0 0.0
  %496 = vmatpush2.msra.mxu0 0.0
  %497 = vmatprep.subr.mxu0 0.0
  %498 = vmatpush2.msra.mxu0 0.0
  %499 = vmatprep.subr.mxu0 0.0
  %500 = vmatpush2.msra.mxu0 0.0
  %501 = vmatprep.subr.mxu0 0.0
  %502 = vmatpush2.msra.mxu0 0.0
  %503 = vmatprep.subr.mxu0 0.0
  %504 = vmatpush2.msra.mxu0 0.0
  %505 = vmatprep.subr.mxu0 0.0
  %506 = vmatpush2.msra.mxu0 0.0
  %507 = vmatprep.subr.mxu0 0.0
  %508 = vmatpush2.msra.mxu0 0.0
  %509 = vmatprep.subr.mxu0 0.0
  %510 = vmatpush2.msra.mxu0 0.0
  %511 = vmatprep.subr.mxu0 0.0
  %512 = vmatpush2.msra.mxu0 0.0
  %513 = vmatprep.subr.mxu0 0.0
  %514 = vmatpush2.msra.mxu0 0.0
  %515 = vmatprep.subr.mxu0 0.0
  %516 = vmatpush2.msra.mxu0 0.0
  %517 = vmatprep.subr.mxu0 0.0
  %518 = vmatpush2.msra.mxu0 0.0
  %519 = vmatprep.subr.mxu0 0.0
  %520 = vmatpush2.msra.mxu0 0.0
  %521 = vmatprep.mubr.f32.mxu0 0.0
  %522 = vmatmul.mubr.f32.gmra.mxu0 %v455
  %v523 = vpop.f32.mrf.mxu0
  %v524 = vadd.f32 0.0, %v523
  %v525 = vpop.f32.mrf.mxu0
  %526 = vdwg.mxu0
  %v527 = vadd.f32 %v199, %v524
  %v528 = vxor.u32 %v527, 2147483648
  %v529 = vmul.f32 %v528, 1.442695
  %v530 = vpow.pop %v529
  %v531 = vadd.f32 %v530, 1.0
  %v532 = vrcp.pop %v531
  %v533 = vmul.f32 1.0, %v532
  %v534 = vtanh.pop %v527
  %v535 = vmul.f32 %v533, %v438
  %537 = vrot.lane.b32.xlu0 %v534, 32
  %v538 = vpop.permute.xlu0 %537
  %v540 = vmul.f32 %v533, %v538
  %542 = vrot.lane.b32.xlu0 %v540, 32
  %v543 = vpop.permute.xlu0 %542
  %v545 = vadd.f32 %v535, %v543
  %v546 = vtanh.pop %v545
  %548 = vrot.lane.b32.xlu0 %v546, 32
  %v549 = vpop.permute.xlu0 %548
  %v551 = vmul.f32 %v533, %v549
  %v554 = vunpack.c.l.s4 1983009808
  %v555 = vunpack.c.0.s8 %v554
  %v556 = vlaneseq
  %v557 = vshrl.u32 %v556, 7
  %v558 = vsub.s32 %v555, %v557
  %v559 = vrot.slane %v551, %v558
  %560 = vrot.lane.b32.xlu0 %v559, 64
  %v561 = vpop.permute.xlu0 %560
  %v562 = vsel %vm103, %v561, 0
  %564 = vmatprep.subr.mxu0 0.0
  %565 = vmatpush1.msra.mxu0 0.0
  %566 = vmatprep.subr.mxu0 0.0
  %567 = vmatpush1.msra.mxu0 0.0
  %568 = vmatprep.subr.mxu0 0.0
  %569 = vmatpush1.msra.mxu0 0.0
  %570 = vmatprep.subr.mxu0 0.0
  %571 = vmatpush1.msra.mxu0 0.0
  %572 = vmatprep.subr.mxu0 0.0
  %573 = vmatpush1.msra.mxu0 0.0
  %574 = vmatprep.subr.mxu0 0.0
  %575 = vmatpush1.msra.mxu0 0.0
  %576 = vmatprep.subr.mxu0 0.0
  %577 = vmatpush1.msra.mxu0 0.0
  %578 = vmatprep.subr.mxu0 0.0
  %579 = vmatpush1.msra.mxu0 0.0
  %580 = vmatprep.subr.mxu0 0.0
  %581 = vmatpush1.msra.mxu0 0.0
  %582 = vmatprep.subr.mxu0 0.0
  %583 = vmatpush1.msra.mxu0 0.0
  %584 = vmatprep.subr.mxu0 0.0
  %585 = vmatpush1.msra.mxu0 0.0
  %586 = vmatprep.subr.mxu0 0.0
  %587 = vmatpush1.msra.mxu0 0.0
  %588 = vmatprep.subr.mxu0 0.0
  %589 = vmatpush1.msra.mxu0 %v53
  %590 = vmatprep.subr.mxu0 0.0
  %591 = vmatpush1.msra.mxu0 %v52
  %592 = vmatprep.subr.mxu0 0.0
  %593 = vmatpush1.msra.mxu0 %v51
  %594 = vmatprep.subr.mxu0 0.0
  %595 = vmatpush1.msra.mxu0 %v50
  %596 = vmatprep.subr.mxu0 0.0
  %597 = vmatpush2.msra.mxu0 0.0
  %598 = vmatprep.subr.mxu0 0.0
  %599 = vmatpush2.msra.mxu0 0.0
  %600 = vmatprep.subr.mxu0 0.0
  %601 = vmatpush2.msra.mxu0 0.0
  %602 = vmatprep.subr.mxu0 0.0
  %603 = vmatpush2.msra.mxu0 0.0
  %604 = vmatprep.subr.mxu0 0.0
  %605 = vmatpush2.msra.mxu0 0.0
  %606 = vmatprep.subr.mxu0 0.0
  %607 = vmatpush2.msra.mxu0 0.0
  %608 = vmatprep.subr.mxu0 0.0
  %609 = vmatpush2.msra.mxu0 0.0
  %610 = vmatprep.subr.mxu0 0.0
  %611 = vmatpush2.msra.mxu0 0.0
  %612 = vmatprep.subr.mxu0 0.0
  %613 = vmatpush2.msra.mxu0 0.0
  %614 = vmatprep.subr.mxu0 0.0
  %615 = vmatpush2.msra.mxu0 0.0
  %616 = vmatprep.subr.mxu0 0.0
  %617 = vmatpush2.msra.mxu0 0.0
  %618 = vmatprep.subr.mxu0 0.0
  %619 = vmatpush2.msra.mxu0 0.0
  %620 = vmatprep.subr.mxu0 0.0
  %621 = vmatpush2.msra.mxu0 0.0
  %622 = vmatprep.subr.mxu0 0.0
  %623 = vmatpush2.msra.mxu0 0.0
  %624 = vmatprep.subr.mxu0 0.0
  %625 = vmatpush2.msra.mxu0 0.0
  %626 = vmatprep.subr.mxu0 0.0
  %627 = vmatpush2.msra.mxu0 0.0
  %628 = vmatprep.mubr.f32.mxu0 0.0
  %629 = vmatmul.mubr.f32.gmra.mxu0 %v562
  %v630 = vpop.f32.mrf.mxu0
  %v631 = vadd.f32 0.0, %v630
  %v632 = vpop.f32.mrf.mxu0
  %633 = vdwg.mxu0
  %v634 = vadd.f32 %v201, %v631
  %v635 = vxor.u32 %v634, 2147483648
  %v636 = vmul.f32 %v635, 1.442695
  %v637 = vpow.pop %v636
  %v638 = vadd.f32 %v637, 1.0
  %v639 = vrcp.pop %v638
  %v640 = vmul.f32 1.0, %v639
  %v641 = vtanh.pop %v634
  %v642 = vmul.f32 %v640, %v545
  %644 = vrot.lane.b32.xlu0 %v641, 32
  %v645 = vpop.permute.xlu0 %644
  %v647 = vmul.f32 %v640, %v645
  %649 = vrot.lane.b32.xlu0 %v647, 32
  %v650 = vpop.permute.xlu0 %649
  %v652 = vadd.f32 %v642, %v650
  %v653 = vtanh.pop %v652
  %655 = vrot.lane.b32.xlu0 %v653, 32
  %v656 = vpop.permute.xlu0 %655
  %v658 = vmul.f32 %v640, %v656
  %v661 = vunpack.c.l.s4 1983009808
  %v662 = vunpack.c.0.s8 %v661
  %v663 = vlaneseq
  %v664 = vshrl.u32 %v663, 7
  %v665 = vsub.s32 %v662, %v664
  %v666 = vrot.slane %v658, %v665
  %667 = vrot.lane.b32.xlu0 %v666, 64
  %v668 = vpop.permute.xlu0 %667
  %v669 = vsel %vm103, %v668, 0
  %671 = vmatprep.subr.mxu0 0.0
  %672 = vmatpush1.msra.mxu0 0.0
  %673 = vmatprep.subr.mxu0 0.0
  %674 = vmatpush1.msra.mxu0 0.0
  %675 = vmatprep.subr.mxu0 0.0
  %676 = vmatpush1.msra.mxu0 0.0
  %677 = vmatprep.subr.mxu0 0.0
  %678 = vmatpush1.msra.mxu0 0.0
  %679 = vmatprep.subr.mxu0 0.0
  %680 = vmatpush1.msra.mxu0 0.0
  %681 = vmatprep.subr.mxu0 0.0
  %682 = vmatpush1.msra.mxu0 0.0
  %683 = vmatprep.subr.mxu0 0.0
  %684 = vmatpush1.msra.mxu0 0.0
  %685 = vmatprep.subr.mxu0 0.0
  %686 = vmatpush1.msra.mxu0 0.0
  %687 = vmatprep.subr.mxu0 0.0
  %688 = vmatpush1.msra.mxu0 0.0
  %689 = vmatprep.subr.mxu0 0.0
  %690 = vmatpush1.msra.mxu0 0.0
  %691 = vmatprep.subr.mxu0 0.0
  %692 = vmatpush1.msra.mxu0 0.0
  %693 = vmatprep.subr.mxu0 0.0
  %694 = vmatpush1.msra.mxu0 0.0
  %695 = vmatprep.subr.mxu0 0.0
  %696 = vmatpush1.msra.mxu0 %v53
  %697 = vmatprep.subr.mxu0 0.0
  %698 = vmatpush1.msra.mxu0 %v52
  %699 = vmatprep.subr.mxu0 0.0
  %700 = vmatpush1.msra.mxu0 %v51
  %701 = vmatprep.subr.mxu0 0.0
  %702 = vmatpush1.msra.mxu0 %v50
  %703 = vmatprep.subr.mxu0 0.0
  %704 = vmatpush2.msra.mxu0 0.0
  %705 = vmatprep.subr.mxu0 0.0
  %706 = vmatpush2.msra.mxu0 0.0
  %707 = vmatprep.subr.mxu0 0.0
  %708 = vmatpush2.msra.mxu0 0.0
  %709 = vmatprep.subr.mxu0 0.0
  %710 = vmatpush2.msra.mxu0 0.0
  %711 = vmatprep.subr.mxu0 0.0
  %712 = vmatpush2.msra.mxu0 0.0
  %713 = vmatprep.subr.mxu0 0.0
  %714 = vmatpush2.msra.mxu0 0.0
  %715 = vmatprep.subr.mxu0 0.0
  %716 = vmatpush2.msra.mxu0 0.0
  %717 = vmatprep.subr.mxu0 0.0
  %718 = vmatpush2.msra.mxu0 0.0
  %719 = vmatprep.subr.mxu0 0.0
  %720 = vmatpush2.msra.mxu0 0.0
  %721 = vmatprep.subr.mxu0 0.0
  %722 = vmatpush2.msra.mxu0 0.0
  %723 = vmatprep.subr.mxu0 0.0
  %724 = vmatpush2.msra.mxu0 0.0
  %725 = vmatprep.subr.mxu0 0.0
  %726 = vmatpush2.msra.mxu0 0.0
  %727 = vmatprep.subr.mxu0 0.0
  %728 = vmatpush2.msra.mxu0 0.0
  %729 = vmatprep.subr.mxu0 0.0
  %730 = vmatpush2.msra.mxu0 0.0
  %731 = vmatprep.subr.mxu0 0.0
  %732 = vmatpush2.msra.mxu0 0.0
  %733 = vmatprep.subr.mxu0 0.0
  %734 = vmatpush2.msra.mxu0 0.0
  %735 = vmatprep.mubr.f32.mxu0 0.0
  %736 = vmatmul.mubr.f32.gmra.mxu0 %v669
  %v737 = vpop.f32.mrf.mxu0
  %v738 = vadd.f32 0.0, %v737
  %v739 = vpop.f32.mrf.mxu0
  %740 = vdwg.mxu0
  %v741 = vadd.f32 %v209, %v738
  %v742 = vxor.u32 %v741, 2147483648
  %v743 = vmul.f32 %v742, 1.442695
  %v744 = vpow.pop %v743
  %v745 = vadd.f32 %v744, 1.0
  %v746 = vrcp.pop %v745
  %v747 = vmul.f32 1.0, %v746
  %v748 = vtanh.pop %v741
  %v749 = vmul.f32 %v747, %v652
  %751 = vrot.lane.b32.xlu0 %v748, 32
  %v752 = vpop.permute.xlu0 %751
  %v754 = vmul.f32 %v747, %v752
  %756 = vrot.lane.b32.xlu0 %v754, 32
  %v757 = vpop.permute.xlu0 %756
  %v759 = vadd.f32 %v749, %v757
  %v760 = vtanh.pop %v759
  %762 = vrot.lane.b32.xlu0 %v760, 32
  %v763 = vpop.permute.xlu0 %762
  %v765 = vmul.f32 %v747, %v763
  %v768 = vunpack.c.l.s4 1983009808
  %v769 = vunpack.c.0.s8 %v768
  %v770 = vlaneseq
  %v771 = vshrl.u32 %v770, 7
  %v772 = vsub.s32 %v769, %v771
  %v773 = vrot.slane %v765, %v772
  %774 = vrot.lane.b32.xlu0 %v773, 64
  %v775 = vpop.permute.xlu0 %774
  %v776 = vsel %vm103, %v775, 0
  %778 = vmatprep.subr.mxu0 0.0
  %779 = vmatpush1.msra.mxu0 0.0
  %780 = vmatprep.subr.mxu0 0.0
  %781 = vmatpush1.msra.mxu0 0.0
  %782 = vmatprep.subr.mxu0 0.0
  %783 = vmatpush1.msra.mxu0 0.0
  %784 = vmatprep.subr.mxu0 0.0
  %785 = vmatpush1.msra.mxu0 0.0
  %786 = vmatprep.subr.mxu0 0.0
  %787 = vmatpush1.msra.mxu0 0.0
  %788 = vmatprep.subr.mxu0 0.0
  %789 = vmatpush1.msra.mxu0 0.0
  %790 = vmatprep.subr.mxu0 0.0
  %791 = vmatpush1.msra.mxu0 0.0
  %792 = vmatprep.subr.mxu0 0.0
  %793 = vmatpush1.msra.mxu0 0.0
  %794 = vmatprep.subr.mxu0 0.0
  %795 = vmatpush1.msra.mxu0 0.0
  %796 = vmatprep.subr.mxu0 0.0
  %797 = vmatpush1.msra.mxu0 0.0
  %798 = vmatprep.subr.mxu0 0.0
  %799 = vmatpush1.msra.mxu0 0.0
  %800 = vmatprep.subr.mxu0 0.0
  %801 = vmatpush1.msra.mxu0 0.0
  %802 = vmatprep.subr.mxu0 0.0
  %803 = vmatpush1.msra.mxu0 %v53
  %804 = vmatprep.subr.mxu0 0.0
  %805 = vmatpush1.msra.mxu0 %v52
  %806 = vmatprep.subr.mxu0 0.0
  %807 = vmatpush1.msra.mxu0 %v51
  %808 = vmatprep.subr.mxu0 0.0
  %809 = vmatpush1.msra.mxu0 %v50
  %810 = vmatprep.subr.mxu0 0.0
  %811 = vmatpush2.msra.mxu0 0.0
  %812 = vmatprep.subr.mxu0 0.0
  %813 = vmatpush2.msra.mxu0 0.0
  %814 = vmatprep.subr.mxu0 0.0
  %815 = vmatpush2.msra.mxu0 0.0
  %816 = vmatprep.subr.mxu0 0.0
  %817 = vmatpush2.msra.mxu0 0.0
  %818 = vmatprep.subr.mxu0 0.0
  %819 = vmatpush2.msra.mxu0 0.0
  %820 = vmatprep.subr.mxu0 0.0
  %821 = vmatpush2.msra.mxu0 0.0
  %822 = vmatprep.subr.mxu0 0.0
  %823 = vmatpush2.msra.mxu0 0.0
  %824 = vmatprep.subr.mxu0 0.0
  %825 = vmatpush2.msra.mxu0 0.0
  %826 = vmatprep.subr.mxu0 0.0
  %827 = vmatpush2.msra.mxu0 0.0
  %828 = vmatprep.subr.mxu0 0.0
  %829 = vmatpush2.msra.mxu0 0.0
  %830 = vmatprep.subr.mxu0 0.0
  %831 = vmatpush2.msra.mxu0 0.0
  %832 = vmatprep.subr.mxu0 0.0
  %833 = vmatpush2.msra.mxu0 0.0
  %834 = vmatprep.subr.mxu0 0.0
  %835 = vmatpush2.msra.mxu0 0.0
  %836 = vmatprep.subr.mxu0 0.0
  %837 = vmatpush2.msra.mxu0 0.0
  %838 = vmatprep.subr.mxu0 0.0
  %839 = vmatpush2.msra.mxu0 0.0
  %840 = vmatprep.subr.mxu0 0.0
  %841 = vmatpush2.msra.mxu0 0.0
  %842 = vmatprep.mubr.f32.mxu0 0.0
  %843 = vmatmul.mubr.f32.gmra.mxu0 %v776
  %v844 = vpop.f32.mrf.mxu0
  %v845 = vadd.f32 0.0, %v844
  %v846 = vpop.f32.mrf.mxu0
  %847 = vdwg.mxu0
  %v848 = vadd.f32 %v217, %v845
  %v849 = vxor.u32 %v848, 2147483648
  %v850 = vmul.f32 %v849, 1.442695
  %v851 = vpow.pop %v850
  %v852 = vadd.f32 %v851, 1.0
  %v853 = vrcp.pop %v852
  %v854 = vmul.f32 1.0, %v853
  %v855 = vtanh.pop %v848
  %v856 = vmul.f32 %v854, %v759
  %858 = vrot.lane.b32.xlu0 %v855, 32
  %v859 = vpop.permute.xlu0 %858
  %v861 = vmul.f32 %v854, %v859
  %863 = vrot.lane.b32.xlu0 %v861, 32
  %v864 = vpop.permute.xlu0 %863
  %v866 = vadd.f32 %v856, %v864
  %v867 = vtanh.pop %v866
  %869 = vrot.lane.b32.xlu0 %v867, 32
  %v870 = vpop.permute.xlu0 %869
  %v872 = vmul.f32 %v854, %v870
  %v875 = vunpack.c.l.s4 1983009808
  %v876 = vunpack.c.0.s8 %v875
  %v877 = vlaneseq
  %v878 = vshrl.u32 %v877, 7
  %v879 = vsub.s32 %v876, %v878
  %v880 = vrot.slane %v872, %v879
  %881 = vrot.lane.b32.xlu0 %v880, 64
  %v882 = vpop.permute.xlu0 %881
  %v883 = vsel %vm103, %v882, 0
  %885 = vmatprep.subr.mxu0 0.0
  %886 = vmatpush1.msra.mxu0 0.0
  %887 = vmatprep.subr.mxu0 0.0
  %888 = vmatpush1.msra.mxu0 0.0
  %889 = vmatprep.subr.mxu0 0.0
  %890 = vmatpush1.msra.mxu0 0.0
  %891 = vmatprep.subr.mxu0 0.0
  %892 = vmatpush1.msra.mxu0 0.0
  %893 = vmatprep.subr.mxu0 0.0
  %894 = vmatpush1.msra.mxu0 0.0
  %895 = vmatprep.subr.mxu0 0.0
  %896 = vmatpush1.msra.mxu0 0.0
  %897 = vmatprep.subr.mxu0 0.0
  %898 = vmatpush1.msra.mxu0 0.0
  %899 = vmatprep.subr.mxu0 0.0
  %900 = vmatpush1.msra.mxu0 0.0
  %901 = vmatprep.subr.mxu0 0.0
  %902 = vmatpush1.msra.mxu0 0.0
  %903 = vmatprep.subr.mxu0 0.0
  %904 = vmatpush1.msra.mxu0 0.0
  %905 = vmatprep.subr.mxu0 0.0
  %906 = vmatpush1.msra.mxu0 0.0
  %907 = vmatprep.subr.mxu0 0.0
  %908 = vmatpush1.msra.mxu0 0.0
  %909 = vmatprep.subr.mxu0 0.0
  %910 = vmatpush1.msra.mxu0 %v53
  %911 = vmatprep.subr.mxu0 0.0
  %912 = vmatpush1.msra.mxu0 %v52
  %913 = vmatprep.subr.mxu0 0.0
  %914 = vmatpush1.msra.mxu0 %v51
  %915 = vmatprep.subr.mxu0 0.0
  %916 = vmatpush1.msra.mxu0 %v50
  %917 = vmatprep.subr.mxu0 0.0
  %918 = vmatpush2.msra.mxu0 0.0
  %919 = vmatprep.subr.mxu0 0.0
  %920 = vmatpush2.msra.mxu0 0.0
  %921 = vmatprep.subr.mxu0 0.0
  %922 = vmatpush2.msra.mxu0 0.0
  %923 = vmatprep.subr.mxu0 0.0
  %924 = vmatpush2.msra.mxu0 0.0
  %925 = vmatprep.subr.mxu0 0.0
  %926 = vmatpush2.msra.mxu0 0.0
  %927 = vmatprep.subr.mxu0 0.0
  %928 = vmatpush2.msra.mxu0 0.0
  %929 = vmatprep.subr.mxu0 0.0
  %930 = vmatpush2.msra.mxu0 0.0
  %931 = vmatprep.subr.mxu0 0.0
  %932 = vmatpush2.msra.mxu0 0.0
  %933 = vmatprep.subr.mxu0 0.0
  %934 = vmatpush2.msra.mxu0 0.0
  %935 = vmatprep.subr.mxu0 0.0
  %936 = vmatpush2.msra.mxu0 0.0
  %937 = vmatprep.subr.mxu0 0.0
  %938 = vmatpush2.msra.mxu0 0.0
  %939 = vmatprep.subr.mxu0 0.0
  %940 = vmatpush2.msra.mxu0 0.0
  %941 = vmatprep.subr.mxu0 0.0
  %942 = vmatpush2.msra.mxu0 0.0
  %943 = vmatprep.subr.mxu0 0.0
  %944 = vmatpush2.msra.mxu0 0.0
  %945 = vmatprep.subr.mxu0 0.0
  %946 = vmatpush2.msra.mxu0 0.0
  %947 = vmatprep.subr.mxu0 0.0
  %948 = vmatpush2.msra.mxu0 0.0
  %949 = vmatprep.mubr.f32.mxu0 0.0
  %950 = vmatmul.mubr.f32.gmra.mxu0 %v883
  %v951 = vpop.f32.mrf.mxu0
  %v952 = vadd.f32 0.0, %v951
  %v953 = vpop.f32.mrf.mxu0
  %954 = vdwg.mxu0
  %v955 = vadd.f32 %v216, %v952
  %v956 = vxor.u32 %v955, 2147483648
  %v957 = vmul.f32 %v956, 1.442695
  %v958 = vpow.pop %v957
  %v959 = vadd.f32 %v958, 1.0
  %v960 = vrcp.pop %v959
  %v961 = vmul.f32 1.0, %v960
  %v962 = vtanh.pop %v955
  %v963 = vmul.f32 %v961, %v866
  %965 = vrot.lane.b32.xlu0 %v962, 32
  %v966 = vpop.permute.xlu0 %965
  %v968 = vmul.f32 %v961, %v966
  %970 = vrot.lane.b32.xlu0 %v968, 32
  %v971 = vpop.permute.xlu0 %970
  %v973 = vadd.f32 %v963, %v971
  %v974 = vtanh.pop %v973
  %976 = vrot.lane.b32.xlu0 %v974, 32
  %v977 = vpop.permute.xlu0 %976
  %v979 = vmul.f32 %v961, %v977
  %v982 = vunpack.c.l.s4 1983009808
  %v983 = vunpack.c.0.s8 %v982
  %v984 = vlaneseq
  %v985 = vshrl.u32 %v984, 7
  %v986 = vsub.s32 %v983, %v985
  %v987 = vrot.slane %v979, %v986
  %988 = vrot.lane.b32.xlu0 %v987, 64
  %v989 = vpop.permute.xlu0 %988
  %v990 = vsel %vm103, %v989, 0
  %992 = vmatprep.subr.mxu0 0.0
  %993 = vmatpush1.msra.mxu0 0.0
  %994 = vmatprep.subr.mxu0 0.0
  %995 = vmatpush1.msra.mxu0 0.0
  %996 = vmatprep.subr.mxu0 0.0
  %997 = vmatpush1.msra.mxu0 0.0
  %998 = vmatprep.subr.mxu0 0.0
  %999 = vmatpush1.msra.mxu0 0.0
  %1000 = vmatprep.subr.mxu0 0.0
  %1001 = vmatpush1.msra.mxu0 0.0
  %1002 = vmatprep.subr.mxu0 0.0
  %1003 = vmatpush1.msra.mxu0 0.0
  %1004 = vmatprep.subr.mxu0 0.0
  %1005 = vmatpush1.msra.mxu0 0.0
  %1006 = vmatprep.subr.mxu0 0.0
  %1007 = vmatpush1.msra.mxu0 0.0
  %1008 = vmatprep.subr.mxu0 0.0
  %1009 = vmatpush1.msra.mxu0 0.0
  %1010 = vmatprep.subr.mxu0 0.0
  %1011 = vmatpush1.msra.mxu0 0.0
  %1012 = vmatprep.subr.mxu0 0.0
  %1013 = vmatpush1.msra.mxu0 0.0
  %1014 = vmatprep.subr.mxu0 0.0
  %1015 = vmatpush1.msra.mxu0 0.0
  %1016 = vmatprep.subr.mxu0 0.0
  %1017 = vmatpush1.msra.mxu0 %v53
  %1018 = vmatprep.subr.mxu0 0.0
  %1019 = vmatpush1.msra.mxu0 %v52
  %1020 = vmatprep.subr.mxu0 0.0
  %1021 = vmatpush1.msra.mxu0 %v51
  %1022 = vmatprep.subr.mxu0 0.0
  %1023 = vmatpush1.msra.mxu0 %v50
  %1024 = vmatprep.subr.mxu0 0.0
  %1025 = vmatpush2.msra.mxu0 0.0
  %1026 = vmatprep.subr.mxu0 0.0
  %1027 = vmatpush2.msra.mxu0 0.0
  %1028 = vmatprep.subr.mxu0 0.0
  %1029 = vmatpush2.msra.mxu0 0.0
  %1030 = vmatprep.subr.mxu0 0.0
  %1031 = vmatpush2.msra.mxu0 0.0
  %1032 = vmatprep.subr.mxu0 0.0
  %1033 = vmatpush2.msra.mxu0 0.0
  %1034 = vmatprep.subr.mxu0 0.0
  %1035 = vmatpush2.msra.mxu0 0.0
  %1036 = vmatprep.subr.mxu0 0.0
  %1037 = vmatpush2.msra.mxu0 0.0
  %1038 = vmatprep.subr.mxu0 0.0
  %1039 = vmatpush2.msra.mxu0 0.0
  %1040 = vmatprep.subr.mxu0 0.0
  %1041 = vmatpush2.msra.mxu0 0.0
  %1042 = vmatprep.subr.mxu0 0.0
  %1043 = vmatpush2.msra.mxu0 0.0
  %1044 = vmatprep.subr.mxu0 0.0
  %1045 = vmatpush2.msra.mxu0 0.0
  %1046 = vmatprep.subr.mxu0 0.0
  %1047 = vmatpush2.msra.mxu0 0.0
  %1048 = vmatprep.subr.mxu0 0.0
  %1049 = vmatpush2.msra.mxu0 0.0
  %1050 = vmatprep.subr.mxu0 0.0
  %1051 = vmatpush2.msra.mxu0 0.0
  %1052 = vmatprep.subr.mxu0 0.0
  %1053 = vmatpush2.msra.mxu0 0.0
  %1054 = vmatprep.subr.mxu0 0.0
  %1055 = vmatpush2.msra.mxu0 0.0
  %1056 = vmatprep.mubr.f32.mxu0 0.0
  %1057 = vmatmul.mubr.f32.gmra.mxu0 %v990
  %v1058 = vpop.f32.mrf.mxu0
  %v1059 = vadd.f32 0.0, %v1058
  %v1060 = vpop.f32.mrf.mxu0
  %1061 = vdwg.mxu0
  %v1062 = vadd.f32 %v218, %v1059
  %v1063 = vxor.u32 %v1062, 2147483648
  %v1064 = vmul.f32 %v1063, 1.442695
  %v1065 = vpow.pop %v1064
  %v1066 = vadd.f32 %v1065, 1.0
  %v1067 = vrcp.pop %v1066
  %v1068 = vmul.f32 1.0, %v1067
  %v1069 = vtanh.pop %v1062
  %v1070 = vmul.f32 %v1068, %v973
  %1072 = vrot.lane.b32.xlu0 %v1069, 32
  %v1073 = vpop.permute.xlu0 %1072
  %v1075 = vmul.f32 %v1068, %v1073
  %1077 = vrot.lane.b32.xlu0 %v1075, 32
  %v1078 = vpop.permute.xlu0 %1077
  %v1080 = vadd.f32 %v1070, %v1078
  %v1081 = vtanh.pop %v1080
  %1083 = vrot.lane.b32.xlu0 %v1081, 32
  %v1084 = vpop.permute.xlu0 %1083
  %v1086 = vmul.f32 %v1068, %v1084
  %v1087 = vld [vmem:[%s4] sm:$0xff]
  %v1088 = vld [vmem:[%s4 + $0x8] sm:$0xff]
  %v1089 = vld [vmem:[%s4 + $0x10] sm:$0xff]
  %v1090 = vld [vmem:[%s4 + $0x18] sm:$0xff]
  %v1091 = vld [vmem:[%s5] sm:$0xff]
  %v1092 = vld [vmem:[%s5 + $0x8] sm:$0xff]
  %v1093 = vld [vmem:[%s5 + $0x10] sm:$0xff]
  %v1094 = vld [vmem:[%s5 + $0x18] sm:$0xff]
  %v1095 = vld [vmem:[%s6] sm:$0x1]
  %v1097 = vlaneseq
  %v1098 = vshrl.u32 %v1097, 7
  %v1099 = vsub.s32 0, %v1098
  %v1100 = vrot.slane %v1095, %v1099
  %v1103 = vcombine.low %v337, %v444
  %v1104 = vcombine.low %v551, %v658
  %v1106 = vunpack.c.l.s4 1983009808
  %v1107 = vunpack.c.0.s8 %v1106
  %v1108 = vlaneseq
  %v1109 = vshrl.u32 %v1108, 7
  %v1110 = vsub.s32 %v1107, %v1109
  %v1111 = vrot.slane %v1103, %v1110
  %v1113 = vunpack.c.l.s4 1983009808
  %v1114 = vunpack.c.0.s8 %v1113
  %v1115 = vlaneseq
  %v1116 = vshrl.u32 %v1115, 7
  %v1117 = vsub.s32 %v1114, %v1116
  %v1118 = vrot.slane %v1104, %v1117
  %v1119 = vcombine.low %v1111, %v1118
  %v1120 = vcombine.low %v765, %v872
  %v1121 = vcombine.low %v979, %v1086
  %v1123 = vunpack.c.l.s4 1983009808
  %v1124 = vunpack.c.0.s8 %v1123
  %v1125 = vlaneseq
  %v1126 = vshrl.u32 %v1125, 7
  %v1127 = vsub.s32 %v1124, %v1126
  %v1128 = vrot.slane %v1120, %v1127
  %v1130 = vunpack.c.l.s4 1983009808
  %v1131 = vunpack.c.0.s8 %v1130
  %v1132 = vlaneseq
  %v1133 = vshrl.u32 %v1132, 7
  %v1134 = vsub.s32 %v1131, %v1133
  %v1135 = vrot.slane %v1121, %v1134
  %v1136 = vcombine.low %v1128, %v1135
  %1137 = vrot.lane.b32.xlu0 %v1119, 64
  %v1138 = vpop.permute.xlu0 %1137
  %1139 = vrot.lane.b32.xlu0 %v1136, 64
  %v1140 = vpop.permute.xlu0 %1139
  %v1141 = vsel %vm103, %v1138, 0
  %v1143 = vsel %vm103, %v1140, 0
  %1145 = vmatprep.subr.mxu0 0.0
  %1146 = vmatpush1.msra.mxu0 0.0
  %1147 = vmatprep.subr.mxu0 0.0
  %1148 = vmatpush1.msra.mxu0 0.0
  %1149 = vmatprep.subr.mxu0 0.0
  %1150 = vmatpush1.msra.mxu0 0.0
  %1151 = vmatprep.subr.mxu0 0.0
  %1152 = vmatpush1.msra.mxu0 0.0
  %1153 = vmatprep.subr.mxu0 0.0
  %1154 = vmatpush1.msra.mxu0 0.0
  %1155 = vmatprep.subr.mxu0 0.0
  %1156 = vmatpush1.msra.mxu0 0.0
  %1157 = vmatprep.subr.mxu0 0.0
  %1158 = vmatpush1.msra.mxu0 0.0
  %1159 = vmatprep.subr.mxu0 0.0
  %1160 = vmatpush1.msra.mxu0 0.0
  %1161 = vmatprep.subr.mxu0 0.0
  %1162 = vmatpush1.msra.mxu0 0.0
  %1163 = vmatprep.subr.mxu0 0.0
  %1164 = vmatpush1.msra.mxu0 0.0
  %1165 = vmatprep.subr.mxu0 0.0
  %1166 = vmatpush1.msra.mxu0 0.0
  %1167 = vmatprep.subr.mxu0 0.0
  %1168 = vmatpush1.msra.mxu0 0.0
  %1169 = vmatprep.subr.mxu0 0.0
  %1170 = vmatpush1.msra.mxu0 %v1090
  %1171 = vmatprep.subr.mxu0 0.0
  %1172 = vmatpush1.msra.mxu0 %v1089
  %1173 = vmatprep.subr.mxu0 0.0
  %1174 = vmatpush1.msra.mxu0 %v1088
  %1175 = vmatprep.subr.mxu0 0.0
  %1176 = vmatpush1.msra.mxu0 %v1087
  %1177 = vmatprep.subr.mxu0 0.0
  %1178 = vmatpush2.msra.mxu0 0.0
  %1179 = vmatprep.subr.mxu0 0.0
  %1180 = vmatpush2.msra.mxu0 0.0
  %1181 = vmatprep.subr.mxu0 0.0
  %1182 = vmatpush2.msra.mxu0 0.0
  %1183 = vmatprep.subr.mxu0 0.0
  %1184 = vmatpush2.msra.mxu0 0.0
  %1185 = vmatprep.subr.mxu0 0.0
  %1186 = vmatpush2.msra.mxu0 0.0
  %1187 = vmatprep.subr.mxu0 0.0
  %1188 = vmatpush2.msra.mxu0 0.0
  %1189 = vmatprep.subr.mxu0 0.0
  %1190 = vmatpush2.msra.mxu0 0.0
  %1191 = vmatprep.subr.mxu0 0.0
  %1192 = vmatpush2.msra.mxu0 0.0
  %1193 = vmatprep.subr.mxu0 0.0
  %1194 = vmatpush2.msra.mxu0 0.0
  %1195 = vmatprep.subr.mxu0 0.0
  %1196 = vmatpush2.msra.mxu0 0.0
  %1197 = vmatprep.subr.mxu0 0.0
  %1198 = vmatpush2.msra.mxu0 0.0
  %1199 = vmatprep.subr.mxu0 0.0
  %1200 = vmatpush2.msra.mxu0 0.0
  %1201 = vmatprep.subr.mxu0 0.0
  %1202 = vmatpush2.msra.mxu0 0.0
  %1203 = vmatprep.subr.mxu0 0.0
  %1204 = vmatpush2.msra.mxu0 0.0
  %1205 = vmatprep.subr.mxu0 0.0
  %1206 = vmatpush2.msra.mxu0 0.0
  %1207 = vmatprep.subr.mxu0 0.0
  %1208 = vmatpush2.msra.mxu0 0.0
  %1209 = vmatprep.mubr.f32.mxu0 0.0
  %1210 = vmatmul.mubr.f32.gmra.mxu0 %v1141
  %v1211 = vpop.f32.mrf.mxu0
  %v1212 = vadd.f32 %v1100, %v1211
  %v1213 = vpop.f32.mrf.mxu0
  %1214 = vmatprep.mubr.f32.mxu0 0.0
  %1215 = vmatmul.mubr.f32.gmra.mxu0 %v1143
  %v1216 = vpop.f32.mrf.mxu0
  %v1217 = vadd.f32 %v1100, %v1216
  %v1218 = vpop.f32.mrf.mxu0
  %1219 = vdwg.mxu0
  %v1222 = vcombine.high %v1212, %v1212
  %v1224 = vunpack.c.l.s4 1983009808
  %v1225 = vunpack.c.0.s8 %v1224
  %v1226 = vlaneseq
  %v1227 = vshrl.u32 %v1226, 7
  %v1228 = vsub.s32 %v1225, %v1227
  %v1229 = vrot.slane %v1212, %v1228
  %v1231 = vunpack.c.l.s4 1983009808
  %v1232 = vunpack.c.0.s8 %v1231
  %v1233 = vlaneseq
  %v1234 = vshrl.u32 %v1233, 7
  %v1235 = vsub.s32 %v1232, %v1234
  %v1236 = vrot.slane %v1222, %v1235
  %v1237 = vcombine.high %v1229, %v1229
  %v1238 = vcombine.high %v1236, %v1236
  %v1239 = vcombine.high %v1217, %v1217
  %v1241 = vunpack.c.l.s4 1983009808
  %v1242 = vunpack.c.0.s8 %v1241
  %v1243 = vlaneseq
  %v1244 = vshrl.u32 %v1243, 7
  %v1245 = vsub.s32 %v1242, %v1244
  %v1246 = vrot.slane %v1217, %v1245
  %v1248 = vunpack.c.l.s4 1983009808
  %v1249 = vunpack.c.0.s8 %v1248
  %v1250 = vlaneseq
  %v1251 = vshrl.u32 %v1250, 7
  %v1252 = vsub.s32 %v1249, %v1251
  %v1253 = vrot.slane %v1239, %v1252
  %v1254 = vcombine.high %v1246, %v1246
  %v1255 = vcombine.high %v1253, %v1253
  %s1264 = scalar_lea.vmem %s7, 2
  %v1265 = vld [vmem:[%s1264] sm:$0x3]
  %s1266 = scalar_lea.vmem %s8, 2
  %v1267 = vld [vmem:[%s1266] sm:$0x3]
  %v1269 = vsel %vm103, %v1265, 0
  %1271 = vmatprep.subr.mxu0 0.0
  %1272 = vmatpush1.msra.mxu0 0.0
  %1273 = vmatprep.subr.mxu0 0.0
  %1274 = vmatpush1.msra.mxu0 0.0
  %1275 = vmatprep.subr.mxu0 0.0
  %1276 = vmatpush1.msra.mxu0 0.0
  %1277 = vmatprep.subr.mxu0 0.0
  %1278 = vmatpush1.msra.mxu0 0.0
  %1279 = vmatprep.subr.mxu0 0.0
  %1280 = vmatpush1.msra.mxu0 0.0
  %1281 = vmatprep.subr.mxu0 0.0
  %1282 = vmatpush1.msra.mxu0 0.0
  %1283 = vmatprep.subr.mxu0 0.0
  %1284 = vmatpush1.msra.mxu0 0.0
  %1285 = vmatprep.subr.mxu0 0.0
  %1286 = vmatpush1.msra.mxu0 0.0
  %1287 = vmatprep.subr.mxu0 0.0
  %1288 = vmatpush1.msra.mxu0 0.0
  %1289 = vmatprep.subr.mxu0 0.0
  %1290 = vmatpush1.msra.mxu0 0.0
  %1291 = vmatprep.subr.mxu0 0.0
  %1292 = vmatpush1.msra.mxu0 0.0
  %1293 = vmatprep.subr.mxu0 0.0
  %1294 = vmatpush1.msra.mxu0 0.0
  %1295 = vmatprep.subr.mxu0 0.0
  %1296 = vmatpush1.msra.mxu0 %v1094
  %1297 = vmatprep.subr.mxu0 0.0
  %1298 = vmatpush1.msra.mxu0 %v1093
  %1299 = vmatprep.subr.mxu0 0.0
  %1300 = vmatpush1.msra.mxu0 %v1092
  %1301 = vmatprep.subr.mxu0 0.0
  %1302 = vmatpush1.msra.mxu0 %v1091
  %1303 = vmatprep.subr.mxu0 0.0
  %1304 = vmatpush2.msra.mxu0 0.0
  %1305 = vmatprep.subr.mxu0 0.0
  %1306 = vmatpush2.msra.mxu0 0.0
  %1307 = vmatprep.subr.mxu0 0.0
  %1308 = vmatpush2.msra.mxu0 0.0
  %1309 = vmatprep.subr.mxu0 0.0
  %1310 = vmatpush2.msra.mxu0 0.0
  %1311 = vmatprep.subr.mxu0 0.0
  %1312 = vmatpush2.msra.mxu0 0.0
  %1313 = vmatprep.subr.mxu0 0.0
  %1314 = vmatpush2.msra.mxu0 0.0
  %1315 = vmatprep.subr.mxu0 0.0
  %1316 = vmatpush2.msra.mxu0 0.0
  %1317 = vmatprep.subr.mxu0 0.0
  %1318 = vmatpush2.msra.mxu0 0.0
  %1319 = vmatprep.subr.mxu0 0.0
  %1320 = vmatpush2.msra.mxu0 0.0
  %1321 = vmatprep.subr.mxu0 0.0
  %1322 = vmatpush2.msra.mxu0 0.0
  %1323 = vmatprep.subr.mxu0 0.0
  %1324 = vmatpush2.msra.mxu0 0.0
  %1325 = vmatprep.subr.mxu0 0.0
  %1326 = vmatpush2.msra.mxu0 0.0
  %1327 = vmatprep.subr.mxu0 0.0
  %1328 = vmatpush2.msra.mxu0 0.0
  %1329 = vmatprep.subr.mxu0 0.0
  %1330 = vmatpush2.msra.mxu0 0.0
  %1331 = vmatprep.subr.mxu0 0.0
  %1332 = vmatpush2.msra.mxu0 0.0
  %1333 = vmatprep.subr.mxu0 0.0
  %1334 = vmatpush2.msra.mxu0 0.0
  %1335 = vmatprep.mubr.f32.mxu0 0.0
  %1336 = vmatmul.mubr.f32.gmra.mxu0 %v1269
  %v1337 = vpop.f32.mrf.mxu0
  %v1338 = vadd.f32 0.0, %v1337
  %v1339 = vpop.f32.mrf.mxu0
  %1340 = vdwg.mxu0
  %v1341 = vadd.f32 %v1229, %v1338
  %v1342 = vxor.u32 %v1341, 2147483648
  %v1343 = vmul.f32 %v1342, 1.442695
  %v1344 = vpow.pop %v1343
  %v1345 = vadd.f32 %v1344, 1.0
  %v1346 = vrcp.pop %v1345
  %v1347 = vmul.f32 1.0, %v1346
  %v1348 = vtanh.pop %v1341
  %v1351 = vunpack.c.l.s4 1983009808
  %v1352 = vunpack.c.0.s8 %v1351
  %v1353 = vlaneseq
  %v1354 = vshrl.u32 %v1353, 7
  %v1355 = vsub.s32 %v1352, %v1354
  %v1356 = vrot.slane %v1267, %v1355
  %1357 = vrot.lane.b32.xlu0 %v1356, 32
  %v1358 = vpop.permute.xlu0 %1357
  %v1360 = vmul.f32 %v1347, %v1358
  %1362 = vrot.lane.b32.xlu0 %v1348, 32
  %v1363 = vpop.permute.xlu0 %1362
  %v1365 = vmul.f32 %v1347, %v1363
  %1367 = vrot.lane.b32.xlu0 %v1365, 32
  %v1368 = vpop.permute.xlu0 %1367
  %v1370 = vadd.f32 %v1360, %v1368
  %v1371 = vtanh.pop %v1370
  %1373 = vrot.lane.b32.xlu0 %v1371, 32
  %v1374 = vpop.permute.xlu0 %1373
  %v1376 = vmul.f32 %v1347, %v1374
  %v1379 = vunpack.c.l.s4 1983009808
  %v1380 = vunpack.c.0.s8 %v1379
  %v1381 = vlaneseq
  %v1382 = vshrl.u32 %v1381, 7
  %v1383 = vsub.s32 %v1380, %v1382
  %v1384 = vrot.slane %v1376, %v1383
  %1385 = vrot.lane.b32.xlu0 %v1384, 64
  %v1386 = vpop.permute.xlu0 %1385
  %v1387 = vsel %vm103, %v1386, 0
  %1389 = vmatprep.subr.mxu0 0.0
  %1390 = vmatpush1.msra.mxu0 0.0
  %1391 = vmatprep.subr.mxu0 0.0
  %1392 = vmatpush1.msra.mxu0 0.0
  %1393 = vmatprep.subr.mxu0 0.0
  %1394 = vmatpush1.msra.mxu0 0.0
  %1395 = vmatprep.subr.mxu0 0.0
  %1396 = vmatpush1.msra.mxu0 0.0
  %1397 = vmatprep.subr.mxu0 0.0
  %1398 = vmatpush1.msra.mxu0 0.0
  %1399 = vmatprep.subr.mxu0 0.0
  %1400 = vmatpush1.msra.mxu0 0.0
  %1401 = vmatprep.subr.mxu0 0.0
  %1402 = vmatpush1.msra.mxu0 0.0
  %1403 = vmatprep.subr.mxu0 0.0
  %1404 = vmatpush1.msra.mxu0 0.0
  %1405 = vmatprep.subr.mxu0 0.0
  %1406 = vmatpush1.msra.mxu0 0.0
  %1407 = vmatprep.subr.mxu0 0.0
  %1408 = vmatpush1.msra.mxu0 0.0
  %1409 = vmatprep.subr.mxu0 0.0
  %1410 = vmatpush1.msra.mxu0 0.0
  %1411 = vmatprep.subr.mxu0 0.0
  %1412 = vmatpush1.msra.mxu0 0.0
  %1413 = vmatprep.subr.mxu0 0.0
  %1414 = vmatpush1.msra.mxu0 %v1094
  %1415 = vmatprep.subr.mxu0 0.0
  %1416 = vmatpush1.msra.mxu0 %v1093
  %1417 = vmatprep.subr.mxu0 0.0
  %1418 = vmatpush1.msra.mxu0 %v1092
  %1419 = vmatprep.subr.mxu0 0.0
  %1420 = vmatpush1.msra.mxu0 %v1091
  %1421 = vmatprep.subr.mxu0 0.0
  %1422 = vmatpush2.msra.mxu0 0.0
  %1423 = vmatprep.subr.mxu0 0.0
  %1424 = vmatpush2.msra.mxu0 0.0
  %1425 = vmatprep.subr.mxu0 0.0
  %1426 = vmatpush2.msra.mxu0 0.0
  %1427 = vmatprep.subr.mxu0 0.0
  %1428 = vmatpush2.msra.mxu0 0.0
  %1429 = vmatprep.subr.mxu0 0.0
  %1430 = vmatpush2.msra.mxu0 0.0
  %1431 = vmatprep.subr.mxu0 0.0
  %1432 = vmatpush2.msra.mxu0 0.0
  %1433 = vmatprep.subr.mxu0 0.0
  %1434 = vmatpush2.msra.mxu0 0.0
  %1435 = vmatprep.subr.mxu0 0.0
  %1436 = vmatpush2.msra.mxu0 0.0
  %1437 = vmatprep.subr.mxu0 0.0
  %1438 = vmatpush2.msra.mxu0 0.0
  %1439 = vmatprep.subr.mxu0 0.0
  %1440 = vmatpush2.msra.mxu0 0.0
  %1441 = vmatprep.subr.mxu0 0.0
  %1442 = vmatpush2.msra.mxu0 0.0
  %1443 = vmatprep.subr.mxu0 0.0
  %1444 = vmatpush2.msra.mxu0 0.0
  %1445 = vmatprep.subr.mxu0 0.0
  %1446 = vmatpush2.msra.mxu0 0.0
  %1447 = vmatprep.subr.mxu0 0.0
  %1448 = vmatpush2.msra.mxu0 0.0
  %1449 = vmatprep.subr.mxu0 0.0
  %1450 = vmatpush2.msra.mxu0 0.0
  %1451 = vmatprep.subr.mxu0 0.0
  %1452 = vmatpush2.msra.mxu0 0.0
  %1453 = vmatprep.mubr.f32.mxu0 0.0
  %1454 = vmatmul.mubr.f32.gmra.mxu0 %v1387
  %v1455 = vpop.f32.mrf.mxu0
  %v1456 = vadd.f32 0.0, %v1455
  %v1457 = vpop.f32.mrf.mxu0
  %1458 = vdwg.mxu0
  %v1459 = vadd.f32 %v1237, %v1456
  %v1460 = vxor.u32 %v1459, 2147483648
  %v1461 = vmul.f32 %v1460, 1.442695
  %v1462 = vpow.pop %v1461
  %v1463 = vadd.f32 %v1462, 1.0
  %v1464 = vrcp.pop %v1463
  %v1465 = vmul.f32 1.0, %v1464
  %v1466 = vtanh.pop %v1459
  %v1467 = vmul.f32 %v1465, %v1370
  %1469 = vrot.lane.b32.xlu0 %v1466, 32
  %v1470 = vpop.permute.xlu0 %1469
  %v1472 = vmul.f32 %v1465, %v1470
  %1474 = vrot.lane.b32.xlu0 %v1472, 32
  %v1475 = vpop.permute.xlu0 %1474
  %v1477 = vadd.f32 %v1467, %v1475
  %v1478 = vtanh.pop %v1477
  %1480 = vrot.lane.b32.xlu0 %v1478, 32
  %v1481 = vpop.permute.xlu0 %1480
  %v1483 = vmul.f32 %v1465, %v1481
  %v1486 = vunpack.c.l.s4 1983009808
  %v1487 = vunpack.c.0.s8 %v1486
  %v1488 = vlaneseq
  %v1489 = vshrl.u32 %v1488, 7
  %v1490 = vsub.s32 %v1487, %v1489
  %v1491 = vrot.slane %v1483, %v1490
  %1492 = vrot.lane.b32.xlu0 %v1491, 64
  %v1493 = vpop.permute.xlu0 %1492
  %v1494 = vsel %vm103, %v1493, 0
  %1496 = vmatprep.subr.mxu0 0.0
  %1497 = vmatpush1.msra.mxu0 0.0
  %1498 = vmatprep.subr.mxu0 0.0
  %1499 = vmatpush1.msra.mxu0 0.0
  %1500 = vmatprep.subr.mxu0 0.0
  %1501 = vmatpush1.msra.mxu0 0.0
  %1502 = vmatprep.subr.mxu0 0.0
  %1503 = vmatpush1.msra.mxu0 0.0
  %1504 = vmatprep.subr.mxu0 0.0
  %1505 = vmatpush1.msra.mxu0 0.0
  %1506 = vmatprep.subr.mxu0 0.0
  %1507 = vmatpush1.msra.mxu0 0.0
  %1508 = vmatprep.subr.mxu0 0.0
  %1509 = vmatpush1.msra.mxu0 0.0
  %1510 = vmatprep.subr.mxu0 0.0
  %1511 = vmatpush1.msra.mxu0 0.0
  %1512 = vmatprep.subr.mxu0 0.0
  %1513 = vmatpush1.msra.mxu0 0.0
  %1514 = vmatprep.subr.mxu0 0.0
  %1515 = vmatpush1.msra.mxu0 0.0
  %1516 = vmatprep.subr.mxu0 0.0
  %1517 = vmatpush1.msra.mxu0 0.0
  %1518 = vmatprep.subr.mxu0 0.0
  %1519 = vmatpush1.msra.mxu0 0.0
  %1520 = vmatprep.subr.mxu0 0.0
  %1521 = vmatpush1.msra.mxu0 %v1094
  %1522 = vmatprep.subr.mxu0 0.0
  %1523 = vmatpush1.msra.mxu0 %v1093
  %1524 = vmatprep.subr.mxu0 0.0
  %1525 = vmatpush1.msra.mxu0 %v1092
  %1526 = vmatprep.subr.mxu0 0.0
  %1527 = vmatpush1.msra.mxu0 %v1091
  %1528 = vmatprep.subr.mxu0 0.0
  %1529 = vmatpush2.msra.mxu0 0.0
  %1530 = vmatprep.subr.mxu0 0.0
  %1531 = vmatpush2.msra.mxu0 0.0
  %1532 = vmatprep.subr.mxu0 0.0
  %1533 = vmatpush2.msra.mxu0 0.0
  %1534 = vmatprep.subr.mxu0 0.0
  %1535 = vmatpush2.msra.mxu0 0.0
  %1536 = vmatprep.subr.mxu0 0.0
  %1537 = vmatpush2.msra.mxu0 0.0
  %1538 = vmatprep.subr.mxu0 0.0
  %1539 = vmatpush2.msra.mxu0 0.0
  %1540 = vmatprep.subr.mxu0 0.0
  %1541 = vmatpush2.msra.mxu0 0.0
  %1542 = vmatprep.subr.mxu0 0.0
  %1543 = vmatpush2.msra.mxu0 0.0
  %1544 = vmatprep.subr.mxu0 0.0
  %1545 = vmatpush2.msra.mxu0 0.0
  %1546 = vmatprep.subr.mxu0 0.0
  %1547 = vmatpush2.msra.mxu0 0.0
  %1548 = vmatprep.subr.mxu0 0.0
  %1549 = vmatpush2.msra.mxu0 0.0
  %1550 = vmatprep.subr.mxu0 0.0
  %1551 = vmatpush2.msra.mxu0 0.0
  %1552 = vmatprep.subr.mxu0 0.0
  %1553 = vmatpush2.msra.mxu0 0.0
  %1554 = vmatprep.subr.mxu0 0.0
  %1555 = vmatpush2.msra.mxu0 0.0
  %1556 = vmatprep.subr.mxu0 0.0
  %1557 = vmatpush2.msra.mxu0 0.0
  %1558 = vmatprep.subr.mxu0 0.0
  %1559 = vmatpush2.msra.mxu0 0.0
  %1560 = vmatprep.mubr.f32.mxu0 0.0
  %1561 = vmatmul.mubr.f32.gmra.mxu0 %v1494
  %v1562 = vpop.f32.mrf.mxu0
  %v1563 = vadd.f32 0.0, %v1562
  %v1564 = vpop.f32.mrf.mxu0
  %1565 = vdwg.mxu0
  %v1566 = vadd.f32 %v1236, %v1563
  %v1567 = vxor.u32 %v1566, 2147483648
  %v1568 = vmul.f32 %v1567, 1.442695
  %v1569 = vpow.pop %v1568
  %v1570 = vadd.f32 %v1569, 1.0
  %v1571 = vrcp.pop %v1570
  %v1572 = vmul.f32 1.0, %v1571
  %v1573 = vtanh.pop %v1566
  %v1574 = vmul.f32 %v1572, %v1477
  %1576 = vrot.lane.b32.xlu0 %v1573, 32
  %v1577 = vpop.permute.xlu0 %1576
  %v1579 = vmul.f32 %v1572, %v1577
  %1581 = vrot.lane.b32.xlu0 %v1579, 32
  %v1582 = vpop.permute.xlu0 %1581
  %v1584 = vadd.f32 %v1574, %v1582
  %v1585 = vtanh.pop %v1584
  %1587 = vrot.lane.b32.xlu0 %v1585, 32
  %v1588 = vpop.permute.xlu0 %1587
  %v1590 = vmul.f32 %v1572, %v1588
  %v1593 = vunpack.c.l.s4 1983009808
  %v1594 = vunpack.c.0.s8 %v1593
  %v1595 = vlaneseq
  %v1596 = vshrl.u32 %v1595, 7
  %v1597 = vsub.s32 %v1594, %v1596
  %v1598 = vrot.slane %v1590, %v1597
  %1599 = vrot.lane.b32.xlu0 %v1598, 64
  %v1600 = vpop.permute.xlu0 %1599
  %v1601 = vsel %vm103, %v1600, 0
  %1603 = vmatprep.subr.mxu0 0.0
  %1604 = vmatpush1.msra.mxu0 0.0
  %1605 = vmatprep.subr.mxu0 0.0
  %1606 = vmatpush1.msra.mxu0 0.0
  %1607 = vmatprep.subr.mxu0 0.0
  %1608 = vmatpush1.msra.mxu0 0.0
  %1609 = vmatprep.subr.mxu0 0.0
  %1610 = vmatpush1.msra.mxu0 0.0
  %1611 = vmatprep.subr.mxu0 0.0
  %1612 = vmatpush1.msra.mxu0 0.0
  %1613 = vmatprep.subr.mxu0 0.0
  %1614 = vmatpush1.msra.mxu0 0.0
  %1615 = vmatprep.subr.mxu0 0.0
  %1616 = vmatpush1.msra.mxu0 0.0
  %1617 = vmatprep.subr.mxu0 0.0
  %1618 = vmatpush1.msra.mxu0 0.0
  %1619 = vmatprep.subr.mxu0 0.0
  %1620 = vmatpush1.msra.mxu0 0.0
  %1621 = vmatprep.subr.mxu0 0.0
  %1622 = vmatpush1.msra.mxu0 0.0
  %1623 = vmatprep.subr.mxu0 0.0
  %1624 = vmatpush1.msra.mxu0 0.0
  %1625 = vmatprep.subr.mxu0 0.0
  %1626 = vmatpush1.msra.mxu0 0.0
  %1627 = vmatprep.subr.mxu0 0.0
  %1628 = vmatpush1.msra.mxu0 %v1094
  %1629 = vmatprep.subr.mxu0 0.0
  %1630 = vmatpush1.msra.mxu0 %v1093
  %1631 = vmatprep.subr.mxu0 0.0
  %1632 = vmatpush1.msra.mxu0 %v1092
  %1633 = vmatprep.subr.mxu0 0.0
  %1634 = vmatpush1.msra.mxu0 %v1091
  %1635 = vmatprep.subr.mxu0 0.0
  %1636 = vmatpush2.msra.mxu0 0.0
  %1637 = vmatprep.subr.mxu0 0.0
  %1638 = vmatpush2.msra.mxu0 0.0
  %1639 = vmatprep.subr.mxu0 0.0
  %1640 = vmatpush2.msra.mxu0 0.0
  %1641 = vmatprep.subr.mxu0 0.0
  %1642 = vmatpush2.msra.mxu0 0.0
  %1643 = vmatprep.subr.mxu0 0.0
  %1644 = vmatpush2.msra.mxu0 0.0
  %1645 = vmatprep.subr.mxu0 0.0
  %1646 = vmatpush2.msra.mxu0 0.0
  %1647 = vmatprep.subr.mxu0 0.0
  %1648 = vmatpush2.msra.mxu0 0.0
  %1649 = vmatprep.subr.mxu0 0.0
  %1650 = vmatpush2.msra.mxu0 0.0
  %1651 = vmatprep.subr.mxu0 0.0
  %1652 = vmatpush2.msra.mxu0 0.0
  %1653 = vmatprep.subr.mxu0 0.0
  %1654 = vmatpush2.msra.mxu0 0.0
  %1655 = vmatprep.subr.mxu0 0.0
  %1656 = vmatpush2.msra.mxu0 0.0
  %1657 = vmatprep.subr.mxu0 0.0
  %1658 = vmatpush2.msra.mxu0 0.0
  %1659 = vmatprep.subr.mxu0 0.0
  %1660 = vmatpush2.msra.mxu0 0.0
  %1661 = vmatprep.subr.mxu0 0.0
  %1662 = vmatpush2.msra.mxu0 0.0
  %1663 = vmatprep.subr.mxu0 0.0
  %1664 = vmatpush2.msra.mxu0 0.0
  %1665 = vmatprep.subr.mxu0 0.0
  %1666 = vmatpush2.msra.mxu0 0.0
  %1667 = vmatprep.mubr.f32.mxu0 0.0
  %1668 = vmatmul.mubr.f32.gmra.mxu0 %v1601
  %v1669 = vpop.f32.mrf.mxu0
  %v1670 = vadd.f32 0.0, %v1669
  %v1671 = vpop.f32.mrf.mxu0
  %1672 = vdwg.mxu0
  %v1673 = vadd.f32 %v1238, %v1670
  %v1674 = vxor.u32 %v1673, 2147483648
  %v1675 = vmul.f32 %v1674, 1.442695
  %v1676 = vpow.pop %v1675
  %v1677 = vadd.f32 %v1676, 1.0
  %v1678 = vrcp.pop %v1677
  %v1679 = vmul.f32 1.0, %v1678
  %v1680 = vtanh.pop %v1673
  %v1681 = vmul.f32 %v1679, %v1584
  %1683 = vrot.lane.b32.xlu0 %v1680, 32
  %v1684 = vpop.permute.xlu0 %1683
  %v1686 = vmul.f32 %v1679, %v1684
  %1688 = vrot.lane.b32.xlu0 %v1686, 32
  %v1689 = vpop.permute.xlu0 %1688
  %v1691 = vadd.f32 %v1681, %v1689
  %v1692 = vtanh.pop %v1691
  %1694 = vrot.lane.b32.xlu0 %v1692, 32
  %v1695 = vpop.permute.xlu0 %1694
  %v1697 = vmul.f32 %v1679, %v1695
  %v1700 = vunpack.c.l.s4 1983009808
  %v1701 = vunpack.c.0.s8 %v1700
  %v1702 = vlaneseq
  %v1703 = vshrl.u32 %v1702, 7
  %v1704 = vsub.s32 %v1701, %v1703
  %v1705 = vrot.slane %v1697, %v1704
  %1706 = vrot.lane.b32.xlu0 %v1705, 64
  %v1707 = vpop.permute.xlu0 %1706
  %v1708 = vsel %vm103, %v1707, 0
  %1710 = vmatprep.subr.mxu0 0.0
  %1711 = vmatpush1.msra.mxu0 0.0
  %1712 = vmatprep.subr.mxu0 0.0
  %1713 = vmatpush1.msra.mxu0 0.0
  %1714 = vmatprep.subr.mxu0 0.0
  %1715 = vmatpush1.msra.mxu0 0.0
  %1716 = vmatprep.subr.mxu0 0.0
  %1717 = vmatpush1.msra.mxu0 0.0
  %1718 = vmatprep.subr.mxu0 0.0
  %1719 = vmatpush1.msra.mxu0 0.0
  %1720 = vmatprep.subr.mxu0 0.0
  %1721 = vmatpush1.msra.mxu0 0.0
  %1722 = vmatprep.subr.mxu0 0.0
  %1723 = vmatpush1.msra.mxu0 0.0
  %1724 = vmatprep.subr.mxu0 0.0
  %1725 = vmatpush1.msra.mxu0 0.0
  %1726 = vmatprep.subr.mxu0 0.0
  %1727 = vmatpush1.msra.mxu0 0.0
  %1728 = vmatprep.subr.mxu0 0.0
  %1729 = vmatpush1.msra.mxu0 0.0
  %1730 = vmatprep.subr.mxu0 0.0
  %1731 = vmatpush1.msra.mxu0 0.0
  %1732 = vmatprep.subr.mxu0 0.0
  %1733 = vmatpush1.msra.mxu0 0.0
  %1734 = vmatprep.subr.mxu0 0.0
  %1735 = vmatpush1.msra.mxu0 %v1094
  %1736 = vmatprep.subr.mxu0 0.0
  %1737 = vmatpush1.msra.mxu0 %v1093
  %1738 = vmatprep.subr.mxu0 0.0
  %1739 = vmatpush1.msra.mxu0 %v1092
  %1740 = vmatprep.subr.mxu0 0.0
  %1741 = vmatpush1.msra.mxu0 %v1091
  %1742 = vmatprep.subr.mxu0 0.0
  %1743 = vmatpush2.msra.mxu0 0.0
  %1744 = vmatprep.subr.mxu0 0.0
  %1745 = vmatpush2.msra.mxu0 0.0
  %1746 = vmatprep.subr.mxu0 0.0
  %1747 = vmatpush2.msra.mxu0 0.0
  %1748 = vmatprep.subr.mxu0 0.0
  %1749 = vmatpush2.msra.mxu0 0.0
  %1750 = vmatprep.subr.mxu0 0.0
  %1751 = vmatpush2.msra.mxu0 0.0
  %1752 = vmatprep.subr.mxu0 0.0
  %1753 = vmatpush2.msra.mxu0 0.0
  %1754 = vmatprep.subr.mxu0 0.0
  %1755 = vmatpush2.msra.mxu0 0.0
  %1756 = vmatprep.subr.mxu0 0.0
  %1757 = vmatpush2.msra.mxu0 0.0
  %1758 = vmatprep.subr.mxu0 0.0
  %1759 = vmatpush2.msra.mxu0 0.0
  %1760 = vmatprep.subr.mxu0 0.0
  %1761 = vmatpush2.msra.mxu0 0.0
  %1762 = vmatprep.subr.mxu0 0.0
  %1763 = vmatpush2.msra.mxu0 0.0
  %1764 = vmatprep.subr.mxu0 0.0
  %1765 = vmatpush2.msra.mxu0 0.0
  %1766 = vmatprep.subr.mxu0 0.0
  %1767 = vmatpush2.msra.mxu0 0.0
  %1768 = vmatprep.subr.mxu0 0.0
  %1769 = vmatpush2.msra.mxu0 0.0
  %1770 = vmatprep.subr.mxu0 0.0
  %1771 = vmatpush2.msra.mxu0 0.0
  %1772 = vmatprep.subr.mxu0 0.0
  %1773 = vmatpush2.msra.mxu0 0.0
  %1774 = vmatprep.mubr.f32.mxu0 0.0
  %1775 = vmatmul.mubr.f32.gmra.mxu0 %v1708
  %v1776 = vpop.f32.mrf.mxu0
  %v1777 = vadd.f32 0.0, %v1776
  %v1778 = vpop.f32.mrf.mxu0
  %1779 = vdwg.mxu0
  %v1780 = vadd.f32 %v1246, %v1777
  %v1781 = vxor.u32 %v1780, 2147483648
  %v1782 = vmul.f32 %v1781, 1.442695
  %v1783 = vpow.pop %v1782
  %v1784 = vadd.f32 %v1783, 1.0
  %v1785 = vrcp.pop %v1784
  %v1786 = vmul.f32 1.0, %v1785
  %v1787 = vtanh.pop %v1780
  %v1788 = vmul.f32 %v1786, %v1691
  %1790 = vrot.lane.b32.xlu0 %v1787, 32
  %v1791 = vpop.permute.xlu0 %1790
  %v1793 = vmul.f32 %v1786, %v1791
  %1795 = vrot.lane.b32.xlu0 %v1793, 32
  %v1796 = vpop.permute.xlu0 %1795
  %v1798 = vadd.f32 %v1788, %v1796
  %v1799 = vtanh.pop %v1798
  %1801 = vrot.lane.b32.xlu0 %v1799, 32
  %v1802 = vpop.permute.xlu0 %1801
  %v1804 = vmul.f32 %v1786, %v1802
  %v1807 = vunpack.c.l.s4 1983009808
  %v1808 = vunpack.c.0.s8 %v1807
  %v1809 = vlaneseq
  %v1810 = vshrl.u32 %v1809, 7
  %v1811 = vsub.s32 %v1808, %v1810
  %v1812 = vrot.slane %v1804, %v1811
  %1813 = vrot.lane.b32.xlu0 %v1812, 64
  %v1814 = vpop.permute.xlu0 %1813
  %v1815 = vsel %vm103, %v1814, 0
  %1817 = vmatprep.subr.mxu0 0.0
  %1818 = vmatpush1.msra.mxu0 0.0
  %1819 = vmatprep.subr.mxu0 0.0
  %1820 = vmatpush1.msra.mxu0 0.0
  %1821 = vmatprep.subr.mxu0 0.0
  %1822 = vmatpush1.msra.mxu0 0.0
  %1823 = vmatprep.subr.mxu0 0.0
  %1824 = vmatpush1.msra.mxu0 0.0
  %1825 = vmatprep.subr.mxu0 0.0
  %1826 = vmatpush1.msra.mxu0 0.0
  %1827 = vmatprep.subr.mxu0 0.0
  %1828 = vmatpush1.msra.mxu0 0.0
  %1829 = vmatprep.subr.mxu0 0.0
  %1830 = vmatpush1.msra.mxu0 0.0
  %1831 = vmatprep.subr.mxu0 0.0
  %1832 = vmatpush1.msra.mxu0 0.0
  %1833 = vmatprep.subr.mxu0 0.0
  %1834 = vmatpush1.msra.mxu0 0.0
  %1835 = vmatprep.subr.mxu0 0.0
  %1836 = vmatpush1.msra.mxu0 0.0
  %1837 = vmatprep.subr.mxu0 0.0
  %1838 = vmatpush1.msra.mxu0 0.0
  %1839 = vmatprep.subr.mxu0 0.0
  %1840 = vmatpush1.msra.mxu0 0.0
  %1841 = vmatprep.subr.mxu0 0.0
  %1842 = vmatpush1.msra.mxu0 %v1094
  %1843 = vmatprep.subr.mxu0 0.0
  %1844 = vmatpush1.msra.mxu0 %v1093
  %1845 = vmatprep.subr.mxu0 0.0
  %1846 = vmatpush1.msra.mxu0 %v1092
  %1847 = vmatprep.subr.mxu0 0.0
  %1848 = vmatpush1.msra.mxu0 %v1091
  %1849 = vmatprep.subr.mxu0 0.0
  %1850 = vmatpush2.msra.mxu0 0.0
  %1851 = vmatprep.subr.mxu0 0.0
  %1852 = vmatpush2.msra.mxu0 0.0
  %1853 = vmatprep.subr.mxu0 0.0
  %1854 = vmatpush2.msra.mxu0 0.0
  %1855 = vmatprep.subr.mxu0 0.0
  %1856 = vmatpush2.msra.mxu0 0.0
  %1857 = vmatprep.subr.mxu0 0.0
  %1858 = vmatpush2.msra.mxu0 0.0
  %1859 = vmatprep.subr.mxu0 0.0
  %1860 = vmatpush2.msra.mxu0 0.0
  %1861 = vmatprep.subr.mxu0 0.0
  %1862 = vmatpush2.msra.mxu0 0.0
  %1863 = vmatprep.subr.mxu0 0.0
  %1864 = vmatpush2.msra.mxu0 0.0
  %1865 = vmatprep.subr.mxu0 0.0
  %1866 = vmatpush2.msra.mxu0 0.0
  %1867 = vmatprep.subr.mxu0 0.0
  %1868 = vmatpush2.msra.mxu0 0.0
  %1869 = vmatprep.subr.mxu0 0.0
  %1870 = vmatpush2.msra.mxu0 0.0
  %1871 = vmatprep.subr.mxu0 0.0
  %1872 = vmatpush2.msra.mxu0 0.0
  %1873 = vmatprep.subr.mxu0 0.0
  %1874 = vmatpush2.msra.mxu0 0.0
  %1875 = vmatprep.subr.mxu0 0.0
  %1876 = vmatpush2.msra.mxu0 0.0
  %1877 = vmatprep.subr.mxu0 0.0
  %1878 = vmatpush2.msra.mxu0 0.0
  %1879 = vmatprep.subr.mxu0 0.0
  %1880 = vmatpush2.msra.mxu0 0.0
  %1881 = vmatprep.mubr.f32.mxu0 0.0
  %1882 = vmatmul.mubr.f32.gmra.mxu0 %v1815
  %v1883 = vpop.f32.mrf.mxu0
  %v1884 = vadd.f32 0.0, %v1883
  %v1885 = vpop.f32.mrf.mxu0
  %1886 = vdwg.mxu0
  %v1887 = vadd.f32 %v1254, %v1884
  %v1888 = vxor.u32 %v1887, 2147483648
  %v1889 = vmul.f32 %v1888, 1.442695
  %v1890 = vpow.pop %v1889
  %v1891 = vadd.f32 %v1890, 1.0
  %v1892 = vrcp.pop %v1891
  %v1893 = vmul.f32 1.0, %v1892
  %v1894 = vtanh.pop %v1887
  %v1895 = vmul.f32 %v1893, %v1798
  %1897 = vrot.lane.b32.xlu0 %v1894, 32
  %v1898 = vpop.permute.xlu0 %1897
  %v1900 = vmul.f32 %v1893, %v1898
  %1902 = vrot.lane.b32.xlu0 %v1900, 32
  %v1903 = vpop.permute.xlu0 %1902
  %v1905 = vadd.f32 %v1895, %v1903
  %v1906 = vtanh.pop %v1905
  %1908 = vrot.lane.b32.xlu0 %v1906, 32
  %v1909 = vpop.permute.xlu0 %1908
  %v1911 = vmul.f32 %v1893, %v1909
  %v1914 = vunpack.c.l.s4 1983009808
  %v1915 = vunpack.c.0.s8 %v1914
  %v1916 = vlaneseq
  %v1917 = vshrl.u32 %v1916, 7
  %v1918 = vsub.s32 %v1915, %v1917
  %v1919 = vrot.slane %v1911, %v1918
  %1920 = vrot.lane.b32.xlu0 %v1919, 64
  %v1921 = vpop.permute.xlu0 %1920
  %v1922 = vsel %vm103, %v1921, 0
  %1924 = vmatprep.subr.mxu0 0.0
  %1925 = vmatpush1.msra.mxu0 0.0
  %1926 = vmatprep.subr.mxu0 0.0
  %1927 = vmatpush1.msra.mxu0 0.0
  %1928 = vmatprep.subr.mxu0 0.0
  %1929 = vmatpush1.msra.mxu0 0.0
  %1930 = vmatprep.subr.mxu0 0.0
  %1931 = vmatpush1.msra.mxu0 0.0
  %1932 = vmatprep.subr.mxu0 0.0
  %1933 = vmatpush1.msra.mxu0 0.0
  %1934 = vmatprep.subr.mxu0 0.0
  %1935 = vmatpush1.msra.mxu0 0.0
  %1936 = vmatprep.subr.mxu0 0.0
  %1937 = vmatpush1.msra.mxu0 0.0
  %1938 = vmatprep.subr.mxu0 0.0
  %1939 = vmatpush1.msra.mxu0 0.0
  %1940 = vmatprep.subr.mxu0 0.0
  %1941 = vmatpush1.msra.mxu0 0.0
  %1942 = vmatprep.subr.mxu0 0.0
  %1943 = vmatpush1.msra.mxu0 0.0
  %1944 = vmatprep.subr.mxu0 0.0
  %1945 = vmatpush1.msra.mxu0 0.0
  %1946 = vmatprep.subr.mxu0 0.0
  %1947 = vmatpush1.msra.mxu0 0.0
  %1948 = vmatprep.subr.mxu0 0.0
  %1949 = vmatpush1.msra.mxu0 %v1094
  %1950 = vmatprep.subr.mxu0 0.0
  %1951 = vmatpush1.msra.mxu0 %v1093
  %1952 = vmatprep.subr.mxu0 0.0
  %1953 = vmatpush1.msra.mxu0 %v1092
  %1954 = vmatprep.subr.mxu0 0.0
  %1955 = vmatpush1.msra.mxu0 %v1091
  %1956 = vmatprep.subr.mxu0 0.0
  %1957 = vmatpush2.msra.mxu0 0.0
  %1958 = vmatprep.subr.mxu0 0.0
  %1959 = vmatpush2.msra.mxu0 0.0
  %1960 = vmatprep.subr.mxu0 0.0
  %1961 = vmatpush2.msra.mxu0 0.0
  %1962 = vmatprep.subr.mxu0 0.0
  %1963 = vmatpush2.msra.mxu0 0.0
  %1964 = vmatprep.subr.mxu0 0.0
  %1965 = vmatpush2.msra.mxu0 0.0
  %1966 = vmatprep.subr.mxu0 0.0
  %1967 = vmatpush2.msra.mxu0 0.0
  %1968 = vmatprep.subr.mxu0 0.0
  %1969 = vmatpush2.msra.mxu0 0.0
  %1970 = vmatprep.subr.mxu0 0.0
  %1971 = vmatpush2.msra.mxu0 0.0
  %1972 = vmatprep.subr.mxu0 0.0
  %1973 = vmatpush2.msra.mxu0 0.0
  %1974 = vmatprep.subr.mxu0 0.0
  %1975 = vmatpush2.msra.mxu0 0.0
  %1976 = vmatprep.subr.mxu0 0.0
  %1977 = vmatpush2.msra.mxu0 0.0
  %1978 = vmatprep.subr.mxu0 0.0
  %1979 = vmatpush2.msra.mxu0 0.0
  %1980 = vmatprep.subr.mxu0 0.0
  %1981 = vmatpush2.msra.mxu0 0.0
  %1982 = vmatprep.subr.mxu0 0.0
  %1983 = vmatpush2.msra.mxu0 0.0
  %1984 = vmatprep.subr.mxu0 0.0
  %1985 = vmatpush2.msra.mxu0 0.0
  %1986 = vmatprep.subr.mxu0 0.0
  %1987 = vmatpush2.msra.mxu0 0.0
  %1988 = vmatprep.mubr.f32.mxu0 0.0
  %1989 = vmatmul.mubr.f32.gmra.mxu0 %v1922
  %v1990 = vpop.f32.mrf.mxu0
  %v1991 = vadd.f32 0.0, %v1990
  %v1992 = vpop.f32.mrf.mxu0
  %1993 = vdwg.mxu0
  %v1994 = vadd.f32 %v1253, %v1991
  %v1995 = vxor.u32 %v1994, 2147483648
  %v1996 = vmul.f32 %v1995, 1.442695
  %v1997 = vpow.pop %v1996
  %v1998 = vadd.f32 %v1997, 1.0
  %v1999 = vrcp.pop %v1998
  %v2000 = vmul.f32 1.0, %v1999
  %v2001 = vtanh.pop %v1994
  %v2002 = vmul.f32 %v2000, %v1905
  %2004 = vrot.lane.b32.xlu0 %v2001, 32
  %v2005 = vpop.permute.xlu0 %2004
  %v2007 = vmul.f32 %v2000, %v2005
  %2009 = vrot.lane.b32.xlu0 %v2007, 32
  %v2010 = vpop.permute.xlu0 %2009
  %v2012 = vadd.f32 %v2002, %v2010
  %v2013 = vtanh.pop %v2012
  %2015 = vrot.lane.b32.xlu0 %v2013, 32
  %v2016 = vpop.permute.xlu0 %2015
  %v2018 = vmul.f32 %v2000, %v2016
  %v2021 = vunpack.c.l.s4 1983009808
  %v2022 = vunpack.c.0.s8 %v2021
  %v2023 = vlaneseq
  %v2024 = vshrl.u32 %v2023, 7
  %v2025 = vsub.s32 %v2022, %v2024
  %v2026 = vrot.slane %v2018, %v2025
  %2027 = vrot.lane.b32.xlu0 %v2026, 64
  %v2028 = vpop.permute.xlu0 %2027
  %v2029 = vsel %vm103, %v2028, 0
  %2031 = vmatprep.subr.mxu0 0.0
  %2032 = vmatpush1.msra.mxu0 0.0
  %2033 = vmatprep.subr.mxu0 0.0
  %2034 = vmatpush1.msra.mxu0 0.0
  %2035 = vmatprep.subr.mxu0 0.0
  %2036 = vmatpush1.msra.mxu0 0.0
  %2037 = vmatprep.subr.mxu0 0.0
  %2038 = vmatpush1.msra.mxu0 0.0
  %2039 = vmatprep.subr.mxu0 0.0
  %2040 = vmatpush1.msra.mxu0 0.0
  %2041 = vmatprep.subr.mxu0 0.0
  %2042 = vmatpush1.msra.mxu0 0.0
  %2043 = vmatprep.subr.mxu0 0.0
  %2044 = vmatpush1.msra.mxu0 0.0
  %2045 = vmatprep.subr.mxu0 0.0
  %2046 = vmatpush1.msra.mxu0 0.0
  %2047 = vmatprep.subr.mxu0 0.0
  %2048 = vmatpush1.msra.mxu0 0.0
  %2049 = vmatprep.subr.mxu0 0.0
  %2050 = vmatpush1.msra.mxu0 0.0
  %2051 = vmatprep.subr.mxu0 0.0
  %2052 = vmatpush1.msra.mxu0 0.0
  %2053 = vmatprep.subr.mxu0 0.0
  %2054 = vmatpush1.msra.mxu0 0.0
  %2055 = vmatprep.subr.mxu0 0.0
  %2056 = vmatpush1.msra.mxu0 %v1094
  %2057 = vmatprep.subr.mxu0 0.0
  %2058 = vmatpush1.msra.mxu0 %v1093
  %2059 = vmatprep.subr.mxu0 0.0
  %2060 = vmatpush1.msra.mxu0 %v1092
  %2061 = vmatprep.subr.mxu0 0.0
  %2062 = vmatpush1.msra.mxu0 %v1091
  %2063 = vmatprep.subr.mxu0 0.0
  %2064 = vmatpush2.msra.mxu0 0.0
  %2065 = vmatprep.subr.mxu0 0.0
  %2066 = vmatpush2.msra.mxu0 0.0
  %2067 = vmatprep.subr.mxu0 0.0
  %2068 = vmatpush2.msra.mxu0 0.0
  %2069 = vmatprep.subr.mxu0 0.0
  %2070 = vmatpush2.msra.mxu0 0.0
  %2071 = vmatprep.subr.mxu0 0.0
  %2072 = vmatpush2.msra.mxu0 0.0
  %2073 = vmatprep.subr.mxu0 0.0
  %2074 = vmatpush2.msra.mxu0 0.0
  %2075 = vmatprep.subr.mxu0 0.0
  %2076 = vmatpush2.msra.mxu0 0.0
  %2077 = vmatprep.subr.mxu0 0.0
  %2078 = vmatpush2.msra.mxu0 0.0
  %2079 = vmatprep.subr.mxu0 0.0
  %2080 = vmatpush2.msra.mxu0 0.0
  %2081 = vmatprep.subr.mxu0 0.0
  %2082 = vmatpush2.msra.mxu0 0.0
  %2083 = vmatprep.subr.mxu0 0.0
  %2084 = vmatpush2.msra.mxu0 0.0
  %2085 = vmatprep.subr.mxu0 0.0
  %2086 = vmatpush2.msra.mxu0 0.0
  %2087 = vmatprep.subr.mxu0 0.0
  %2088 = vmatpush2.msra.mxu0 0.0
  %2089 = vmatprep.subr.mxu0 0.0
  %2090 = vmatpush2.msra.mxu0 0.0
  %2091 = vmatprep.subr.mxu0 0.0
  %2092 = vmatpush2.msra.mxu0 0.0
  %2093 = vmatprep.subr.mxu0 0.0
  %2094 = vmatpush2.msra.mxu0 0.0
  %2095 = vmatprep.mubr.f32.mxu0 0.0
  %2096 = vmatmul.mubr.f32.gmra.mxu0 %v2029
  %v2097 = vpop.f32.mrf.mxu0
  %v2098 = vadd.f32 0.0, %v2097
  %v2099 = vpop.f32.mrf.mxu0
  %2100 = vdwg.mxu0
  %v2101 = vadd.f32 %v1255, %v2098
  %v2102 = vxor.u32 %v2101, 2147483648
  %v2103 = vmul.f32 %v2102, 1.442695
  %v2104 = vpow.pop %v2103
  %v2105 = vadd.f32 %v2104, 1.0
  %v2106 = vrcp.pop %v2105
  %v2107 = vmul.f32 1.0, %v2106
  %v2108 = vtanh.pop %v2101
  %v2109 = vmul.f32 %v2107, %v2012
  %2111 = vrot.lane.b32.xlu0 %v2108, 32
  %v2112 = vpop.permute.xlu0 %2111
  %v2114 = vmul.f32 %v2107, %v2112
  %2116 = vrot.lane.b32.xlu0 %v2114, 32
  %v2117 = vpop.permute.xlu0 %2116
  %v2119 = vadd.f32 %v2109, %v2117
  %v2120 = vtanh.pop %v2119
  %2122 = vrot.lane.b32.xlu0 %v2120, 32
  %v2123 = vpop.permute.xlu0 %2122
  %v2125 = vmul.f32 %v2107, %v2123
  %v2126 = vld [vmem:[%s9] sm:$0xff]
  %v2127 = vld [vmem:[%s9 + $0x8] sm:$0xff]
  %v2128 = vld [vmem:[%s9 + $0x10] sm:$0xff]
  %v2129 = vld [vmem:[%s9 + $0x18] sm:$0xff]
  %v2130 = vld [vmem:[%s10] sm:$0x1]
  %v2132 = vlaneseq
  %v2133 = vshrl.u32 %v2132, 7
  %v2134 = vsub.s32 0, %v2133
  %v2135 = vrot.slane %v2130, %v2134
  %v2138 = vcombine.low %v1376, %v1483
  %v2139 = vcombine.low %v1590, %v1697
  %v2141 = vunpack.c.l.s4 1983009808
  %v2142 = vunpack.c.0.s8 %v2141
  %v2143 = vlaneseq
  %v2144 = vshrl.u32 %v2143, 7
  %v2145 = vsub.s32 %v2142, %v2144
  %v2146 = vrot.slane %v2138, %v2145
  %v2148 = vunpack.c.l.s4 1983009808
  %v2149 = vunpack.c.0.s8 %v2148
  %v2150 = vlaneseq
  %v2151 = vshrl.u32 %v2150, 7
  %v2152 = vsub.s32 %v2149, %v2151
  %v2153 = vrot.slane %v2139, %v2152
  %v2154 = vcombine.low %v2146, %v2153
  %v2155 = vcombine.low %v1804, %v1911
  %v2156 = vcombine.low %v2018, %v2125
  %v2158 = vunpack.c.l.s4 1983009808
  %v2159 = vunpack.c.0.s8 %v2158
  %v2160 = vlaneseq
  %v2161 = vshrl.u32 %v2160, 7
  %v2162 = vsub.s32 %v2159, %v2161
  %v2163 = vrot.slane %v2155, %v2162
  %v2165 = vunpack.c.l.s4 1983009808
  %v2166 = vunpack.c.0.s8 %v2165
  %v2167 = vlaneseq
  %v2168 = vshrl.u32 %v2167, 7
  %v2169 = vsub.s32 %v2166, %v2168
  %v2170 = vrot.slane %v2156, %v2169
  %v2171 = vcombine.low %v2163, %v2170
  %2172 = vrot.lane.b32.xlu0 %v2154, 64
  %v2173 = vpop.permute.xlu0 %2172
  %2174 = vrot.lane.b32.xlu0 %v2171, 64
  %v2175 = vpop.permute.xlu0 %2174
  %v2176 = vsel %vm103, %v2173, 0
  %v2178 = vsel %vm103, %v2175, 0
  %2180 = vmatprep.subr.mxu0 0.0
  %2181 = vmatpush1.msra.mxu0 0.0
  %2182 = vmatprep.subr.mxu0 0.0
  %2183 = vmatpush1.msra.mxu0 0.0
  %2184 = vmatprep.subr.mxu0 0.0
  %2185 = vmatpush1.msra.mxu0 0.0
  %2186 = vmatprep.subr.mxu0 0.0
  %2187 = vmatpush1.msra.mxu0 0.0
  %2188 = vmatprep.subr.mxu0 0.0
  %2189 = vmatpush1.msra.mxu0 0.0
  %2190 = vmatprep.subr.mxu0 0.0
  %2191 = vmatpush1.msra.mxu0 0.0
  %2192 = vmatprep.subr.mxu0 0.0
  %2193 = vmatpush1.msra.mxu0 0.0
  %2194 = vmatprep.subr.mxu0 0.0
  %2195 = vmatpush1.msra.mxu0 0.0
  %2196 = vmatprep.subr.mxu0 0.0
  %2197 = vmatpush1.msra.mxu0 0.0
  %2198 = vmatprep.subr.mxu0 0.0
  %2199 = vmatpush1.msra.mxu0 0.0
  %2200 = vmatprep.subr.mxu0 0.0
  %2201 = vmatpush1.msra.mxu0 0.0
  %2202 = vmatprep.subr.mxu0 0.0
  %2203 = vmatpush1.msra.mxu0 0.0
  %2204 = vmatprep.subr.mxu0 0.0
  %2205 = vmatpush1.msra.mxu0 %v2129
  %2206 = vmatprep.subr.mxu0 0.0
  %2207 = vmatpush1.msra.mxu0 %v2128
  %2208 = vmatprep.subr.mxu0 0.0
  %2209 = vmatpush1.msra.mxu0 %v2127
  %2210 = vmatprep.subr.mxu0 0.0
  %2211 = vmatpush1.msra.mxu0 %v2126
  %2212 = vmatprep.subr.mxu0 0.0
  %2213 = vmatpush2.msra.mxu0 0.0
  %2214 = vmatprep.subr.mxu0 0.0
  %2215 = vmatpush2.msra.mxu0 0.0
  %2216 = vmatprep.subr.mxu0 0.0
  %2217 = vmatpush2.msra.mxu0 0.0
  %2218 = vmatprep.subr.mxu0 0.0
  %2219 = vmatpush2.msra.mxu0 0.0
  %2220 = vmatprep.subr.mxu0 0.0
  %2221 = vmatpush2.msra.mxu0 0.0
  %2222 = vmatprep.subr.mxu0 0.0
  %2223 = vmatpush2.msra.mxu0 0.0
  %2224 = vmatprep.subr.mxu0 0.0
  %2225 = vmatpush2.msra.mxu0 0.0
  %2226 = vmatprep.subr.mxu0 0.0
  %2227 = vmatpush2.msra.mxu0 0.0
  %2228 = vmatprep.subr.mxu0 0.0
  %2229 = vmatpush2.msra.mxu0 0.0
  %2230 = vmatprep.subr.mxu0 0.0
  %2231 = vmatpush2.msra.mxu0 0.0
  %2232 = vmatprep.subr.mxu0 0.0
  %2233 = vmatpush2.msra.mxu0 0.0
  %2234 = vmatprep.subr.mxu0 0.0
  %2235 = vmatpush2.msra.mxu0 0.0
  %2236 = vmatprep.subr.mxu0 0.0
  %2237 = vmatpush2.msra.mxu0 0.0
  %2238 = vmatprep.subr.mxu0 0.0
  %2239 = vmatpush2.msra.mxu0 0.0
  %2240 = vmatprep.subr.mxu0 0.0
  %2241 = vmatpush2.msra.mxu0 0.0
  %2242 = vmatprep.subr.mxu0 0.0
  %2243 = vmatpush2.msra.mxu0 0.0
  %2244 = vmatprep.mubr.f32.mxu0 0.0
  %2245 = vmatmul.mubr.f32.gmra.mxu0 %v2176
  %v2246 = vpop.f32.mrf.mxu0
  %v2247 = vadd.f32 %v2135, %v2246
  %v2248 = vpop.f32.mrf.mxu0
  %2249 = vmatprep.mubr.f32.mxu0 0.0
  %2250 = vmatmul.mubr.f32.gmra.mxu0 %v2178
  %v2251 = vpop.f32.mrf.mxu0
  %v2252 = vadd.f32 %v2135, %v2251
  %v2253 = vpop.f32.mrf.mxu0
  %2254 = vdwg.mxu0
  %v2257 = vcombine.high %v2247, %v2247
  %v2259 = vunpack.c.l.s4 1983009808
  %v2260 = vunpack.c.0.s8 %v2259
  %v2261 = vlaneseq
  %v2262 = vshrl.u32 %v2261, 7
  %v2263 = vsub.s32 %v2260, %v2262
  %v2264 = vrot.slane %v2247, %v2263
  %v2266 = vunpack.c.l.s4 1983009808
  %v2267 = vunpack.c.0.s8 %v2266
  %v2268 = vlaneseq
  %v2269 = vshrl.u32 %v2268, 7
  %v2270 = vsub.s32 %v2267, %v2269
  %v2271 = vrot.slane %v2257, %v2270
  %v2272 = vcombine.high %v2264, %v2264
  %v2273 = vcombine.high %v2271, %v2271
  %v2274 = vcombine.high %v2252, %v2252
  %v2276 = vunpack.c.l.s4 1983009808
  %v2277 = vunpack.c.0.s8 %v2276
  %v2278 = vlaneseq
  %v2279 = vshrl.u32 %v2278, 7
  %v2280 = vsub.s32 %v2277, %v2279
  %v2281 = vrot.slane %v2252, %v2280
  %v2283 = vunpack.c.l.s4 1983009808
  %v2284 = vunpack.c.0.s8 %v2283
  %v2285 = vlaneseq
  %v2286 = vshrl.u32 %v2285, 7
  %v2287 = vsub.s32 %v2284, %v2286
  %v2288 = vrot.slane %v2274, %v2287
  %v2289 = vcombine.high %v2281, %v2281
  %v2290 = vcombine.high %v2288, %v2288
  %2299 = vst [vmem:[%s11] sm:$0x3] %v2264
  %2300 = vst [vmem:[%s11 + $0x2] sm:$0x3] %v2272
  %2301 = vst [vmem:[%s11 + $0x4] sm:$0x3] %v2271
  %2302 = vst [vmem:[%s11 + $0x6] sm:$0x3] %v2273
  %2303 = vst [vmem:[%s11 + $0x8] sm:$0x3] %v2281
  %2304 = vst [vmem:[%s11 + $0xa] sm:$0x3] %v2289
  %2305 = vst [vmem:[%s11 + $0xc] sm:$0x3] %v2288
  %2306 = vst [vmem:[%s11 + $0xe] sm:$0x3] %v2290
  // Predicated region
  $region46: #{_lambda_.3} parent=0 // pred_check
    _
  $region47: #{_lambda_.3} parent=0 // pred_check_branch
    %2308 = sbr.rel (0) target = $region49
  $region48: #{_lambda_.3} parent=0 // pred_region
    _
  $region49: #{_lambda_.3} parent=0 // pred_fallthru
    _
  // Predicated region
  $region50: #{_lambda_.3} parent=0 // pred_check
    _
  $region51: #{_lambda_.3} parent=0 // pred_check_branch
    %2310 = sbr.rel (0) target = $region53
  $region52: #{_lambda_.3} parent=0 // pred_region
    _
  $region53: #{_lambda_.3} parent=0 // pred_fallthru
    _

// kernel: _lambda_.2
$region0: #{_lambda_.2}
  #allocation0 [shape = 'u32[]', space=smem, size = 0x4, offset = 0x4, fixed_abs, tag = 'smem constant byte address 0x4 - core index']
  #allocation1 [shape = 'u32[144,128]{1,0:T(1,128)}', space=vmem, size = 0x12000, scoped, tag = 'internal scratch']
  %s0 = inlined_call_operand.vmem [shape: f32[8,2,32], index: 0, kind: input, shape index: {}]
  %s1 = inlined_call_operand.vmem [shape: f32[32,128], index: 1, kind: input, shape index: {}]
  %s2 = inlined_call_operand.vmem [shape: f32[32,128], index: 2, kind: input, shape index: {}]
  %s3 = inlined_call_operand.vmem [shape: f32[1,128], index: 3, kind: input, shape index: {}]
  %s4 = inlined_call_operand.vmem [shape: f32[32,128], index: 4, kind: input, shape index: {}]
  %s5 = inlined_call_operand.vmem [shape: f32[32,128], index: 5, kind: input, shape index: {}]
  %s6 = inlined_call_operand.vmem [shape: f32[1,128], index: 6, kind: input, shape index: {}]
  %s7 = inlined_call_operand.vmem [shape: f32[2,2,32], index: 7, kind: output, shape index: {0}]
  %s8 = inlined_call_operand.vmem [shape: f32[2,2,32], index: 8, kind: output, shape index: {1}]
  %9 = xla_tuple %s7, %s8
  %s10 = sld [smem:[#allocation0]]
  $region46: #{_lambda_.2} parent=0
    _
  %s12 = ssub.s32 1, %s10
  %s13 = scalar_select 0, %s12, %s10
  // Predicated region
  $region2: #{_lambda_.2} parent=0 // pred_check
    _
  $region3: #{_lambda_.2} parent=0 // pred_check_branch
    %15 = sbr.rel (0) target = $region5
  $region4: #{_lambda_.2} parent=0 // pred_region
    _
  $region5: #{_lambda_.2} parent=0 // pred_fallthru
    _
  // Predicated region
  $region6: #{_lambda_.2} parent=0 // pred_check
    _
  $region7: #{_lambda_.2} parent=0 // pred_check_branch
    %17 = sbr.rel (0) target = $region9
  $region8: #{_lambda_.2} parent=0 // pred_region
    _
  $region9: #{_lambda_.2} parent=0 // pred_fallthru
    _
  // Predicated region
  $region10: #{_lambda_.2} parent=0 // pred_check
    _
  $region11: #{_lambda_.2} parent=0 // pred_check_branch
    %19 = sbr.rel (0) target = $region13
  $region12: #{_lambda_.2} parent=0 // pred_region
    _
  $region13: #{_lambda_.2} parent=0 // pred_fallthru
    _
  // Predicated region
  $region14: #{_lambda_.2} parent=0 // pred_check
    _
  $region15: #{_lambda_.2} parent=0 // pred_check_branch
    %21 = sbr.rel (0) target = $region17
  $region16: #{_lambda_.2} parent=0 // pred_region
    _
  $region17: #{_lambda_.2} parent=0 // pred_fallthru
    _
  // Predicated region
  $region18: #{_lambda_.2} parent=0 // pred_check
    _
  $region19: #{_lambda_.2} parent=0 // pred_check_branch
    %23 = sbr.rel (0) target = $region21
  $region20: #{_lambda_.2} parent=0 // pred_region
    _
  $region21: #{_lambda_.2} parent=0 // pred_fallthru
    _
  // Predicated region
  $region22: #{_lambda_.2} parent=0 // pred_check
    _
  $region23: #{_lambda_.2} parent=0 // pred_check_branch
    %25 = sbr.rel (0) target = $region25
  $region24: #{_lambda_.2} parent=0 // pred_region
    _
  $region25: #{_lambda_.2} parent=0 // pred_fallthru
    _
  // Predicated region
  $region26: #{_lambda_.2} parent=0 // pred_check
    _
  $region27: #{_lambda_.2} parent=0 // pred_check_branch
    %27 = sbr.rel (0) target = $region29
  $region28: #{_lambda_.2} parent=0 // pred_region
    _
  $region29: #{_lambda_.2} parent=0 // pred_fallthru
    _
  %v28 = vld [vmem:[%s0] sm:$0x3]
  %v29 = vld [vmem:[%s0 + $0x2] sm:$0x3]
  %v30 = vld [vmem:[%s0 + $0x4] sm:$0x3]
  %v31 = vld [vmem:[%s0 + $0x6] sm:$0x3]
  %v32 = vld [vmem:[%s0 + $0x8] sm:$0x3]
  %v33 = vld [vmem:[%s0 + $0xa] sm:$0x3]
  %v34 = vld [vmem:[%s0 + $0xc] sm:$0x3]
  %v35 = vld [vmem:[%s0 + $0xe] sm:$0x3]
  %v36 = vld [vmem:[%s1] sm:$0xff]
  %v37 = vld [vmem:[%s1 + $0x8] sm:$0xff]
  %v38 = vld [vmem:[%s1 + $0x10] sm:$0xff]
  %v39 = vld [vmem:[%s1 + $0x18] sm:$0xff]
  %v40 = vld [vmem:[%s2] sm:$0xff]
  %v41 = vld [vmem:[%s2 + $0x8] sm:$0xff]
  %v42 = vld [vmem:[%s2 + $0x10] sm:$0xff]
  %v43 = vld [vmem:[%s2 + $0x18] sm:$0xff]
  %v44 = vld [vmem:[%s3] sm:$0x1]
  %v46 = vlaneseq
  %v47 = vshrl.u32 %v46, 7
  %v48 = vsub.s32 0, %v47
  %v49 = vrot.slane %v44, %v48
  %v59 = vcombine.low %v28, %v29
  %v60 = vcombine.low %v30, %v31
  %v62 = vunpack.c.l.s4 1983009808
  %v63 = vunpack.c.0.s8 %v62
  %v64 = vlaneseq
  %v65 = vshrl.u32 %v64, 7
  %v66 = vsub.s32 %v63, %v65
  %v67 = vrot.slane %v59, %v66
  %v69 = vunpack.c.l.s4 1983009808
  %v70 = vunpack.c.0.s8 %v69
  %v71 = vlaneseq
  %v72 = vshrl.u32 %v71, 7
  %v73 = vsub.s32 %v70, %v72
  %v74 = vrot.slane %v60, %v73
  %v75 = vcombine.low %v67, %v74
  %v76 = vcombine.low %v32, %v33
  %v77 = vcombine.low %v34, %v35
  %v79 = vunpack.c.l.s4 1983009808
  %v80 = vunpack.c.0.s8 %v79
  %v81 = vlaneseq
  %v82 = vshrl.u32 %v81, 7
  %v83 = vsub.s32 %v80, %v82
  %v84 = vrot.slane %v76, %v83
  %v86 = vunpack.c.l.s4 1983009808
  %v87 = vunpack.c.0.s8 %v86
  %v88 = vlaneseq
  %v89 = vshrl.u32 %v88, 7
  %v90 = vsub.s32 %v87, %v89
  %v91 = vrot.slane %v77, %v90
  %v92 = vcombine.low %v84, %v91
  %vm93 = vcmask 261120
  %v94 = vsel %vm93, %v75, 0
  %v96 = vsel %vm93, %v92, 0
  %98 = vmatprep.subr.mxu0 0.0
  %99 = vmatpush1.msra.mxu0 0.0
  %100 = vmatprep.subr.mxu0 0.0
  %101 = vmatpush1.msra.mxu0 0.0
  %102 = vmatprep.subr.mxu0 0.0
  %103 = vmatpush1.msra.mxu0 0.0
  %104 = vmatprep.subr.mxu0 0.0
  %105 = vmatpush1.msra.mxu0 0.0
  %106 = vmatprep.subr.mxu0 0.0
  %107 = vmatpush1.msra.mxu0 0.0
  %108 = vmatprep.subr.mxu0 0.0
  %109 = vmatpush1.msra.mxu0 0.0
  %110 = vmatprep.subr.mxu0 0.0
  %111 = vmatpush1.msra.mxu0 0.0
  %112 = vmatprep.subr.mxu0 0.0
  %113 = vmatpush1.msra.mxu0 0.0
  %114 = vmatprep.subr.mxu0 0.0
  %115 = vmatpush1.msra.mxu0 0.0
  %116 = vmatprep.subr.mxu0 0.0
  %117 = vmatpush1.msra.mxu0 0.0
  %118 = vmatprep.subr.mxu0 0.0
  %119 = vmatpush1.msra.mxu0 0.0
  %120 = vmatprep.subr.mxu0 0.0
  %121 = vmatpush1.msra.mxu0 0.0
  %122 = vmatprep.subr.mxu0 0.0
  %123 = vmatpush1.msra.mxu0 %v39
  %124 = vmatprep.subr.mxu0 0.0
  %125 = vmatpush1.msra.mxu0 %v38
  %126 = vmatprep.subr.mxu0 0.0
  %127 = vmatpush1.msra.mxu0 %v37
  %128 = vmatprep.subr.mxu0 0.0
  %129 = vmatpush1.msra.mxu0 %v36
  %130 = vmatprep.subr.mxu0 0.0
  %131 = vmatpush2.msra.mxu0 0.0
  %132 = vmatprep.subr.mxu0 0.0
  %133 = vmatpush2.msra.mxu0 0.0
  %134 = vmatprep.subr.mxu0 0.0
  %135 = vmatpush2.msra.mxu0 0.0
  %136 = vmatprep.subr.mxu0 0.0
  %137 = vmatpush2.msra.mxu0 0.0
  %138 = vmatprep.subr.mxu0 0.0
  %139 = vmatpush2.msra.mxu0 0.0
  %140 = vmatprep.subr.mxu0 0.0
  %141 = vmatpush2.msra.mxu0 0.0
  %142 = vmatprep.subr.mxu0 0.0
  %143 = vmatpush2.msra.mxu0 0.0
  %144 = vmatprep.subr.mxu0 0.0
  %145 = vmatpush2.msra.mxu0 0.0
  %146 = vmatprep.subr.mxu0 0.0
  %147 = vmatpush2.msra.mxu0 0.0
  %148 = vmatprep.subr.mxu0 0.0
  %149 = vmatpush2.msra.mxu0 0.0
  %150 = vmatprep.subr.mxu0 0.0
  %151 = vmatpush2.msra.mxu0 0.0
  %152 = vmatprep.subr.mxu0 0.0
  %153 = vmatpush2.msra.mxu0 0.0
  %154 = vmatprep.subr.mxu0 0.0
  %155 = vmatpush2.msra.mxu0 0.0
  %156 = vmatprep.subr.mxu0 0.0
  %157 = vmatpush2.msra.mxu0 0.0
  %158 = vmatprep.subr.mxu0 0.0
  %159 = vmatpush2.msra.mxu0 0.0
  %160 = vmatprep.subr.mxu0 0.0
  %161 = vmatpush2.msra.mxu0 0.0
  %162 = vmatprep.mubr.f32.mxu0 0.0
  %163 = vmatmul.mubr.f32.gmra.mxu0 %v94
  %v164 = vpop.f32.mrf.mxu0
  %v165 = vadd.f32 %v49, %v164
  %v166 = vpop.f32.mrf.mxu0
  %167 = vmatprep.mubr.f32.mxu0 0.0
  %168 = vmatmul.mubr.f32.gmra.mxu0 %v96
  %v169 = vpop.f32.mrf.mxu0
  %v170 = vadd.f32 %v49, %v169
  %v171 = vpop.f32.mrf.mxu0
  %172 = vdwg.mxu0
  %v175 = vcombine.high %v165, %v165
  %v177 = vunpack.c.l.s4 1983009808
  %v178 = vunpack.c.0.s8 %v177
  %v179 = vlaneseq
  %v180 = vshrl.u32 %v179, 7
  %v181 = vsub.s32 %v178, %v180
  %v182 = vrot.slane %v165, %v181
  %v184 = vunpack.c.l.s4 1983009808
  %v185 = vunpack.c.0.s8 %v184
  %v186 = vlaneseq
  %v187 = vshrl.u32 %v186, 7
  %v188 = vsub.s32 %v185, %v187
  %v189 = vrot.slane %v175, %v188
  %v190 = vcombine.high %v182, %v182
  %v191 = vcombine.high %v189, %v189
  %v192 = vcombine.high %v170, %v170
  %v194 = vunpack.c.l.s4 1983009808
  %v195 = vunpack.c.0.s8 %v194
  %v196 = vlaneseq
  %v197 = vshrl.u32 %v196, 7
  %v198 = vsub.s32 %v195, %v197
  %v199 = vrot.slane %v170, %v198
  %v201 = vunpack.c.l.s4 1983009808
  %v202 = vunpack.c.0.s8 %v201
  %v203 = vlaneseq
  %v204 = vshrl.u32 %v203, 7
  %v205 = vsub.s32 %v202, %v204
  %v206 = vrot.slane %v192, %v205
  %v207 = vcombine.high %v199, %v199
  %v208 = vcombine.high %v206, %v206
  %v218 = vsel %vm93, 0.0, 0
  %220 = vmatprep.subr.mxu0 0.0
  %221 = vmatpush1.msra.mxu0 0.0
  %222 = vmatprep.subr.mxu0 0.0
  %223 = vmatpush1.msra.mxu0 0.0
  %224 = vmatprep.subr.mxu0 0.0
  %225 = vmatpush1.msra.mxu0 0.0
  %226 = vmatprep.subr.mxu0 0.0
  %227 = vmatpush1.msra.mxu0 0.0
  %228 = vmatprep.subr.mxu0 0.0
  %229 = vmatpush1.msra.mxu0 0.0
  %230 = vmatprep.subr.mxu0 0.0
  %231 = vmatpush1.msra.mxu0 0.0
  %232 = vmatprep.subr.mxu0 0.0
  %233 = vmatpush1.msra.mxu0 0.0
  %234 = vmatprep.subr.mxu0 0.0
  %235 = vmatpush1.msra.mxu0 0.0
  %236 = vmatprep.subr.mxu0 0.0
  %237 = vmatpush1.msra.mxu0 0.0
  %238 = vmatprep.subr.mxu0 0.0
  %239 = vmatpush1.msra.mxu0 0.0
  %240 = vmatprep.subr.mxu0 0.0
  %241 = vmatpush1.msra.mxu0 0.0
  %242 = vmatprep.subr.mxu0 0.0
  %243 = vmatpush1.msra.mxu0 0.0
  %244 = vmatprep.subr.mxu0 0.0
  %245 = vmatpush1.msra.mxu0 %v43
  %246 = vmatprep.subr.mxu0 0.0
  %247 = vmatpush1.msra.mxu0 %v42
  %248 = vmatprep.subr.mxu0 0.0
  %249 = vmatpush1.msra.mxu0 %v41
  %250 = vmatprep.subr.mxu0 0.0
  %251 = vmatpush1.msra.mxu0 %v40
  %252 = vmatprep.subr.mxu0 0.0
  %253 = vmatpush2.msra.mxu0 0.0
  %254 = vmatprep.subr.mxu0 0.0
  %255 = vmatpush2.msra.mxu0 0.0
  %256 = vmatprep.subr.mxu0 0.0
  %257 = vmatpush2.msra.mxu0 0.0
  %258 = vmatprep.subr.mxu0 0.0
  %259 = vmatpush2.msra.mxu0 0.0
  %260 = vmatprep.subr.mxu0 0.0
  %261 = vmatpush2.msra.mxu0 0.0
  %262 = vmatprep.subr.mxu0 0.0
  %263 = vmatpush2.msra.mxu0 0.0
  %264 = vmatprep.subr.mxu0 0.0
  %265 = vmatpush2.msra.mxu0 0.0
  %266 = vmatprep.subr.mxu0 0.0
  %267 = vmatpush2.msra.mxu0 0.0
  %268 = vmatprep.subr.mxu0 0.0
  %269 = vmatpush2.msra.mxu0 0.0
  %270 = vmatprep.subr.mxu0 0.0
  %271 = vmatpush2.msra.mxu0 0.0
  %272 = vmatprep.subr.mxu0 0.0
  %273 = vmatpush2.msra.mxu0 0.0
  %274 = vmatprep.subr.mxu0 0.0
  %275 = vmatpush2.msra.mxu0 0.0
  %276 = vmatprep.subr.mxu0 0.0
  %277 = vmatpush2.msra.mxu0 0.0
  %278 = vmatprep.subr.mxu0 0.0
  %279 = vmatpush2.msra.mxu0 0.0
  %280 = vmatprep.subr.mxu0 0.0
  %281 = vmatpush2.msra.mxu0 0.0
  %282 = vmatprep.subr.mxu0 0.0
  %283 = vmatpush2.msra.mxu0 0.0
  %284 = vmatprep.mubr.f32.mxu0 0.0
  %285 = vmatmul.mubr.f32.gmra.mxu0 %v218
  %v286 = vpop.f32.mrf.mxu0
  %v287 = vadd.f32 0.0, %v286
  %v288 = vpop.f32.mrf.mxu0
  %289 = vdwg.mxu0
  %v290 = vadd.f32 %v182, %v287
  %v291 = vxor.u32 %v290, 2147483648
  %v292 = vmul.f32 %v291, 1.442695
  %v293 = vpow.pop %v292
  %v294 = vadd.f32 %v293, 1.0
  %v295 = vrcp.pop %v294
  %v296 = vmul.f32 1.0, %v295
  %v297 = vtanh.pop %v290
  %v298 = vmul.f32 %v296, 0.0
  %300 = vrot.lane.b32.xlu0 %v297, 32
  %v301 = vpop.permute.xlu0 %300
  %v303 = vmul.f32 %v296, %v301
  %305 = vrot.lane.b32.xlu0 %v303, 32
  %v306 = vpop.permute.xlu0 %305
  %v308 = vadd.f32 %v298, %v306
  %v309 = vtanh.pop %v308
  %311 = vrot.lane.b32.xlu0 %v309, 32
  %v312 = vpop.permute.xlu0 %311
  %v314 = vmul.f32 %v296, %v312
  %v317 = vunpack.c.l.s4 1983009808
  %v318 = vunpack.c.0.s8 %v317
  %v319 = vlaneseq
  %v320 = vshrl.u32 %v319, 7
  %v321 = vsub.s32 %v318, %v320
  %v322 = vrot.slane %v314, %v321
  %323 = vrot.lane.b32.xlu0 %v322, 64
  %v324 = vpop.permute.xlu0 %323
  %v325 = vsel %vm93, %v324, 0
  %327 = vmatprep.subr.mxu0 0.0
  %328 = vmatpush1.msra.mxu0 0.0
  %329 = vmatprep.subr.mxu0 0.0
  %330 = vmatpush1.msra.mxu0 0.0
  %331 = vmatprep.subr.mxu0 0.0
  %332 = vmatpush1.msra.mxu0 0.0
  %333 = vmatprep.subr.mxu0 0.0
  %334 = vmatpush1.msra.mxu0 0.0
  %335 = vmatprep.subr.mxu0 0.0
  %336 = vmatpush1.msra.mxu0 0.0
  %337 = vmatprep.subr.mxu0 0.0
  %338 = vmatpush1.msra.mxu0 0.0
  %339 = vmatprep.subr.mxu0 0.0
  %340 = vmatpush1.msra.mxu0 0.0
  %341 = vmatprep.subr.mxu0 0.0
  %342 = vmatpush1.msra.mxu0 0.0
  %343 = vmatprep.subr.mxu0 0.0
  %344 = vmatpush1.msra.mxu0 0.0
  %345 = vmatprep.subr.mxu0 0.0
  %346 = vmatpush1.msra.mxu0 0.0
  %347 = vmatprep.subr.mxu0 0.0
  %348 = vmatpush1.msra.mxu0 0.0
  %349 = vmatprep.subr.mxu0 0.0
  %350 = vmatpush1.msra.mxu0 0.0
  %351 = vmatprep.subr.mxu0 0.0
  %352 = vmatpush1.msra.mxu0 %v43
  %353 = vmatprep.subr.mxu0 0.0
  %354 = vmatpush1.msra.mxu0 %v42
  %355 = vmatprep.subr.mxu0 0.0
  %356 = vmatpush1.msra.mxu0 %v41
  %357 = vmatprep.subr.mxu0 0.0
  %358 = vmatpush1.msra.mxu0 %v40
  %359 = vmatprep.subr.mxu0 0.0
  %360 = vmatpush2.msra.mxu0 0.0
  %361 = vmatprep.subr.mxu0 0.0
  %362 = vmatpush2.msra.mxu0 0.0
  %363 = vmatprep.subr.mxu0 0.0
  %364 = vmatpush2.msra.mxu0 0.0
  %365 = vmatprep.subr.mxu0 0.0
  %366 = vmatpush2.msra.mxu0 0.0
  %367 = vmatprep.subr.mxu0 0.0
  %368 = vmatpush2.msra.mxu0 0.0
  %369 = vmatprep.subr.mxu0 0.0
  %370 = vmatpush2.msra.mxu0 0.0
  %371 = vmatprep.subr.mxu0 0.0
  %372 = vmatpush2.msra.mxu0 0.0
  %373 = vmatprep.subr.mxu0 0.0
  %374 = vmatpush2.msra.mxu0 0.0
  %375 = vmatprep.subr.mxu0 0.0
  %376 = vmatpush2.msra.mxu0 0.0
  %377 = vmatprep.subr.mxu0 0.0
  %378 = vmatpush2.msra.mxu0 0.0
  %379 = vmatprep.subr.mxu0 0.0
  %380 = vmatpush2.msra.mxu0 0.0
  %381 = vmatprep.subr.mxu0 0.0
  %382 = vmatpush2.msra.mxu0 0.0
  %383 = vmatprep.subr.mxu0 0.0
  %384 = vmatpush2.msra.mxu0 0.0
  %385 = vmatprep.subr.mxu0 0.0
  %386 = vmatpush2.msra.mxu0 0.0
  %387 = vmatprep.subr.mxu0 0.0
  %388 = vmatpush2.msra.mxu0 0.0
  %389 = vmatprep.subr.mxu0 0.0
  %390 = vmatpush2.msra.mxu0 0.0
  %391 = vmatprep.mubr.f32.mxu0 0.0
  %392 = vmatmul.mubr.f32.gmra.mxu0 %v325
  %v393 = vpop.f32.mrf.mxu0
  %v394 = vadd.f32 0.0, %v393
  %v395 = vpop.f32.mrf.mxu0
  %396 = vdwg.mxu0
  %v397 = vadd.f32 %v190, %v394
  %v398 = vxor.u32 %v397, 2147483648
  %v399 = vmul.f32 %v398, 1.442695
  %v400 = vpow.pop %v399
  %v401 = vadd.f32 %v400, 1.0
  %v402 = vrcp.pop %v401
  %v403 = vmul.f32 1.0, %v402
  %v404 = vtanh.pop %v397
  %v405 = vmul.f32 %v403, %v308
  %407 = vrot.lane.b32.xlu0 %v404, 32
  %v408 = vpop.permute.xlu0 %407
  %v410 = vmul.f32 %v403, %v408
  %412 = vrot.lane.b32.xlu0 %v410, 32
  %v413 = vpop.permute.xlu0 %412
  %v415 = vadd.f32 %v405, %v413
  %v416 = vtanh.pop %v415
  %418 = vrot.lane.b32.xlu0 %v416, 32
  %v419 = vpop.permute.xlu0 %418
  %v421 = vmul.f32 %v403, %v419
  %v424 = vunpack.c.l.s4 1983009808
  %v425 = vunpack.c.0.s8 %v424
  %v426 = vlaneseq
  %v427 = vshrl.u32 %v426, 7
  %v428 = vsub.s32 %v425, %v427
  %v429 = vrot.slane %v421, %v428
  %430 = vrot.lane.b32.xlu0 %v429, 64
  %v431 = vpop.permute.xlu0 %430
  %v432 = vsel %vm93, %v431, 0
  %434 = vmatprep.subr.mxu0 0.0
  %435 = vmatpush1.msra.mxu0 0.0
  %436 = vmatprep.subr.mxu0 0.0
  %437 = vmatpush1.msra.mxu0 0.0
  %438 = vmatprep.subr.mxu0 0.0
  %439 = vmatpush1.msra.mxu0 0.0
  %440 = vmatprep.subr.mxu0 0.0
  %441 = vmatpush1.msra.mxu0 0.0
  %442 = vmatprep.subr.mxu0 0.0
  %443 = vmatpush1.msra.mxu0 0.0
  %444 = vmatprep.subr.mxu0 0.0
  %445 = vmatpush1.msra.mxu0 0.0
  %446 = vmatprep.subr.mxu0 0.0
  %447 = vmatpush1.msra.mxu0 0.0
  %448 = vmatprep.subr.mxu0 0.0
  %449 = vmatpush1.msra.mxu0 0.0
  %450 = vmatprep.subr.mxu0 0.0
  %451 = vmatpush1.msra.mxu0 0.0
  %452 = vmatprep.subr.mxu0 0.0
  %453 = vmatpush1.msra.mxu0 0.0
  %454 = vmatprep.subr.mxu0 0.0
  %455 = vmatpush1.msra.mxu0 0.0
  %456 = vmatprep.subr.mxu0 0.0
  %457 = vmatpush1.msra.mxu0 0.0
  %458 = vmatprep.subr.mxu0 0.0
  %459 = vmatpush1.msra.mxu0 %v43
  %460 = vmatprep.subr.mxu0 0.0
  %461 = vmatpush1.msra.mxu0 %v42
  %462 = vmatprep.subr.mxu0 0.0
  %463 = vmatpush1.msra.mxu0 %v41
  %464 = vmatprep.subr.mxu0 0.0
  %465 = vmatpush1.msra.mxu0 %v40
  %466 = vmatprep.subr.mxu0 0.0
  %467 = vmatpush2.msra.mxu0 0.0
  %468 = vmatprep.subr.mxu0 0.0
  %469 = vmatpush2.msra.mxu0 0.0
  %470 = vmatprep.subr.mxu0 0.0
  %471 = vmatpush2.msra.mxu0 0.0
  %472 = vmatprep.subr.mxu0 0.0
  %473 = vmatpush2.msra.mxu0 0.0
  %474 = vmatprep.subr.mxu0 0.0
  %475 = vmatpush2.msra.mxu0 0.0
  %476 = vmatprep.subr.mxu0 0.0
  %477 = vmatpush2.msra.mxu0 0.0
  %478 = vmatprep.subr.mxu0 0.0
  %479 = vmatpush2.msra.mxu0 0.0
  %480 = vmatprep.subr.mxu0 0.0
  %481 = vmatpush2.msra.mxu0 0.0
  %482 = vmatprep.subr.mxu0 0.0
  %483 = vmatpush2.msra.mxu0 0.0
  %484 = vmatprep.subr.mxu0 0.0
  %485 = vmatpush2.msra.mxu0 0.0
  %486 = vmatprep.subr.mxu0 0.0
  %487 = vmatpush2.msra.mxu0 0.0
  %488 = vmatprep.subr.mxu0 0.0
  %489 = vmatpush2.msra.mxu0 0.0
  %490 = vmatprep.subr.mxu0 0.0
  %491 = vmatpush2.msra.mxu0 0.0
  %492 = vmatprep.subr.mxu0 0.0
  %493 = vmatpush2.msra.mxu0 0.0
  %494 = vmatprep.subr.mxu0 0.0
  %495 = vmatpush2.msra.mxu0 0.0
  %496 = vmatprep.subr.mxu0 0.0
  %497 = vmatpush2.msra.mxu0 0.0
  %498 = vmatprep.mubr.f32.mxu0 0.0
  %499 = vmatmul.mubr.f32.gmra.mxu0 %v432
  %v500 = vpop.f32.mrf.mxu0
  %v501 = vadd.f32 0.0, %v500
  %v502 = vpop.f32.mrf.mxu0
  %503 = vdwg.mxu0
  %v504 = vadd.f32 %v189, %v501
  %v505 = vxor.u32 %v504, 2147483648
  %v506 = vmul.f32 %v505, 1.442695
  %v507 = vpow.pop %v506
  %v508 = vadd.f32 %v507, 1.0
  %v509 = vrcp.pop %v508
  %v510 = vmul.f32 1.0, %v509
  %v511 = vtanh.pop %v504
  %v512 = vmul.f32 %v510, %v415
  %514 = vrot.lane.b32.xlu0 %v511, 32
  %v515 = vpop.permute.xlu0 %514
  %v517 = vmul.f32 %v510, %v515
  %519 = vrot.lane.b32.xlu0 %v517, 32
  %v520 = vpop.permute.xlu0 %519
  %v522 = vadd.f32 %v512, %v520
  %v523 = vtanh.pop %v522
  %525 = vrot.lane.b32.xlu0 %v523, 32
  %v526 = vpop.permute.xlu0 %525
  %v528 = vmul.f32 %v510, %v526
  %v531 = vunpack.c.l.s4 1983009808
  %v532 = vunpack.c.0.s8 %v531
  %v533 = vlaneseq
  %v534 = vshrl.u32 %v533, 7
  %v535 = vsub.s32 %v532, %v534
  %v536 = vrot.slane %v528, %v535
  %537 = vrot.lane.b32.xlu0 %v536, 64
  %v538 = vpop.permute.xlu0 %537
  %v539 = vsel %vm93, %v538, 0
  %541 = vmatprep.subr.mxu0 0.0
  %542 = vmatpush1.msra.mxu0 0.0
  %543 = vmatprep.subr.mxu0 0.0
  %544 = vmatpush1.msra.mxu0 0.0
  %545 = vmatprep.subr.mxu0 0.0
  %546 = vmatpush1.msra.mxu0 0.0
  %547 = vmatprep.subr.mxu0 0.0
  %548 = vmatpush1.msra.mxu0 0.0
  %549 = vmatprep.subr.mxu0 0.0
  %550 = vmatpush1.msra.mxu0 0.0
  %551 = vmatprep.subr.mxu0 0.0
  %552 = vmatpush1.msra.mxu0 0.0
  %553 = vmatprep.subr.mxu0 0.0
  %554 = vmatpush1.msra.mxu0 0.0
  %555 = vmatprep.subr.mxu0 0.0
  %556 = vmatpush1.msra.mxu0 0.0
  %557 = vmatprep.subr.mxu0 0.0
  %558 = vmatpush1.msra.mxu0 0.0
  %559 = vmatprep.subr.mxu0 0.0
  %560 = vmatpush1.msra.mxu0 0.0
  %561 = vmatprep.subr.mxu0 0.0
  %562 = vmatpush1.msra.mxu0 0.0
  %563 = vmatprep.subr.mxu0 0.0
  %564 = vmatpush1.msra.mxu0 0.0
  %565 = vmatprep.subr.mxu0 0.0
  %566 = vmatpush1.msra.mxu0 %v43
  %567 = vmatprep.subr.mxu0 0.0
  %568 = vmatpush1.msra.mxu0 %v42
  %569 = vmatprep.subr.mxu0 0.0
  %570 = vmatpush1.msra.mxu0 %v41
  %571 = vmatprep.subr.mxu0 0.0
  %572 = vmatpush1.msra.mxu0 %v40
  %573 = vmatprep.subr.mxu0 0.0
  %574 = vmatpush2.msra.mxu0 0.0
  %575 = vmatprep.subr.mxu0 0.0
  %576 = vmatpush2.msra.mxu0 0.0
  %577 = vmatprep.subr.mxu0 0.0
  %578 = vmatpush2.msra.mxu0 0.0
  %579 = vmatprep.subr.mxu0 0.0
  %580 = vmatpush2.msra.mxu0 0.0
  %581 = vmatprep.subr.mxu0 0.0
  %582 = vmatpush2.msra.mxu0 0.0
  %583 = vmatprep.subr.mxu0 0.0
  %584 = vmatpush2.msra.mxu0 0.0
  %585 = vmatprep.subr.mxu0 0.0
  %586 = vmatpush2.msra.mxu0 0.0
  %587 = vmatprep.subr.mxu0 0.0
  %588 = vmatpush2.msra.mxu0 0.0
  %589 = vmatprep.subr.mxu0 0.0
  %590 = vmatpush2.msra.mxu0 0.0
  %591 = vmatprep.subr.mxu0 0.0
  %592 = vmatpush2.msra.mxu0 0.0
  %593 = vmatprep.subr.mxu0 0.0
  %594 = vmatpush2.msra.mxu0 0.0
  %595 = vmatprep.subr.mxu0 0.0
  %596 = vmatpush2.msra.mxu0 0.0
  %597 = vmatprep.subr.mxu0 0.0
  %598 = vmatpush2.msra.mxu0 0.0
  %599 = vmatprep.subr.mxu0 0.0
  %600 = vmatpush2.msra.mxu0 0.0
  %601 = vmatprep.subr.mxu0 0.0
  %602 = vmatpush2.msra.mxu0 0.0
  %603 = vmatprep.subr.mxu0 0.0
  %604 = vmatpush2.msra.mxu0 0.0
  %605 = vmatprep.mubr.f32.mxu0 0.0
  %606 = vmatmul.mubr.f32.gmra.mxu0 %v539
  %v607 = vpop.f32.mrf.mxu0
  %v608 = vadd.f32 0.0, %v607
  %v609 = vpop.f32.mrf.mxu0
  %610 = vdwg.mxu0
  %v611 = vadd.f32 %v191, %v608
  %v612 = vxor.u32 %v611, 2147483648
  %v613 = vmul.f32 %v612, 1.442695
  %v614 = vpow.pop %v613
  %v615 = vadd.f32 %v614, 1.0
  %v616 = vrcp.pop %v615
  %v617 = vmul.f32 1.0, %v616
  %v618 = vtanh.pop %v611
  %v619 = vmul.f32 %v617, %v522
  %621 = vrot.lane.b32.xlu0 %v618, 32
  %v622 = vpop.permute.xlu0 %621
  %v624 = vmul.f32 %v617, %v622
  %626 = vrot.lane.b32.xlu0 %v624, 32
  %v627 = vpop.permute.xlu0 %626
  %v629 = vadd.f32 %v619, %v627
  %v630 = vtanh.pop %v629
  %632 = vrot.lane.b32.xlu0 %v630, 32
  %v633 = vpop.permute.xlu0 %632
  %v635 = vmul.f32 %v617, %v633
  %v638 = vunpack.c.l.s4 1983009808
  %v639 = vunpack.c.0.s8 %v638
  %v640 = vlaneseq
  %v641 = vshrl.u32 %v640, 7
  %v642 = vsub.s32 %v639, %v641
  %v643 = vrot.slane %v635, %v642
  %644 = vrot.lane.b32.xlu0 %v643, 64
  %v645 = vpop.permute.xlu0 %644
  %v646 = vsel %vm93, %v645, 0
  %648 = vmatprep.subr.mxu0 0.0
  %649 = vmatpush1.msra.mxu0 0.0
  %650 = vmatprep.subr.mxu0 0.0
  %651 = vmatpush1.msra.mxu0 0.0
  %652 = vmatprep.subr.mxu0 0.0
  %653 = vmatpush1.msra.mxu0 0.0
  %654 = vmatprep.subr.mxu0 0.0
  %655 = vmatpush1.msra.mxu0 0.0
  %656 = vmatprep.subr.mxu0 0.0
  %657 = vmatpush1.msra.mxu0 0.0
  %658 = vmatprep.subr.mxu0 0.0
  %659 = vmatpush1.msra.mxu0 0.0
  %660 = vmatprep.subr.mxu0 0.0
  %661 = vmatpush1.msra.mxu0 0.0
  %662 = vmatprep.subr.mxu0 0.0
  %663 = vmatpush1.msra.mxu0 0.0
  %664 = vmatprep.subr.mxu0 0.0
  %665 = vmatpush1.msra.mxu0 0.0
  %666 = vmatprep.subr.mxu0 0.0
  %667 = vmatpush1.msra.mxu0 0.0
  %668 = vmatprep.subr.mxu0 0.0
  %669 = vmatpush1.msra.mxu0 0.0
  %670 = vmatprep.subr.mxu0 0.0
  %671 = vmatpush1.msra.mxu0 0.0
  %672 = vmatprep.subr.mxu0 0.0
  %673 = vmatpush1.msra.mxu0 %v43
  %674 = vmatprep.subr.mxu0 0.0
  %675 = vmatpush1.msra.mxu0 %v42
  %676 = vmatprep.subr.mxu0 0.0
  %677 = vmatpush1.msra.mxu0 %v41
  %678 = vmatprep.subr.mxu0 0.0
  %679 = vmatpush1.msra.mxu0 %v40
  %680 = vmatprep.subr.mxu0 0.0
  %681 = vmatpush2.msra.mxu0 0.0
  %682 = vmatprep.subr.mxu0 0.0
  %683 = vmatpush2.msra.mxu0 0.0
  %684 = vmatprep.subr.mxu0 0.0
  %685 = vmatpush2.msra.mxu0 0.0
  %686 = vmatprep.subr.mxu0 0.0
  %687 = vmatpush2.msra.mxu0 0.0
  %688 = vmatprep.subr.mxu0 0.0
  %689 = vmatpush2.msra.mxu0 0.0
  %690 = vmatprep.subr.mxu0 0.0
  %691 = vmatpush2.msra.mxu0 0.0
  %692 = vmatprep.subr.mxu0 0.0
  %693 = vmatpush2.msra.mxu0 0.0
  %694 = vmatprep.subr.mxu0 0.0
  %695 = vmatpush2.msra.mxu0 0.0
  %696 = vmatprep.subr.mxu0 0.0
  %697 = vmatpush2.msra.mxu0 0.0
  %698 = vmatprep.subr.mxu0 0.0
  %699 = vmatpush2.msra.mxu0 0.0
  %700 = vmatprep.subr.mxu0 0.0
  %701 = vmatpush2.msra.mxu0 0.0
  %702 = vmatprep.subr.mxu0 0.0
  %703 = vmatpush2.msra.mxu0 0.0
  %704 = vmatprep.subr.mxu0 0.0
  %705 = vmatpush2.msra.mxu0 0.0
  %706 = vmatprep.subr.mxu0 0.0
  %707 = vmatpush2.msra.mxu0 0.0
  %708 = vmatprep.subr.mxu0 0.0
  %709 = vmatpush2.msra.mxu0 0.0
  %710 = vmatprep.subr.mxu0 0.0
  %711 = vmatpush2.msra.mxu0 0.0
  %712 = vmatprep.mubr.f32.mxu0 0.0
  %713 = vmatmul.mubr.f32.gmra.mxu0 %v646
  %v714 = vpop.f32.mrf.mxu0
  %v715 = vadd.f32 0.0, %v714
  %v716 = vpop.f32.mrf.mxu0
  %717 = vdwg.mxu0
  %v718 = vadd.f32 %v199, %v715
  %v719 = vxor.u32 %v718, 2147483648
  %v720 = vmul.f32 %v719, 1.442695
  %v721 = vpow.pop %v720
  %v722 = vadd.f32 %v721, 1.0
  %v723 = vrcp.pop %v722
  %v724 = vmul.f32 1.0, %v723
  %v725 = vtanh.pop %v718
  %v726 = vmul.f32 %v724, %v629
  %728 = vrot.lane.b32.xlu0 %v725, 32
  %v729 = vpop.permute.xlu0 %728
  %v731 = vmul.f32 %v724, %v729
  %733 = vrot.lane.b32.xlu0 %v731, 32
  %v734 = vpop.permute.xlu0 %733
  %v736 = vadd.f32 %v726, %v734
  %v737 = vtanh.pop %v736
  %739 = vrot.lane.b32.xlu0 %v737, 32
  %v740 = vpop.permute.xlu0 %739
  %v742 = vmul.f32 %v724, %v740
  %v745 = vunpack.c.l.s4 1983009808
  %v746 = vunpack.c.0.s8 %v745
  %v747 = vlaneseq
  %v748 = vshrl.u32 %v747, 7
  %v749 = vsub.s32 %v746, %v748
  %v750 = vrot.slane %v742, %v749
  %751 = vrot.lane.b32.xlu0 %v750, 64
  %v752 = vpop.permute.xlu0 %751
  %v753 = vsel %vm93, %v752, 0
  %755 = vmatprep.subr.mxu0 0.0
  %756 = vmatpush1.msra.mxu0 0.0
  %757 = vmatprep.subr.mxu0 0.0
  %758 = vmatpush1.msra.mxu0 0.0
  %759 = vmatprep.subr.mxu0 0.0
  %760 = vmatpush1.msra.mxu0 0.0
  %761 = vmatprep.subr.mxu0 0.0
  %762 = vmatpush1.msra.mxu0 0.0
  %763 = vmatprep.subr.mxu0 0.0
  %764 = vmatpush1.msra.mxu0 0.0
  %765 = vmatprep.subr.mxu0 0.0
  %766 = vmatpush1.msra.mxu0 0.0
  %767 = vmatprep.subr.mxu0 0.0
  %768 = vmatpush1.msra.mxu0 0.0
  %769 = vmatprep.subr.mxu0 0.0
  %770 = vmatpush1.msra.mxu0 0.0
  %771 = vmatprep.subr.mxu0 0.0
  %772 = vmatpush1.msra.mxu0 0.0
  %773 = vmatprep.subr.mxu0 0.0
  %774 = vmatpush1.msra.mxu0 0.0
  %775 = vmatprep.subr.mxu0 0.0
  %776 = vmatpush1.msra.mxu0 0.0
  %777 = vmatprep.subr.mxu0 0.0
  %778 = vmatpush1.msra.mxu0 0.0
  %779 = vmatprep.subr.mxu0 0.0
  %780 = vmatpush1.msra.mxu0 %v43
  %781 = vmatprep.subr.mxu0 0.0
  %782 = vmatpush1.msra.mxu0 %v42
  %783 = vmatprep.subr.mxu0 0.0
  %784 = vmatpush1.msra.mxu0 %v41
  %785 = vmatprep.subr.mxu0 0.0
  %786 = vmatpush1.msra.mxu0 %v40
  %787 = vmatprep.subr.mxu0 0.0
  %788 = vmatpush2.msra.mxu0 0.0
  %789 = vmatprep.subr.mxu0 0.0
  %790 = vmatpush2.msra.mxu0 0.0
  %791 = vmatprep.subr.mxu0 0.0
  %792 = vmatpush2.msra.mxu0 0.0
  %793 = vmatprep.subr.mxu0 0.0
  %794 = vmatpush2.msra.mxu0 0.0
  %795 = vmatprep.subr.mxu0 0.0
  %796 = vmatpush2.msra.mxu0 0.0
  %797 = vmatprep.subr.mxu0 0.0
  %798 = vmatpush2.msra.mxu0 0.0
  %799 = vmatprep.subr.mxu0 0.0
  %800 = vmatpush2.msra.mxu0 0.0
  %801 = vmatprep.subr.mxu0 0.0
  %802 = vmatpush2.msra.mxu0 0.0
  %803 = vmatprep.subr.mxu0 0.0
  %804 = vmatpush2.msra.mxu0 0.0
  %805 = vmatprep.subr.mxu0 0.0
  %806 = vmatpush2.msra.mxu0 0.0
  %807 = vmatprep.subr.mxu0 0.0
  %808 = vmatpush2.msra.mxu0 0.0
  %809 = vmatprep.subr.mxu0 0.0
  %810 = vmatpush2.msra.mxu0 0.0
  %811 = vmatprep.subr.mxu0 0.0
  %812 = vmatpush2.msra.mxu0 0.0
  %813 = vmatprep.subr.mxu0 0.0
  %814 = vmatpush2.msra.mxu0 0.0
  %815 = vmatprep.subr.mxu0 0.0
  %816 = vmatpush2.msra.mxu0 0.0
  %817 = vmatprep.subr.mxu0 0.0
  %818 = vmatpush2.msra.mxu0 0.0
  %819 = vmatprep.mubr.f32.mxu0 0.0
  %820 = vmatmul.mubr.f32.gmra.mxu0 %v753
  %v821 = vpop.f32.mrf.mxu0
  %v822 = vadd.f32 0.0, %v821
  %v823 = vpop.f32.mrf.mxu0
  %824 = vdwg.mxu0
  %v825 = vadd.f32 %v207, %v822
  %v826 = vxor.u32 %v825, 2147483648
  %v827 = vmul.f32 %v826, 1.442695
  %v828 = vpow.pop %v827
  %v829 = vadd.f32 %v828, 1.0
  %v830 = vrcp.pop %v829
  %v831 = vmul.f32 1.0, %v830
  %v832 = vtanh.pop %v825
  %v833 = vmul.f32 %v831, %v736
  %835 = vrot.lane.b32.xlu0 %v832, 32
  %v836 = vpop.permute.xlu0 %835
  %v838 = vmul.f32 %v831, %v836
  %840 = vrot.lane.b32.xlu0 %v838, 32
  %v841 = vpop.permute.xlu0 %840
  %v843 = vadd.f32 %v833, %v841
  %v844 = vtanh.pop %v843
  %846 = vrot.lane.b32.xlu0 %v844, 32
  %v847 = vpop.permute.xlu0 %846
  %v849 = vmul.f32 %v831, %v847
  %v852 = vunpack.c.l.s4 1983009808
  %v853 = vunpack.c.0.s8 %v852
  %v854 = vlaneseq
  %v855 = vshrl.u32 %v854, 7
  %v856 = vsub.s32 %v853, %v855
  %v857 = vrot.slane %v849, %v856
  %858 = vrot.lane.b32.xlu0 %v857, 64
  %v859 = vpop.permute.xlu0 %858
  %v860 = vsel %vm93, %v859, 0
  %862 = vmatprep.subr.mxu0 0.0
  %863 = vmatpush1.msra.mxu0 0.0
  %864 = vmatprep.subr.mxu0 0.0
  %865 = vmatpush1.msra.mxu0 0.0
  %866 = vmatprep.subr.mxu0 0.0
  %867 = vmatpush1.msra.mxu0 0.0
  %868 = vmatprep.subr.mxu0 0.0
  %869 = vmatpush1.msra.mxu0 0.0
  %870 = vmatprep.subr.mxu0 0.0
  %871 = vmatpush1.msra.mxu0 0.0
  %872 = vmatprep.subr.mxu0 0.0
  %873 = vmatpush1.msra.mxu0 0.0
  %874 = vmatprep.subr.mxu0 0.0
  %875 = vmatpush1.msra.mxu0 0.0
  %876 = vmatprep.subr.mxu0 0.0
  %877 = vmatpush1.msra.mxu0 0.0
  %878 = vmatprep.subr.mxu0 0.0
  %879 = vmatpush1.msra.mxu0 0.0
  %880 = vmatprep.subr.mxu0 0.0
  %881 = vmatpush1.msra.mxu0 0.0
  %882 = vmatprep.subr.mxu0 0.0
  %883 = vmatpush1.msra.mxu0 0.0
  %884 = vmatprep.subr.mxu0 0.0
  %885 = vmatpush1.msra.mxu0 0.0
  %886 = vmatprep.subr.mxu0 0.0
  %887 = vmatpush1.msra.mxu0 %v43
  %888 = vmatprep.subr.mxu0 0.0
  %889 = vmatpush1.msra.mxu0 %v42
  %890 = vmatprep.subr.mxu0 0.0
  %891 = vmatpush1.msra.mxu0 %v41
  %892 = vmatprep.subr.mxu0 0.0
  %893 = vmatpush1.msra.mxu0 %v40
  %894 = vmatprep.subr.mxu0 0.0
  %895 = vmatpush2.msra.mxu0 0.0
  %896 = vmatprep.subr.mxu0 0.0
  %897 = vmatpush2.msra.mxu0 0.0
  %898 = vmatprep.subr.mxu0 0.0
  %899 = vmatpush2.msra.mxu0 0.0
  %900 = vmatprep.subr.mxu0 0.0
  %901 = vmatpush2.msra.mxu0 0.0
  %902 = vmatprep.subr.mxu0 0.0
  %903 = vmatpush2.msra.mxu0 0.0
  %904 = vmatprep.subr.mxu0 0.0
  %905 = vmatpush2.msra.mxu0 0.0
  %906 = vmatprep.subr.mxu0 0.0
  %907 = vmatpush2.msra.mxu0 0.0
  %908 = vmatprep.subr.mxu0 0.0
  %909 = vmatpush2.msra.mxu0 0.0
  %910 = vmatprep.subr.mxu0 0.0
  %911 = vmatpush2.msra.mxu0 0.0
  %912 = vmatprep.subr.mxu0 0.0
  %913 = vmatpush2.msra.mxu0 0.0
  %914 = vmatprep.subr.mxu0 0.0
  %915 = vmatpush2.msra.mxu0 0.0
  %916 = vmatprep.subr.mxu0 0.0
  %917 = vmatpush2.msra.mxu0 0.0
  %918 = vmatprep.subr.mxu0 0.0
  %919 = vmatpush2.msra.mxu0 0.0
  %920 = vmatprep.subr.mxu0 0.0
  %921 = vmatpush2.msra.mxu0 0.0
  %922 = vmatprep.subr.mxu0 0.0
  %923 = vmatpush2.msra.mxu0 0.0
  %924 = vmatprep.subr.mxu0 0.0
  %925 = vmatpush2.msra.mxu0 0.0
  %926 = vmatprep.mubr.f32.mxu0 0.0
  %927 = vmatmul.mubr.f32.gmra.mxu0 %v860
  %v928 = vpop.f32.mrf.mxu0
  %v929 = vadd.f32 0.0, %v928
  %v930 = vpop.f32.mrf.mxu0
  %931 = vdwg.mxu0
  %v932 = vadd.f32 %v206, %v929
  %v933 = vxor.u32 %v932, 2147483648
  %v934 = vmul.f32 %v933, 1.442695
  %v935 = vpow.pop %v934
  %v936 = vadd.f32 %v935, 1.0
  %v937 = vrcp.pop %v936
  %v938 = vmul.f32 1.0, %v937
  %v939 = vtanh.pop %v932
  %v940 = vmul.f32 %v938, %v843
  %942 = vrot.lane.b32.xlu0 %v939, 32
  %v943 = vpop.permute.xlu0 %942
  %v945 = vmul.f32 %v938, %v943
  %947 = vrot.lane.b32.xlu0 %v945, 32
  %v948 = vpop.permute.xlu0 %947
  %v950 = vadd.f32 %v940, %v948
  %v951 = vtanh.pop %v950
  %953 = vrot.lane.b32.xlu0 %v951, 32
  %v954 = vpop.permute.xlu0 %953
  %v956 = vmul.f32 %v938, %v954
  %v959 = vunpack.c.l.s4 1983009808
  %v960 = vunpack.c.0.s8 %v959
  %v961 = vlaneseq
  %v962 = vshrl.u32 %v961, 7
  %v963 = vsub.s32 %v960, %v962
  %v964 = vrot.slane %v956, %v963
  %965 = vrot.lane.b32.xlu0 %v964, 64
  %v966 = vpop.permute.xlu0 %965
  %v967 = vsel %vm93, %v966, 0
  %969 = vmatprep.subr.mxu0 0.0
  %970 = vmatpush1.msra.mxu0 0.0
  %971 = vmatprep.subr.mxu0 0.0
  %972 = vmatpush1.msra.mxu0 0.0
  %973 = vmatprep.subr.mxu0 0.0
  %974 = vmatpush1.msra.mxu0 0.0
  %975 = vmatprep.subr.mxu0 0.0
  %976 = vmatpush1.msra.mxu0 0.0
  %977 = vmatprep.subr.mxu0 0.0
  %978 = vmatpush1.msra.mxu0 0.0
  %979 = vmatprep.subr.mxu0 0.0
  %980 = vmatpush1.msra.mxu0 0.0
  %981 = vmatprep.subr.mxu0 0.0
  %982 = vmatpush1.msra.mxu0 0.0
  %983 = vmatprep.subr.mxu0 0.0
  %984 = vmatpush1.msra.mxu0 0.0
  %985 = vmatprep.subr.mxu0 0.0
  %986 = vmatpush1.msra.mxu0 0.0
  %987 = vmatprep.subr.mxu0 0.0
  %988 = vmatpush1.msra.mxu0 0.0
  %989 = vmatprep.subr.mxu0 0.0
  %990 = vmatpush1.msra.mxu0 0.0
  %991 = vmatprep.subr.mxu0 0.0
  %992 = vmatpush1.msra.mxu0 0.0
  %993 = vmatprep.subr.mxu0 0.0
  %994 = vmatpush1.msra.mxu0 %v43
  %995 = vmatprep.subr.mxu0 0.0
  %996 = vmatpush1.msra.mxu0 %v42
  %997 = vmatprep.subr.mxu0 0.0
  %998 = vmatpush1.msra.mxu0 %v41
  %999 = vmatprep.subr.mxu0 0.0
  %1000 = vmatpush1.msra.mxu0 %v40
  %1001 = vmatprep.subr.mxu0 0.0
  %1002 = vmatpush2.msra.mxu0 0.0
  %1003 = vmatprep.subr.mxu0 0.0
  %1004 = vmatpush2.msra.mxu0 0.0
  %1005 = vmatprep.subr.mxu0 0.0
  %1006 = vmatpush2.msra.mxu0 0.0
  %1007 = vmatprep.subr.mxu0 0.0
  %1008 = vmatpush2.msra.mxu0 0.0
  %1009 = vmatprep.subr.mxu0 0.0
  %1010 = vmatpush2.msra.mxu0 0.0
  %1011 = vmatprep.subr.mxu0 0.0
  %1012 = vmatpush2.msra.mxu0 0.0
  %1013 = vmatprep.subr.mxu0 0.0
  %1014 = vmatpush2.msra.mxu0 0.0
  %1015 = vmatprep.subr.mxu0 0.0
  %1016 = vmatpush2.msra.mxu0 0.0
  %1017 = vmatprep.subr.mxu0 0.0
  %1018 = vmatpush2.msra.mxu0 0.0
  %1019 = vmatprep.subr.mxu0 0.0
  %1020 = vmatpush2.msra.mxu0 0.0
  %1021 = vmatprep.subr.mxu0 0.0
  %1022 = vmatpush2.msra.mxu0 0.0
  %1023 = vmatprep.subr.mxu0 0.0
  %1024 = vmatpush2.msra.mxu0 0.0
  %1025 = vmatprep.subr.mxu0 0.0
  %1026 = vmatpush2.msra.mxu0 0.0
  %1027 = vmatprep.subr.mxu0 0.0
  %1028 = vmatpush2.msra.mxu0 0.0
  %1029 = vmatprep.subr.mxu0 0.0
  %1030 = vmatpush2.msra.mxu0 0.0
  %1031 = vmatprep.subr.mxu0 0.0
  %1032 = vmatpush2.msra.mxu0 0.0
  %1033 = vmatprep.mubr.f32.mxu0 0.0
  %1034 = vmatmul.mubr.f32.gmra.mxu0 %v967
  %v1035 = vpop.f32.mrf.mxu0
  %v1036 = vadd.f32 0.0, %v1035
  %v1037 = vpop.f32.mrf.mxu0
  %1038 = vdwg.mxu0
  %v1039 = vadd.f32 %v208, %v1036
  %v1040 = vxor.u32 %v1039, 2147483648
  %v1041 = vmul.f32 %v1040, 1.442695
  %v1042 = vpow.pop %v1041
  %v1043 = vadd.f32 %v1042, 1.0
  %v1044 = vrcp.pop %v1043
  %v1045 = vmul.f32 1.0, %v1044
  %v1046 = vtanh.pop %v1039
  %v1047 = vmul.f32 %v1045, %v950
  %1049 = vrot.lane.b32.xlu0 %v1046, 32
  %v1050 = vpop.permute.xlu0 %1049
  %v1052 = vmul.f32 %v1045, %v1050
  %1054 = vrot.lane.b32.xlu0 %v1052, 32
  %v1055 = vpop.permute.xlu0 %1054
  %v1057 = vadd.f32 %v1047, %v1055
  %v1058 = vtanh.pop %v1057
  %1060 = vrot.lane.b32.xlu0 %v1058, 32
  %v1061 = vpop.permute.xlu0 %1060
  %v1063 = vmul.f32 %v1045, %v1061
  %v1066 = vunpack.c.l.s4 1983009808
  %v1067 = vunpack.c.0.s8 %v1066
  %v1068 = vlaneseq
  %v1069 = vshrl.u32 %v1068, 7
  %v1070 = vsub.s32 %v1067, %v1069
  %v1071 = vrot.slane %v1063, %v1070
  %1072 = vrot.lane.b32.xlu0 %v1071, 64
  %v1073 = vpop.permute.xlu0 %1072
  %vm1075 = vcmask 254976
  %1076 = vst.msk [vmem:[%s7] sm:$0x3] %vm1075, %v1073
  %v1079 = vunpack.c.l.s4 1983009808
  %v1080 = vunpack.c.0.s8 %v1079
  %v1081 = vlaneseq
  %v1082 = vshrl.u32 %v1081, 7
  %v1083 = vsub.s32 %v1080, %v1082
  %v1084 = vrot.slane %v1057, %v1083
  %1085 = vrot.lane.b32.xlu0 %v1084, 96
  %v1086 = vpop.permute.xlu0 %1085
  %1088 = vst.msk [vmem:[%s8] sm:$0x3] %vm1075, %v1086
  %v1089 = vld [vmem:[%s4] sm:$0xff]
  %v1090 = vld [vmem:[%s4 + $0x8] sm:$0xff]
  %v1091 = vld [vmem:[%s4 + $0x10] sm:$0xff]
  %v1092 = vld [vmem:[%s4 + $0x18] sm:$0xff]
  %v1093 = vld [vmem:[%s5] sm:$0xff]
  %v1094 = vld [vmem:[%s5 + $0x8] sm:$0xff]
  %v1095 = vld [vmem:[%s5 + $0x10] sm:$0xff]
  %v1096 = vld [vmem:[%s5 + $0x18] sm:$0xff]
  %v1097 = vld [vmem:[%s6] sm:$0x1]
  %v1099 = vlaneseq
  %v1100 = vshrl.u32 %v1099, 7
  %v1101 = vsub.s32 0, %v1100
  %v1102 = vrot.slane %v1097, %v1101
  %v1104 = vcombine.low %v314, %v421
  %v1105 = vcombine.low %v528, %v635
  %v1107 = vunpack.c.l.s4 1983009808
  %v1108 = vunpack.c.0.s8 %v1107
  %v1109 = vlaneseq
  %v1110 = vshrl.u32 %v1109, 7
  %v1111 = vsub.s32 %v1108, %v1110
  %v1112 = vrot.slane %v1104, %v1111
  %v1114 = vunpack.c.l.s4 1983009808
  %v1115 = vunpack.c.0.s8 %v1114
  %v1116 = vlaneseq
  %v1117 = vshrl.u32 %v1116, 7
  %v1118 = vsub.s32 %v1115, %v1117
  %v1119 = vrot.slane %v1105, %v1118
  %v1120 = vcombine.low %v1112, %v1119
  %v1121 = vcombine.low %v742, %v849
  %v1122 = vcombine.low %v956, %v1063
  %v1124 = vunpack.c.l.s4 1983009808
  %v1125 = vunpack.c.0.s8 %v1124
  %v1126 = vlaneseq
  %v1127 = vshrl.u32 %v1126, 7
  %v1128 = vsub.s32 %v1125, %v1127
  %v1129 = vrot.slane %v1121, %v1128
  %v1131 = vunpack.c.l.s4 1983009808
  %v1132 = vunpack.c.0.s8 %v1131
  %v1133 = vlaneseq
  %v1134 = vshrl.u32 %v1133, 7
  %v1135 = vsub.s32 %v1132, %v1134
  %v1136 = vrot.slane %v1122, %v1135
  %v1137 = vcombine.low %v1129, %v1136
  %1138 = vrot.lane.b32.xlu0 %v1120, 64
  %v1139 = vpop.permute.xlu0 %1138
  %1140 = vrot.lane.b32.xlu0 %v1137, 64
  %v1141 = vpop.permute.xlu0 %1140
  %v1142 = vsel %vm93, %v1139, 0
  %v1144 = vsel %vm93, %v1141, 0
  %1146 = vmatprep.subr.mxu0 0.0
  %1147 = vmatpush1.msra.mxu0 0.0
  %1148 = vmatprep.subr.mxu0 0.0
  %1149 = vmatpush1.msra.mxu0 0.0
  %1150 = vmatprep.subr.mxu0 0.0
  %1151 = vmatpush1.msra.mxu0 0.0
  %1152 = vmatprep.subr.mxu0 0.0
  %1153 = vmatpush1.msra.mxu0 0.0
  %1154 = vmatprep.subr.mxu0 0.0
  %1155 = vmatpush1.msra.mxu0 0.0
  %1156 = vmatprep.subr.mxu0 0.0
  %1157 = vmatpush1.msra.mxu0 0.0
  %1158 = vmatprep.subr.mxu0 0.0
  %1159 = vmatpush1.msra.mxu0 0.0
  %1160 = vmatprep.subr.mxu0 0.0
  %1161 = vmatpush1.msra.mxu0 0.0
  %1162 = vmatprep.subr.mxu0 0.0
  %1163 = vmatpush1.msra.mxu0 0.0
  %1164 = vmatprep.subr.mxu0 0.0
  %1165 = vmatpush1.msra.mxu0 0.0
  %1166 = vmatprep.subr.mxu0 0.0
  %1167 = vmatpush1.msra.mxu0 0.0
  %1168 = vmatprep.subr.mxu0 0.0
  %1169 = vmatpush1.msra.mxu0 0.0
  %1170 = vmatprep.subr.mxu0 0.0
  %1171 = vmatpush1.msra.mxu0 %v1092
  %1172 = vmatprep.subr.mxu0 0.0
  %1173 = vmatpush1.msra.mxu0 %v1091
  %1174 = vmatprep.subr.mxu0 0.0
  %1175 = vmatpush1.msra.mxu0 %v1090
  %1176 = vmatprep.subr.mxu0 0.0
  %1177 = vmatpush1.msra.mxu0 %v1089
  %1178 = vmatprep.subr.mxu0 0.0
  %1179 = vmatpush2.msra.mxu0 0.0
  %1180 = vmatprep.subr.mxu0 0.0
  %1181 = vmatpush2.msra.mxu0 0.0
  %1182 = vmatprep.subr.mxu0 0.0
  %1183 = vmatpush2.msra.mxu0 0.0
  %1184 = vmatprep.subr.mxu0 0.0
  %1185 = vmatpush2.msra.mxu0 0.0
  %1186 = vmatprep.subr.mxu0 0.0
  %1187 = vmatpush2.msra.mxu0 0.0
  %1188 = vmatprep.subr.mxu0 0.0
  %1189 = vmatpush2.msra.mxu0 0.0
  %1190 = vmatprep.subr.mxu0 0.0
  %1191 = vmatpush2.msra.mxu0 0.0
  %1192 = vmatprep.subr.mxu0 0.0
  %1193 = vmatpush2.msra.mxu0 0.0
  %1194 = vmatprep.subr.mxu0 0.0
  %1195 = vmatpush2.msra.mxu0 0.0
  %1196 = vmatprep.subr.mxu0 0.0
  %1197 = vmatpush2.msra.mxu0 0.0
  %1198 = vmatprep.subr.mxu0 0.0
  %1199 = vmatpush2.msra.mxu0 0.0
  %1200 = vmatprep.subr.mxu0 0.0
  %1201 = vmatpush2.msra.mxu0 0.0
  %1202 = vmatprep.subr.mxu0 0.0
  %1203 = vmatpush2.msra.mxu0 0.0
  %1204 = vmatprep.subr.mxu0 0.0
  %1205 = vmatpush2.msra.mxu0 0.0
  %1206 = vmatprep.subr.mxu0 0.0
  %1207 = vmatpush2.msra.mxu0 0.0
  %1208 = vmatprep.subr.mxu0 0.0
  %1209 = vmatpush2.msra.mxu0 0.0
  %1210 = vmatprep.mubr.f32.mxu0 0.0
  %1211 = vmatmul.mubr.f32.gmra.mxu0 %v1142
  %v1212 = vpop.f32.mrf.mxu0
  %v1213 = vadd.f32 %v1102, %v1212
  %v1214 = vpop.f32.mrf.mxu0
  %1215 = vmatprep.mubr.f32.mxu0 0.0
  %1216 = vmatmul.mubr.f32.gmra.mxu0 %v1144
  %v1217 = vpop.f32.mrf.mxu0
  %v1218 = vadd.f32 %v1102, %v1217
  %v1219 = vpop.f32.mrf.mxu0
  %1220 = vdwg.mxu0
  %v1223 = vcombine.high %v1213, %v1213
  %v1225 = vunpack.c.l.s4 1983009808
  %v1226 = vunpack.c.0.s8 %v1225
  %v1227 = vlaneseq
  %v1228 = vshrl.u32 %v1227, 7
  %v1229 = vsub.s32 %v1226, %v1228
  %v1230 = vrot.slane %v1213, %v1229
  %v1232 = vunpack.c.l.s4 1983009808
  %v1233 = vunpack.c.0.s8 %v1232
  %v1234 = vlaneseq
  %v1235 = vshrl.u32 %v1234, 7
  %v1236 = vsub.s32 %v1233, %v1235
  %v1237 = vrot.slane %v1223, %v1236
  %v1238 = vcombine.high %v1230, %v1230
  %v1239 = vcombine.high %v1237, %v1237
  %v1240 = vcombine.high %v1218, %v1218
  %v1242 = vunpack.c.l.s4 1983009808
  %v1243 = vunpack.c.0.s8 %v1242
  %v1244 = vlaneseq
  %v1245 = vshrl.u32 %v1244, 7
  %v1246 = vsub.s32 %v1243, %v1245
  %v1247 = vrot.slane %v1218, %v1246
  %v1249 = vunpack.c.l.s4 1983009808
  %v1250 = vunpack.c.0.s8 %v1249
  %v1251 = vlaneseq
  %v1252 = vshrl.u32 %v1251, 7
  %v1253 = vsub.s32 %v1250, %v1252
  %v1254 = vrot.slane %v1240, %v1253
  %v1255 = vcombine.high %v1247, %v1247
  %v1256 = vcombine.high %v1254, %v1254
  %1265 = vmatprep.subr.mxu0 0.0
  %1266 = vmatpush1.msra.mxu0 0.0
  %1267 = vmatprep.subr.mxu0 0.0
  %1268 = vmatpush1.msra.mxu0 0.0
  %1269 = vmatprep.subr.mxu0 0.0
  %1270 = vmatpush1.msra.mxu0 0.0
  %1271 = vmatprep.subr.mxu0 0.0
  %1272 = vmatpush1.msra.mxu0 0.0
  %1273 = vmatprep.subr.mxu0 0.0
  %1274 = vmatpush1.msra.mxu0 0.0
  %1275 = vmatprep.subr.mxu0 0.0
  %1276 = vmatpush1.msra.mxu0 0.0
  %1277 = vmatprep.subr.mxu0 0.0
  %1278 = vmatpush1.msra.mxu0 0.0
  %1279 = vmatprep.subr.mxu0 0.0
  %1280 = vmatpush1.msra.mxu0 0.0
  %1281 = vmatprep.subr.mxu0 0.0
  %1282 = vmatpush1.msra.mxu0 0.0
  %1283 = vmatprep.subr.mxu0 0.0
  %1284 = vmatpush1.msra.mxu0 0.0
  %1285 = vmatprep.subr.mxu0 0.0
  %1286 = vmatpush1.msra.mxu0 0.0
  %1287 = vmatprep.subr.mxu0 0.0
  %1288 = vmatpush1.msra.mxu0 0.0
  %1289 = vmatprep.subr.mxu0 0.0
  %1290 = vmatpush1.msra.mxu0 %v1096
  %1291 = vmatprep.subr.mxu0 0.0
  %1292 = vmatpush1.msra.mxu0 %v1095
  %1293 = vmatprep.subr.mxu0 0.0
  %1294 = vmatpush1.msra.mxu0 %v1094
  %1295 = vmatprep.subr.mxu0 0.0
  %1296 = vmatpush1.msra.mxu0 %v1093
  %1297 = vmatprep.subr.mxu0 0.0
  %1298 = vmatpush2.msra.mxu0 0.0
  %1299 = vmatprep.subr.mxu0 0.0
  %1300 = vmatpush2.msra.mxu0 0.0
  %1301 = vmatprep.subr.mxu0 0.0
  %1302 = vmatpush2.msra.mxu0 0.0
  %1303 = vmatprep.subr.mxu0 0.0
  %1304 = vmatpush2.msra.mxu0 0.0
  %1305 = vmatprep.subr.mxu0 0.0
  %1306 = vmatpush2.msra.mxu0 0.0
  %1307 = vmatprep.subr.mxu0 0.0
  %1308 = vmatpush2.msra.mxu0 0.0
  %1309 = vmatprep.subr.mxu0 0.0
  %1310 = vmatpush2.msra.mxu0 0.0
  %1311 = vmatprep.subr.mxu0 0.0
  %1312 = vmatpush2.msra.mxu0 0.0
  %1313 = vmatprep.subr.mxu0 0.0
  %1314 = vmatpush2.msra.mxu0 0.0
  %1315 = vmatprep.subr.mxu0 0.0
  %1316 = vmatpush2.msra.mxu0 0.0
  %1317 = vmatprep.subr.mxu0 0.0
  %1318 = vmatpush2.msra.mxu0 0.0
  %1319 = vmatprep.subr.mxu0 0.0
  %1320 = vmatpush2.msra.mxu0 0.0
  %1321 = vmatprep.subr.mxu0 0.0
  %1322 = vmatpush2.msra.mxu0 0.0
  %1323 = vmatprep.subr.mxu0 0.0
  %1324 = vmatpush2.msra.mxu0 0.0
  %1325 = vmatprep.subr.mxu0 0.0
  %1326 = vmatpush2.msra.mxu0 0.0
  %1327 = vmatprep.subr.mxu0 0.0
  %1328 = vmatpush2.msra.mxu0 0.0
  %1329 = vmatprep.mubr.f32.mxu0 0.0
  %1330 = vmatmul.mubr.f32.gmra.mxu0 %v218
  %v1331 = vpop.f32.mrf.mxu0
  %v1332 = vadd.f32 0.0, %v1331
  %v1333 = vpop.f32.mrf.mxu0
  %1334 = vdwg.mxu0
  %v1335 = vadd.f32 %v1230, %v1332
  %v1336 = vxor.u32 %v1335, 2147483648
  %v1337 = vmul.f32 %v1336, 1.442695
  %v1338 = vpow.pop %v1337
  %v1339 = vadd.f32 %v1338, 1.0
  %v1340 = vrcp.pop %v1339
  %v1341 = vmul.f32 1.0, %v1340
  %v1342 = vtanh.pop %v1335
  %v1343 = vmul.f32 %v1341, 0.0
  %1345 = vrot.lane.b32.xlu0 %v1342, 32
  %v1346 = vpop.permute.xlu0 %1345
  %v1348 = vmul.f32 %v1341, %v1346
  %1350 = vrot.lane.b32.xlu0 %v1348, 32
  %v1351 = vpop.permute.xlu0 %1350
  %v1353 = vadd.f32 %v1343, %v1351
  %v1354 = vtanh.pop %v1353
  %1356 = vrot.lane.b32.xlu0 %v1354, 32
  %v1357 = vpop.permute.xlu0 %1356
  %v1359 = vmul.f32 %v1341, %v1357
  %v1362 = vunpack.c.l.s4 1983009808
  %v1363 = vunpack.c.0.s8 %v1362
  %v1364 = vlaneseq
  %v1365 = vshrl.u32 %v1364, 7
  %v1366 = vsub.s32 %v1363, %v1365
  %v1367 = vrot.slane %v1359, %v1366
  %1368 = vrot.lane.b32.xlu0 %v1367, 64
  %v1369 = vpop.permute.xlu0 %1368
  %v1370 = vsel %vm93, %v1369, 0
  %1372 = vmatprep.subr.mxu0 0.0
  %1373 = vmatpush1.msra.mxu0 0.0
  %1374 = vmatprep.subr.mxu0 0.0
  %1375 = vmatpush1.msra.mxu0 0.0
  %1376 = vmatprep.subr.mxu0 0.0
  %1377 = vmatpush1.msra.mxu0 0.0
  %1378 = vmatprep.subr.mxu0 0.0
  %1379 = vmatpush1.msra.mxu0 0.0
  %1380 = vmatprep.subr.mxu0 0.0
  %1381 = vmatpush1.msra.mxu0 0.0
  %1382 = vmatprep.subr.mxu0 0.0
  %1383 = vmatpush1.msra.mxu0 0.0
  %1384 = vmatprep.subr.mxu0 0.0
  %1385 = vmatpush1.msra.mxu0 0.0
  %1386 = vmatprep.subr.mxu0 0.0
  %1387 = vmatpush1.msra.mxu0 0.0
  %1388 = vmatprep.subr.mxu0 0.0
  %1389 = vmatpush1.msra.mxu0 0.0
  %1390 = vmatprep.subr.mxu0 0.0
  %1391 = vmatpush1.msra.mxu0 0.0
  %1392 = vmatprep.subr.mxu0 0.0
  %1393 = vmatpush1.msra.mxu0 0.0
  %1394 = vmatprep.subr.mxu0 0.0
  %1395 = vmatpush1.msra.mxu0 0.0
  %1396 = vmatprep.subr.mxu0 0.0
  %1397 = vmatpush1.msra.mxu0 %v1096
  %1398 = vmatprep.subr.mxu0 0.0
  %1399 = vmatpush1.msra.mxu0 %v1095
  %1400 = vmatprep.subr.mxu0 0.0
  %1401 = vmatpush1.msra.mxu0 %v1094
  %1402 = vmatprep.subr.mxu0 0.0
  %1403 = vmatpush1.msra.mxu0 %v1093
  %1404 = vmatprep.subr.mxu0 0.0
  %1405 = vmatpush2.msra.mxu0 0.0
  %1406 = vmatprep.subr.mxu0 0.0
  %1407 = vmatpush2.msra.mxu0 0.0
  %1408 = vmatprep.subr.mxu0 0.0
  %1409 = vmatpush2.msra.mxu0 0.0
  %1410 = vmatprep.subr.mxu0 0.0
  %1411 = vmatpush2.msra.mxu0 0.0
  %1412 = vmatprep.subr.mxu0 0.0
  %1413 = vmatpush2.msra.mxu0 0.0
  %1414 = vmatprep.subr.mxu0 0.0
  %1415 = vmatpush2.msra.mxu0 0.0
  %1416 = vmatprep.subr.mxu0 0.0
  %1417 = vmatpush2.msra.mxu0 0.0
  %1418 = vmatprep.subr.mxu0 0.0
  %1419 = vmatpush2.msra.mxu0 0.0
  %1420 = vmatprep.subr.mxu0 0.0
  %1421 = vmatpush2.msra.mxu0 0.0
  %1422 = vmatprep.subr.mxu0 0.0
  %1423 = vmatpush2.msra.mxu0 0.0
  %1424 = vmatprep.subr.mxu0 0.0
  %1425 = vmatpush2.msra.mxu0 0.0
  %1426 = vmatprep.subr.mxu0 0.0
  %1427 = vmatpush2.msra.mxu0 0.0
  %1428 = vmatprep.subr.mxu0 0.0
  %1429 = vmatpush2.msra.mxu0 0.0
  %1430 = vmatprep.subr.mxu0 0.0
  %1431 = vmatpush2.msra.mxu0 0.0
  %1432 = vmatprep.subr.mxu0 0.0
  %1433 = vmatpush2.msra.mxu0 0.0
  %1434 = vmatprep.subr.mxu0 0.0
  %1435 = vmatpush2.msra.mxu0 0.0
  %1436 = vmatprep.mubr.f32.mxu0 0.0
  %1437 = vmatmul.mubr.f32.gmra.mxu0 %v1370
  %v1438 = vpop.f32.mrf.mxu0
  %v1439 = vadd.f32 0.0, %v1438
  %v1440 = vpop.f32.mrf.mxu0
  %1441 = vdwg.mxu0
  %v1442 = vadd.f32 %v1238, %v1439
  %v1443 = vxor.u32 %v1442, 2147483648
  %v1444 = vmul.f32 %v1443, 1.442695
  %v1445 = vpow.pop %v1444
  %v1446 = vadd.f32 %v1445, 1.0
  %v1447 = vrcp.pop %v1446
  %v1448 = vmul.f32 1.0, %v1447
  %v1449 = vtanh.pop %v1442
  %v1450 = vmul.f32 %v1448, %v1353
  %1452 = vrot.lane.b32.xlu0 %v1449, 32
  %v1453 = vpop.permute.xlu0 %1452
  %v1455 = vmul.f32 %v1448, %v1453
  %1457 = vrot.lane.b32.xlu0 %v1455, 32
  %v1458 = vpop.permute.xlu0 %1457
  %v1460 = vadd.f32 %v1450, %v1458
  %v1461 = vtanh.pop %v1460
  %1463 = vrot.lane.b32.xlu0 %v1461, 32
  %v1464 = vpop.permute.xlu0 %1463
  %v1466 = vmul.f32 %v1448, %v1464
  %v1469 = vunpack.c.l.s4 1983009808
  %v1470 = vunpack.c.0.s8 %v1469
  %v1471 = vlaneseq
  %v1472 = vshrl.u32 %v1471, 7
  %v1473 = vsub.s32 %v1470, %v1472
  %v1474 = vrot.slane %v1466, %v1473
  %1475 = vrot.lane.b32.xlu0 %v1474, 64
  %v1476 = vpop.permute.xlu0 %1475
  %v1477 = vsel %vm93, %v1476, 0
  %1479 = vmatprep.subr.mxu0 0.0
  %1480 = vmatpush1.msra.mxu0 0.0
  %1481 = vmatprep.subr.mxu0 0.0
  %1482 = vmatpush1.msra.mxu0 0.0
  %1483 = vmatprep.subr.mxu0 0.0
  %1484 = vmatpush1.msra.mxu0 0.0
  %1485 = vmatprep.subr.mxu0 0.0
  %1486 = vmatpush1.msra.mxu0 0.0
  %1487 = vmatprep.subr.mxu0 0.0
  %1488 = vmatpush1.msra.mxu0 0.0
  %1489 = vmatprep.subr.mxu0 0.0
  %1490 = vmatpush1.msra.mxu0 0.0
  %1491 = vmatprep.subr.mxu0 0.0
  %1492 = vmatpush1.msra.mxu0 0.0
  %1493 = vmatprep.subr.mxu0 0.0
  %1494 = vmatpush1.msra.mxu0 0.0
  %1495 = vmatprep.subr.mxu0 0.0
  %1496 = vmatpush1.msra.mxu0 0.0
  %1497 = vmatprep.subr.mxu0 0.0
  %1498 = vmatpush1.msra.mxu0 0.0
  %1499 = vmatprep.subr.mxu0 0.0
  %1500 = vmatpush1.msra.mxu0 0.0
  %1501 = vmatprep.subr.mxu0 0.0
  %1502 = vmatpush1.msra.mxu0 0.0
  %1503 = vmatprep.subr.mxu0 0.0
  %1504 = vmatpush1.msra.mxu0 %v1096
  %1505 = vmatprep.subr.mxu0 0.0
  %1506 = vmatpush1.msra.mxu0 %v1095
  %1507 = vmatprep.subr.mxu0 0.0
  %1508 = vmatpush1.msra.mxu0 %v1094
  %1509 = vmatprep.subr.mxu0 0.0
  %1510 = vmatpush1.msra.mxu0 %v1093
  %1511 = vmatprep.subr.mxu0 0.0
  %1512 = vmatpush2.msra.mxu0 0.0
  %1513 = vmatprep.subr.mxu0 0.0
  %1514 = vmatpush2.msra.mxu0 0.0
  %1515 = vmatprep.subr.mxu0 0.0
  %1516 = vmatpush2.msra.mxu0 0.0
  %1517 = vmatprep.subr.mxu0 0.0
  %1518 = vmatpush2.msra.mxu0 0.0
  %1519 = vmatprep.subr.mxu0 0.0
  %1520 = vmatpush2.msra.mxu0 0.0
  %1521 = vmatprep.subr.mxu0 0.0
  %1522 = vmatpush2.msra.mxu0 0.0
  %1523 = vmatprep.subr.mxu0 0.0
  %1524 = vmatpush2.msra.mxu0 0.0
  %1525 = vmatprep.subr.mxu0 0.0
  %1526 = vmatpush2.msra.mxu0 0.0
  %1527 = vmatprep.subr.mxu0 0.0
  %1528 = vmatpush2.msra.mxu0 0.0
  %1529 = vmatprep.subr.mxu0 0.0
  %1530 = vmatpush2.msra.mxu0 0.0
  %1531 = vmatprep.subr.mxu0 0.0
  %1532 = vmatpush2.msra.mxu0 0.0
  %1533 = vmatprep.subr.mxu0 0.0
  %1534 = vmatpush2.msra.mxu0 0.0
  %1535 = vmatprep.subr.mxu0 0.0
  %1536 = vmatpush2.msra.mxu0 0.0
  %1537 = vmatprep.subr.mxu0 0.0
  %1538 = vmatpush2.msra.mxu0 0.0
  %1539 = vmatprep.subr.mxu0 0.0
  %1540 = vmatpush2.msra.mxu0 0.0
  %1541 = vmatprep.subr.mxu0 0.0
  %1542 = vmatpush2.msra.mxu0 0.0
  %1543 = vmatprep.mubr.f32.mxu0 0.0
  %1544 = vmatmul.mubr.f32.gmra.mxu0 %v1477
  %v1545 = vpop.f32.mrf.mxu0
  %v1546 = vadd.f32 0.0, %v1545
  %v1547 = vpop.f32.mrf.mxu0
  %1548 = vdwg.mxu0
  %v1549 = vadd.f32 %v1237, %v1546
  %v1550 = vxor.u32 %v1549, 2147483648
  %v1551 = vmul.f32 %v1550, 1.442695
  %v1552 = vpow.pop %v1551
  %v1553 = vadd.f32 %v1552, 1.0
  %v1554 = vrcp.pop %v1553
  %v1555 = vmul.f32 1.0, %v1554
  %v1556 = vtanh.pop %v1549
  %v1557 = vmul.f32 %v1555, %v1460
  %1559 = vrot.lane.b32.xlu0 %v1556, 32
  %v1560 = vpop.permute.xlu0 %1559
  %v1562 = vmul.f32 %v1555, %v1560
  %1564 = vrot.lane.b32.xlu0 %v1562, 32
  %v1565 = vpop.permute.xlu0 %1564
  %v1567 = vadd.f32 %v1557, %v1565
  %v1568 = vtanh.pop %v1567
  %1570 = vrot.lane.b32.xlu0 %v1568, 32
  %v1571 = vpop.permute.xlu0 %1570
  %v1573 = vmul.f32 %v1555, %v1571
  %v1576 = vunpack.c.l.s4 1983009808
  %v1577 = vunpack.c.0.s8 %v1576
  %v1578 = vlaneseq
  %v1579 = vshrl.u32 %v1578, 7
  %v1580 = vsub.s32 %v1577, %v1579
  %v1581 = vrot.slane %v1573, %v1580
  %1582 = vrot.lane.b32.xlu0 %v1581, 64
  %v1583 = vpop.permute.xlu0 %1582
  %v1584 = vsel %vm93, %v1583, 0
  %1586 = vmatprep.subr.mxu0 0.0
  %1587 = vmatpush1.msra.mxu0 0.0
  %1588 = vmatprep.subr.mxu0 0.0
  %1589 = vmatpush1.msra.mxu0 0.0
  %1590 = vmatprep.subr.mxu0 0.0
  %1591 = vmatpush1.msra.mxu0 0.0
  %1592 = vmatprep.subr.mxu0 0.0
  %1593 = vmatpush1.msra.mxu0 0.0
  %1594 = vmatprep.subr.mxu0 0.0
  %1595 = vmatpush1.msra.mxu0 0.0
  %1596 = vmatprep.subr.mxu0 0.0
  %1597 = vmatpush1.msra.mxu0 0.0
  %1598 = vmatprep.subr.mxu0 0.0
  %1599 = vmatpush1.msra.mxu0 0.0
  %1600 = vmatprep.subr.mxu0 0.0
  %1601 = vmatpush1.msra.mxu0 0.0
  %1602 = vmatprep.subr.mxu0 0.0
  %1603 = vmatpush1.msra.mxu0 0.0
  %1604 = vmatprep.subr.mxu0 0.0
  %1605 = vmatpush1.msra.mxu0 0.0
  %1606 = vmatprep.subr.mxu0 0.0
  %1607 = vmatpush1.msra.mxu0 0.0
  %1608 = vmatprep.subr.mxu0 0.0
  %1609 = vmatpush1.msra.mxu0 0.0
  %1610 = vmatprep.subr.mxu0 0.0
  %1611 = vmatpush1.msra.mxu0 %v1096
  %1612 = vmatprep.subr.mxu0 0.0
  %1613 = vmatpush1.msra.mxu0 %v1095
  %1614 = vmatprep.subr.mxu0 0.0
  %1615 = vmatpush1.msra.mxu0 %v1094
  %1616 = vmatprep.subr.mxu0 0.0
  %1617 = vmatpush1.msra.mxu0 %v1093
  %1618 = vmatprep.subr.mxu0 0.0
  %1619 = vmatpush2.msra.mxu0 0.0
  %1620 = vmatprep.subr.mxu0 0.0
  %1621 = vmatpush2.msra.mxu0 0.0
  %1622 = vmatprep.subr.mxu0 0.0
  %1623 = vmatpush2.msra.mxu0 0.0
  %1624 = vmatprep.subr.mxu0 0.0
  %1625 = vmatpush2.msra.mxu0 0.0
  %1626 = vmatprep.subr.mxu0 0.0
  %1627 = vmatpush2.msra.mxu0 0.0
  %1628 = vmatprep.subr.mxu0 0.0
  %1629 = vmatpush2.msra.mxu0 0.0
  %1630 = vmatprep.subr.mxu0 0.0
  %1631 = vmatpush2.msra.mxu0 0.0
  %1632 = vmatprep.subr.mxu0 0.0
  %1633 = vmatpush2.msra.mxu0 0.0
  %1634 = vmatprep.subr.mxu0 0.0
  %1635 = vmatpush2.msra.mxu0 0.0
  %1636 = vmatprep.subr.mxu0 0.0
  %1637 = vmatpush2.msra.mxu0 0.0
  %1638 = vmatprep.subr.mxu0 0.0
  %1639 = vmatpush2.msra.mxu0 0.0
  %1640 = vmatprep.subr.mxu0 0.0
  %1641 = vmatpush2.msra.mxu0 0.0
  %1642 = vmatprep.subr.mxu0 0.0
  %1643 = vmatpush2.msra.mxu0 0.0
  %1644 = vmatprep.subr.mxu0 0.0
  %1645 = vmatpush2.msra.mxu0 0.0
  %1646 = vmatprep.subr.mxu0 0.0
  %1647 = vmatpush2.msra.mxu0 0.0
  %1648 = vmatprep.subr.mxu0 0.0
  %1649 = vmatpush2.msra.mxu0 0.0
  %1650 = vmatprep.mubr.f32.mxu0 0.0
  %1651 = vmatmul.mubr.f32.gmra.mxu0 %v1584
  %v1652 = vpop.f32.mrf.mxu0
  %v1653 = vadd.f32 0.0, %v1652
  %v1654 = vpop.f32.mrf.mxu0
  %1655 = vdwg.mxu0
  %v1656 = vadd.f32 %v1239, %v1653
  %v1657 = vxor.u32 %v1656, 2147483648
  %v1658 = vmul.f32 %v1657, 1.442695
  %v1659 = vpow.pop %v1658
  %v1660 = vadd.f32 %v1659, 1.0
  %v1661 = vrcp.pop %v1660
  %v1662 = vmul.f32 1.0, %v1661
  %v1663 = vtanh.pop %v1656
  %v1664 = vmul.f32 %v1662, %v1567
  %1666 = vrot.lane.b32.xlu0 %v1663, 32
  %v1667 = vpop.permute.xlu0 %1666
  %v1669 = vmul.f32 %v1662, %v1667
  %1671 = vrot.lane.b32.xlu0 %v1669, 32
  %v1672 = vpop.permute.xlu0 %1671
  %v1674 = vadd.f32 %v1664, %v1672
  %v1675 = vtanh.pop %v1674
  %1677 = vrot.lane.b32.xlu0 %v1675, 32
  %v1678 = vpop.permute.xlu0 %1677
  %v1680 = vmul.f32 %v1662, %v1678
  %v1683 = vunpack.c.l.s4 1983009808
  %v1684 = vunpack.c.0.s8 %v1683
  %v1685 = vlaneseq
  %v1686 = vshrl.u32 %v1685, 7
  %v1687 = vsub.s32 %v1684, %v1686
  %v1688 = vrot.slane %v1680, %v1687
  %1689 = vrot.lane.b32.xlu0 %v1688, 64
  %v1690 = vpop.permute.xlu0 %1689
  %v1691 = vsel %vm93, %v1690, 0
  %1693 = vmatprep.subr.mxu0 0.0
  %1694 = vmatpush1.msra.mxu0 0.0
  %1695 = vmatprep.subr.mxu0 0.0
  %1696 = vmatpush1.msra.mxu0 0.0
  %1697 = vmatprep.subr.mxu0 0.0
  %1698 = vmatpush1.msra.mxu0 0.0
  %1699 = vmatprep.subr.mxu0 0.0
  %1700 = vmatpush1.msra.mxu0 0.0
  %1701 = vmatprep.subr.mxu0 0.0
  %1702 = vmatpush1.msra.mxu0 0.0
  %1703 = vmatprep.subr.mxu0 0.0
  %1704 = vmatpush1.msra.mxu0 0.0
  %1705 = vmatprep.subr.mxu0 0.0
  %1706 = vmatpush1.msra.mxu0 0.0
  %1707 = vmatprep.subr.mxu0 0.0
  %1708 = vmatpush1.msra.mxu0 0.0
  %1709 = vmatprep.subr.mxu0 0.0
  %1710 = vmatpush1.msra.mxu0 0.0
  %1711 = vmatprep.subr.mxu0 0.0
  %1712 = vmatpush1.msra.mxu0 0.0
  %1713 = vmatprep.subr.mxu0 0.0
  %1714 = vmatpush1.msra.mxu0 0.0
  %1715 = vmatprep.subr.mxu0 0.0
  %1716 = vmatpush1.msra.mxu0 0.0
  %1717 = vmatprep.subr.mxu0 0.0
  %1718 = vmatpush1.msra.mxu0 %v1096
  %1719 = vmatprep.subr.mxu0 0.0
  %1720 = vmatpush1.msra.mxu0 %v1095
  %1721 = vmatprep.subr.mxu0 0.0
  %1722 = vmatpush1.msra.mxu0 %v1094
  %1723 = vmatprep.subr.mxu0 0.0
  %1724 = vmatpush1.msra.mxu0 %v1093
  %1725 = vmatprep.subr.mxu0 0.0
  %1726 = vmatpush2.msra.mxu0 0.0
  %1727 = vmatprep.subr.mxu0 0.0
  %1728 = vmatpush2.msra.mxu0 0.0
  %1729 = vmatprep.subr.mxu0 0.0
  %1730 = vmatpush2.msra.mxu0 0.0
  %1731 = vmatprep.subr.mxu0 0.0
  %1732 = vmatpush2.msra.mxu0 0.0
  %1733 = vmatprep.subr.mxu0 0.0
  %1734 = vmatpush2.msra.mxu0 0.0
  %1735 = vmatprep.subr.mxu0 0.0
  %1736 = vmatpush2.msra.mxu0 0.0
  %1737 = vmatprep.subr.mxu0 0.0
  %1738 = vmatpush2.msra.mxu0 0.0
  %1739 = vmatprep.subr.mxu0 0.0
  %1740 = vmatpush2.msra.mxu0 0.0
  %1741 = vmatprep.subr.mxu0 0.0
  %1742 = vmatpush2.msra.mxu0 0.0
  %1743 = vmatprep.subr.mxu0 0.0
  %1744 = vmatpush2.msra.mxu0 0.0
  %1745 = vmatprep.subr.mxu0 0.0
  %1746 = vmatpush2.msra.mxu0 0.0
  %1747 = vmatprep.subr.mxu0 0.0
  %1748 = vmatpush2.msra.mxu0 0.0
  %1749 = vmatprep.subr.mxu0 0.0
  %1750 = vmatpush2.msra.mxu0 0.0
  %1751 = vmatprep.subr.mxu0 0.0
  %1752 = vmatpush2.msra.mxu0 0.0
  %1753 = vmatprep.subr.mxu0 0.0
  %1754 = vmatpush2.msra.mxu0 0.0
  %1755 = vmatprep.subr.mxu0 0.0
  %1756 = vmatpush2.msra.mxu0 0.0
  %1757 = vmatprep.mubr.f32.mxu0 0.0
  %1758 = vmatmul.mubr.f32.gmra.mxu0 %v1691
  %v1759 = vpop.f32.mrf.mxu0
  %v1760 = vadd.f32 0.0, %v1759
  %v1761 = vpop.f32.mrf.mxu0
  %1762 = vdwg.mxu0
  %v1763 = vadd.f32 %v1247, %v1760
  %v1764 = vxor.u32 %v1763, 2147483648
  %v1765 = vmul.f32 %v1764, 1.442695
  %v1766 = vpow.pop %v1765
  %v1767 = vadd.f32 %v1766, 1.0
  %v1768 = vrcp.pop %v1767
  %v1769 = vmul.f32 1.0, %v1768
  %v1770 = vtanh.pop %v1763
  %v1771 = vmul.f32 %v1769, %v1674
  %1773 = vrot.lane.b32.xlu0 %v1770, 32
  %v1774 = vpop.permute.xlu0 %1773
  %v1776 = vmul.f32 %v1769, %v1774
  %1778 = vrot.lane.b32.xlu0 %v1776, 32
  %v1779 = vpop.permute.xlu0 %1778
  %v1781 = vadd.f32 %v1771, %v1779
  %v1782 = vtanh.pop %v1781
  %1784 = vrot.lane.b32.xlu0 %v1782, 32
  %v1785 = vpop.permute.xlu0 %1784
  %v1787 = vmul.f32 %v1769, %v1785
  %v1790 = vunpack.c.l.s4 1983009808
  %v1791 = vunpack.c.0.s8 %v1790
  %v1792 = vlaneseq
  %v1793 = vshrl.u32 %v1792, 7
  %v1794 = vsub.s32 %v1791, %v1793
  %v1795 = vrot.slane %v1787, %v1794
  %1796 = vrot.lane.b32.xlu0 %v1795, 64
  %v1797 = vpop.permute.xlu0 %1796
  %v1798 = vsel %vm93, %v1797, 0
  %1800 = vmatprep.subr.mxu0 0.0
  %1801 = vmatpush1.msra.mxu0 0.0
  %1802 = vmatprep.subr.mxu0 0.0
  %1803 = vmatpush1.msra.mxu0 0.0
  %1804 = vmatprep.subr.mxu0 0.0
  %1805 = vmatpush1.msra.mxu0 0.0
  %1806 = vmatprep.subr.mxu0 0.0
  %1807 = vmatpush1.msra.mxu0 0.0
  %1808 = vmatprep.subr.mxu0 0.0
  %1809 = vmatpush1.msra.mxu0 0.0
  %1810 = vmatprep.subr.mxu0 0.0
  %1811 = vmatpush1.msra.mxu0 0.0
  %1812 = vmatprep.subr.mxu0 0.0
  %1813 = vmatpush1.msra.mxu0 0.0
  %1814 = vmatprep.subr.mxu0 0.0
  %1815 = vmatpush1.msra.mxu0 0.0
  %1816 = vmatprep.subr.mxu0 0.0
  %1817 = vmatpush1.msra.mxu0 0.0
  %1818 = vmatprep.subr.mxu0 0.0
  %1819 = vmatpush1.msra.mxu0 0.0
  %1820 = vmatprep.subr.mxu0 0.0
  %1821 = vmatpush1.msra.mxu0 0.0
  %1822 = vmatprep.subr.mxu0 0.0
  %1823 = vmatpush1.msra.mxu0 0.0
  %1824 = vmatprep.subr.mxu0 0.0
  %1825 = vmatpush1.msra.mxu0 %v1096
  %1826 = vmatprep.subr.mxu0 0.0
  %1827 = vmatpush1.msra.mxu0 %v1095
  %1828 = vmatprep.subr.mxu0 0.0
  %1829 = vmatpush1.msra.mxu0 %v1094
  %1830 = vmatprep.subr.mxu0 0.0
  %1831 = vmatpush1.msra.mxu0 %v1093
  %1832 = vmatprep.subr.mxu0 0.0
  %1833 = vmatpush2.msra.mxu0 0.0
  %1834 = vmatprep.subr.mxu0 0.0
  %1835 = vmatpush2.msra.mxu0 0.0
  %1836 = vmatprep.subr.mxu0 0.0
  %1837 = vmatpush2.msra.mxu0 0.0
  %1838 = vmatprep.subr.mxu0 0.0
  %1839 = vmatpush2.msra.mxu0 0.0
  %1840 = vmatprep.subr.mxu0 0.0
  %1841 = vmatpush2.msra.mxu0 0.0
  %1842 = vmatprep.subr.mxu0 0.0
  %1843 = vmatpush2.msra.mxu0 0.0
  %1844 = vmatprep.subr.mxu0 0.0
  %1845 = vmatpush2.msra.mxu0 0.0
  %1846 = vmatprep.subr.mxu0 0.0
  %1847 = vmatpush2.msra.mxu0 0.0
  %1848 = vmatprep.subr.mxu0 0.0
  %1849 = vmatpush2.msra.mxu0 0.0
  %1850 = vmatprep.subr.mxu0 0.0
  %1851 = vmatpush2.msra.mxu0 0.0
  %1852 = vmatprep.subr.mxu0 0.0
  %1853 = vmatpush2.msra.mxu0 0.0
  %1854 = vmatprep.subr.mxu0 0.0
  %1855 = vmatpush2.msra.mxu0 0.0
  %1856 = vmatprep.subr.mxu0 0.0
  %1857 = vmatpush2.msra.mxu0 0.0
  %1858 = vmatprep.subr.mxu0 0.0
  %1859 = vmatpush2.msra.mxu0 0.0
  %1860 = vmatprep.subr.mxu0 0.0
  %1861 = vmatpush2.msra.mxu0 0.0
  %1862 = vmatprep.subr.mxu0 0.0
  %1863 = vmatpush2.msra.mxu0 0.0
  %1864 = vmatprep.mubr.f32.mxu0 0.0
  %1865 = vmatmul.mubr.f32.gmra.mxu0 %v1798
  %v1866 = vpop.f32.mrf.mxu0
  %v1867 = vadd.f32 0.0, %v1866
  %v1868 = vpop.f32.mrf.mxu0
  %1869 = vdwg.mxu0
  %v1870 = vadd.f32 %v1255, %v1867
  %v1871 = vxor.u32 %v1870, 2147483648
  %v1872 = vmul.f32 %v1871, 1.442695
  %v1873 = vpow.pop %v1872
  %v1874 = vadd.f32 %v1873, 1.0
  %v1875 = vrcp.pop %v1874
  %v1876 = vmul.f32 1.0, %v1875
  %v1877 = vtanh.pop %v1870
  %v1878 = vmul.f32 %v1876, %v1781
  %1880 = vrot.lane.b32.xlu0 %v1877, 32
  %v1881 = vpop.permute.xlu0 %1880
  %v1883 = vmul.f32 %v1876, %v1881
  %1885 = vrot.lane.b32.xlu0 %v1883, 32
  %v1886 = vpop.permute.xlu0 %1885
  %v1888 = vadd.f32 %v1878, %v1886
  %v1889 = vtanh.pop %v1888
  %1891 = vrot.lane.b32.xlu0 %v1889, 32
  %v1892 = vpop.permute.xlu0 %1891
  %v1894 = vmul.f32 %v1876, %v1892
  %v1897 = vunpack.c.l.s4 1983009808
  %v1898 = vunpack.c.0.s8 %v1897
  %v1899 = vlaneseq
  %v1900 = vshrl.u32 %v1899, 7
  %v1901 = vsub.s32 %v1898, %v1900
  %v1902 = vrot.slane %v1894, %v1901
  %1903 = vrot.lane.b32.xlu0 %v1902, 64
  %v1904 = vpop.permute.xlu0 %1903
  %v1905 = vsel %vm93, %v1904, 0
  %1907 = vmatprep.subr.mxu0 0.0
  %1908 = vmatpush1.msra.mxu0 0.0
  %1909 = vmatprep.subr.mxu0 0.0
  %1910 = vmatpush1.msra.mxu0 0.0
  %1911 = vmatprep.subr.mxu0 0.0
  %1912 = vmatpush1.msra.mxu0 0.0
  %1913 = vmatprep.subr.mxu0 0.0
  %1914 = vmatpush1.msra.mxu0 0.0
  %1915 = vmatprep.subr.mxu0 0.0
  %1916 = vmatpush1.msra.mxu0 0.0
  %1917 = vmatprep.subr.mxu0 0.0
  %1918 = vmatpush1.msra.mxu0 0.0
  %1919 = vmatprep.subr.mxu0 0.0
  %1920 = vmatpush1.msra.mxu0 0.0
  %1921 = vmatprep.subr.mxu0 0.0
  %1922 = vmatpush1.msra.mxu0 0.0
  %1923 = vmatprep.subr.mxu0 0.0
  %1924 = vmatpush1.msra.mxu0 0.0
  %1925 = vmatprep.subr.mxu0 0.0
  %1926 = vmatpush1.msra.mxu0 0.0
  %1927 = vmatprep.subr.mxu0 0.0
  %1928 = vmatpush1.msra.mxu0 0.0
  %1929 = vmatprep.subr.mxu0 0.0
  %1930 = vmatpush1.msra.mxu0 0.0
  %1931 = vmatprep.subr.mxu0 0.0
  %1932 = vmatpush1.msra.mxu0 %v1096
  %1933 = vmatprep.subr.mxu0 0.0
  %1934 = vmatpush1.msra.mxu0 %v1095
  %1935 = vmatprep.subr.mxu0 0.0
  %1936 = vmatpush1.msra.mxu0 %v1094
  %1937 = vmatprep.subr.mxu0 0.0
  %1938 = vmatpush1.msra.mxu0 %v1093
  %1939 = vmatprep.subr.mxu0 0.0
  %1940 = vmatpush2.msra.mxu0 0.0
  %1941 = vmatprep.subr.mxu0 0.0
  %1942 = vmatpush2.msra.mxu0 0.0
  %1943 = vmatprep.subr.mxu0 0.0
  %1944 = vmatpush2.msra.mxu0 0.0
  %1945 = vmatprep.subr.mxu0 0.0
  %1946 = vmatpush2.msra.mxu0 0.0
  %1947 = vmatprep.subr.mxu0 0.0
  %1948 = vmatpush2.msra.mxu0 0.0
  %1949 = vmatprep.subr.mxu0 0.0
  %1950 = vmatpush2.msra.mxu0 0.0
  %1951 = vmatprep.subr.mxu0 0.0
  %1952 = vmatpush2.msra.mxu0 0.0
  %1953 = vmatprep.subr.mxu0 0.0
  %1954 = vmatpush2.msra.mxu0 0.0
  %1955 = vmatprep.subr.mxu0 0.0
  %1956 = vmatpush2.msra.mxu0 0.0
  %1957 = vmatprep.subr.mxu0 0.0
  %1958 = vmatpush2.msra.mxu0 0.0
  %1959 = vmatprep.subr.mxu0 0.0
  %1960 = vmatpush2.msra.mxu0 0.0
  %1961 = vmatprep.subr.mxu0 0.0
  %1962 = vmatpush2.msra.mxu0 0.0
  %1963 = vmatprep.subr.mxu0 0.0
  %1964 = vmatpush2.msra.mxu0 0.0
  %1965 = vmatprep.subr.mxu0 0.0
  %1966 = vmatpush2.msra.mxu0 0.0
  %1967 = vmatprep.subr.mxu0 0.0
  %1968 = vmatpush2.msra.mxu0 0.0
  %1969 = vmatprep.subr.mxu0 0.0
  %1970 = vmatpush2.msra.mxu0 0.0
  %1971 = vmatprep.mubr.f32.mxu0 0.0
  %1972 = vmatmul.mubr.f32.gmra.mxu0 %v1905
  %v1973 = vpop.f32.mrf.mxu0
  %v1974 = vadd.f32 0.0, %v1973
  %v1975 = vpop.f32.mrf.mxu0
  %1976 = vdwg.mxu0
  %v1977 = vadd.f32 %v1254, %v1974
  %v1978 = vxor.u32 %v1977, 2147483648
  %v1979 = vmul.f32 %v1978, 1.442695
  %v1980 = vpow.pop %v1979
  %v1981 = vadd.f32 %v1980, 1.0
  %v1982 = vrcp.pop %v1981
  %v1983 = vmul.f32 1.0, %v1982
  %v1984 = vtanh.pop %v1977
  %v1985 = vmul.f32 %v1983, %v1888
  %1987 = vrot.lane.b32.xlu0 %v1984, 32
  %v1988 = vpop.permute.xlu0 %1987
  %v1990 = vmul.f32 %v1983, %v1988
  %1992 = vrot.lane.b32.xlu0 %v1990, 32
  %v1993 = vpop.permute.xlu0 %1992
  %v1995 = vadd.f32 %v1985, %v1993
  %v1996 = vtanh.pop %v1995
  %1998 = vrot.lane.b32.xlu0 %v1996, 32
  %v1999 = vpop.permute.xlu0 %1998
  %v2001 = vmul.f32 %v1983, %v1999
  %v2004 = vunpack.c.l.s4 1983009808
  %v2005 = vunpack.c.0.s8 %v2004
  %v2006 = vlaneseq
  %v2007 = vshrl.u32 %v2006, 7
  %v2008 = vsub.s32 %v2005, %v2007
  %v2009 = vrot.slane %v2001, %v2008
  %2010 = vrot.lane.b32.xlu0 %v2009, 64
  %v2011 = vpop.permute.xlu0 %2010
  %v2012 = vsel %vm93, %v2011, 0
  %2014 = vmatprep.subr.mxu0 0.0
  %2015 = vmatpush1.msra.mxu0 0.0
  %2016 = vmatprep.subr.mxu0 0.0
  %2017 = vmatpush1.msra.mxu0 0.0
  %2018 = vmatprep.subr.mxu0 0.0
  %2019 = vmatpush1.msra.mxu0 0.0
  %2020 = vmatprep.subr.mxu0 0.0
  %2021 = vmatpush1.msra.mxu0 0.0
  %2022 = vmatprep.subr.mxu0 0.0
  %2023 = vmatpush1.msra.mxu0 0.0
  %2024 = vmatprep.subr.mxu0 0.0
  %2025 = vmatpush1.msra.mxu0 0.0
  %2026 = vmatprep.subr.mxu0 0.0
  %2027 = vmatpush1.msra.mxu0 0.0
  %2028 = vmatprep.subr.mxu0 0.0
  %2029 = vmatpush1.msra.mxu0 0.0
  %2030 = vmatprep.subr.mxu0 0.0
  %2031 = vmatpush1.msra.mxu0 0.0
  %2032 = vmatprep.subr.mxu0 0.0
  %2033 = vmatpush1.msra.mxu0 0.0
  %2034 = vmatprep.subr.mxu0 0.0
  %2035 = vmatpush1.msra.mxu0 0.0
  %2036 = vmatprep.subr.mxu0 0.0
  %2037 = vmatpush1.msra.mxu0 0.0
  %2038 = vmatprep.subr.mxu0 0.0
  %2039 = vmatpush1.msra.mxu0 %v1096
  %2040 = vmatprep.subr.mxu0 0.0
  %2041 = vmatpush1.msra.mxu0 %v1095
  %2042 = vmatprep.subr.mxu0 0.0
  %2043 = vmatpush1.msra.mxu0 %v1094
  %2044 = vmatprep.subr.mxu0 0.0
  %2045 = vmatpush1.msra.mxu0 %v1093
  %2046 = vmatprep.subr.mxu0 0.0
  %2047 = vmatpush2.msra.mxu0 0.0
  %2048 = vmatprep.subr.mxu0 0.0
  %2049 = vmatpush2.msra.mxu0 0.0
  %2050 = vmatprep.subr.mxu0 0.0
  %2051 = vmatpush2.msra.mxu0 0.0
  %2052 = vmatprep.subr.mxu0 0.0
  %2053 = vmatpush2.msra.mxu0 0.0
  %2054 = vmatprep.subr.mxu0 0.0
  %2055 = vmatpush2.msra.mxu0 0.0
  %2056 = vmatprep.subr.mxu0 0.0
  %2057 = vmatpush2.msra.mxu0 0.0
  %2058 = vmatprep.subr.mxu0 0.0
  %2059 = vmatpush2.msra.mxu0 0.0
  %2060 = vmatprep.subr.mxu0 0.0
  %2061 = vmatpush2.msra.mxu0 0.0
  %2062 = vmatprep.subr.mxu0 0.0
  %2063 = vmatpush2.msra.mxu0 0.0
  %2064 = vmatprep.subr.mxu0 0.0
  %2065 = vmatpush2.msra.mxu0 0.0
  %2066 = vmatprep.subr.mxu0 0.0
  %2067 = vmatpush2.msra.mxu0 0.0
  %2068 = vmatprep.subr.mxu0 0.0
  %2069 = vmatpush2.msra.mxu0 0.0
  %2070 = vmatprep.subr.mxu0 0.0
  %2071 = vmatpush2.msra.mxu0 0.0
  %2072 = vmatprep.subr.mxu0 0.0
  %2073 = vmatpush2.msra.mxu0 0.0
  %2074 = vmatprep.subr.mxu0 0.0
  %2075 = vmatpush2.msra.mxu0 0.0
  %2076 = vmatprep.subr.mxu0 0.0
  %2077 = vmatpush2.msra.mxu0 0.0
  %2078 = vmatprep.mubr.f32.mxu0 0.0
  %2079 = vmatmul.mubr.f32.gmra.mxu0 %v2012
  %v2080 = vpop.f32.mrf.mxu0
  %v2081 = vadd.f32 0.0, %v2080
  %v2082 = vpop.f32.mrf.mxu0
  %2083 = vdwg.mxu0
  %v2084 = vadd.f32 %v1256, %v2081
  %v2085 = vxor.u32 %v2084, 2147483648
  %v2086 = vmul.f32 %v2085, 1.442695
  %v2087 = vpow.pop %v2086
  %v2088 = vadd.f32 %v2087, 1.0
  %v2089 = vrcp.pop %v2088
  %v2090 = vmul.f32 1.0, %v2089
  %v2091 = vtanh.pop %v2084
  %v2092 = vmul.f32 %v2090, %v1995
  %2094 = vrot.lane.b32.xlu0 %v2091, 32
  %v2095 = vpop.permute.xlu0 %2094
  %v2097 = vmul.f32 %v2090, %v2095
  %2099 = vrot.lane.b32.xlu0 %v2097, 32
  %v2100 = vpop.permute.xlu0 %2099
  %v2102 = vadd.f32 %v2092, %v2100
  %v2103 = vtanh.pop %v2102
  %2105 = vrot.lane.b32.xlu0 %v2103, 32
  %v2106 = vpop.permute.xlu0 %2105
  %v2108 = vmul.f32 %v2090, %v2106
  %v2111 = vunpack.c.l.s4 1983009808
  %v2112 = vunpack.c.0.s8 %v2111
  %v2113 = vlaneseq
  %v2114 = vshrl.u32 %v2113, 7
  %v2115 = vsub.s32 %v2112, %v2114
  %v2116 = vrot.slane %v2108, %v2115
  %2117 = vrot.lane.b32.xlu0 %v2116, 64
  %v2118 = vpop.permute.xlu0 %2117
  %s2120 = scalar_lea.vmem %s7, 2
  %2121 = vst.msk [vmem:[%s2120] sm:$0x3] %vm1075, %v2118
  %v2124 = vunpack.c.l.s4 1983009808
  %v2125 = vunpack.c.0.s8 %v2124
  %v2126 = vlaneseq
  %v2127 = vshrl.u32 %v2126, 7
  %v2128 = vsub.s32 %v2125, %v2127
  %v2129 = vrot.slane %v2102, %v2128
  %2130 = vrot.lane.b32.xlu0 %v2129, 96
  %v2131 = vpop.permute.xlu0 %2130
  %s2133 = scalar_lea.vmem %s8, 2
  %2134 = vst.msk [vmem:[%s2133] sm:$0x3] %vm1075, %v2131
  // Predicated region
  $region30: #{_lambda_.2} parent=0 // pred_check
    _
  $region31: #{_lambda_.2} parent=0 // pred_check_branch
    %2136 = sbr.rel (0) target = $region33
  $region32: #{_lambda_.2} parent=0 // pred_region
    _
  $region33: #{_lambda_.2} parent=0 // pred_fallthru
    _
  // Predicated region
  $region34: #{_lambda_.2} parent=0 // pred_check
    _
  $region35: #{_lambda_.2} parent=0 // pred_check_branch
    %2138 = sbr.rel (0) target = $region37
  $region36: #{_lambda_.2} parent=0 // pred_region
    _
  $region37: #{_lambda_.2} parent=0 // pred_fallthru
    _
  // Predicated region
  $region38: #{_lambda_.2} parent=0 // pred_check
    _
  $region39: #{_lambda_.2} parent=0 // pred_check_branch
    %2140 = sbr.rel (0) target = $region41
  $region40: #{_lambda_.2} parent=0 // pred_region
    _
  $region41: #{_lambda_.2} parent=0 // pred_fallthru
    _
  // Predicated region
  $region42: #{_lambda_.2} parent=0 // pred_check
    _
  $region43: #{_lambda_.2} parent=0 // pred_check_branch
    %2142 = sbr.rel (0) target = $region45
  $region44: #{_lambda_.2} parent=0 // pred_region
    _
  $region45: #{_lambda_.2} parent=0 // pred_fallthru
    _

</llo_original>
